<compile_context>
chip_gen: v7x
topology: tpu7x:2x2x1
jax: 0.10.0
libtpu: 0.0.40
codegen_flags: <defaults>
</compile_context>

<pallas_src>
import functools

import jax
import jax.numpy as jnp
from jax import lax
from jax.experimental import pallas as pl
from jax.experimental.pallas import tpu as pltpu

NEG_INF = -1e9
LN_EPS = 1e-5
NORM_EPS = 1e-12


def _ln(x_f32, g, b, eps=LN_EPS):
    """LayerNorm over the last dim (f32 math)."""
    mean = jnp.mean(x_f32, axis=-1, keepdims=True)
    var = jnp.mean((x_f32 - mean) ** 2, axis=-1, keepdims=True)
    return (x_f32 - mean) * lax.rsqrt(var + eps) * g + b


# ----------------- whole-encoder kernel: grid = (batch_tiles, L) -----------------


def _encoder_stack_kernel(x_ref, pad_ref,
                          ln1_g_ref, ln1_b_ref,
                          wqkv_ref, bqkv_ref, wo_ref, bo_ref,
                          ln2_g_ref, ln2_b_ref,
                          fc1_w_ref, fc1_b_ref, fc2_w_ref, fc2_b_ref,
                          o_ref, *, num_heads, head_dim, tb, seq):
    """All L CLIP encoder layers for a tile of `tb` sequences.

    The output block (constant index over the L grid axis) acts as the
    VMEM-resident activation carry between layers."""
    l = pl.program_id(1)
    D = num_heads * head_dim
    S = seq
    M = tb * S

    # Initialize the carry from the embeddings on the first layer step.
    @pl.when(l == 0)
    def _():
        o_ref[...] = x_ref[...]

    x = o_ref[...].astype(jnp.float32).reshape(M, D)          # (M, D) carry

    # ---- self-attention block ----
    h = _ln(x, ln1_g_ref[...], ln1_b_ref[...]).astype(jnp.bfloat16)
    # Fused QKV projection (attention scale already folded into the Q slice).
    qkv = jnp.dot(h, wqkv_ref[...],
                  preferred_element_type=jnp.float32) + bqkv_ref[...]   # (M, 3D)

    row = lax.broadcasted_iota(jnp.int32, (S, S), 0)
    col = lax.broadcasted_iota(jnp.int32, (S, S), 1)
    causal_ok = col <= row                                     # (S, S)

    seq_outs = []
    for b in range(tb):                      # static, small (<= 8 sequences)
        pad_ok = pad_ref[b] > 0.5            # (1, S) padding mask
        mask_ok = causal_ok & pad_ok         # (S, S)
        q = qkv[b * S:(b + 1) * S, 0:D]
        k = qkv[b * S:(b + 1) * S, D:2 * D]
        v = qkv[b * S:(b + 1) * S, 2 * D:3 * D]
        head_outs = []
        for hh in range(num_heads):          # tiny matmuls; ~5% of layer FLOPs
            c0 = hh * head_dim
            qh = q[:, c0:c0 + head_dim]
            kh = k[:, c0:c0 + head_dim]
            vh = v[:, c0:c0 + head_dim]
            # q @ k^T with the transpose folded into the contraction.
            s = lax.dot_general(qh, kh, (((1,), (1,)), ((), ())),
                                preferred_element_type=jnp.float32)
            s = jnp.where(mask_ok, s, NEG_INF)
            s = s - jnp.max(s, axis=-1, keepdims=True)
            p = jnp.exp(s)
            p = p * pl.reciprocal(jnp.sum(p, axis=-1, keepdims=True), approx=True)
            head_outs.append(jnp.dot(p.astype(jnp.bfloat16), vh.astype(jnp.bfloat16),
                                     preferred_element_type=jnp.float32))
        seq_outs.append(jnp.concatenate(head_outs, axis=-1))    # (S, D)
    attn_stack = jnp.concatenate(seq_outs, axis=0).astype(jnp.bfloat16)   # (M, D)

    # Fused out-projection on the stacked head outputs + residual.
    attn = jnp.dot(attn_stack, wo_ref[...],
                   preferred_element_type=jnp.float32) + bo_ref[...]
    x1 = x + attn

    # ---- MLP block (intermediate never leaves VMEM/vregs) ----
    h2 = _ln(x1, ln2_g_ref[...], ln2_b_ref[...]).astype(jnp.bfloat16)
    m = jnp.dot(h2, fc1_w_ref[...], preferred_element_type=jnp.float32) + fc1_b_ref[...]
    m = m * jax.nn.sigmoid(1.702 * m)                          # QuickGELU (f32)
    y = jnp.dot(m.astype(jnp.bfloat16), fc2_w_ref[...],
                preferred_element_type=jnp.float32) + fc2_b_ref[...]
    out = x1 + y                                               # (M, D)
    o_ref[...] = out.reshape(tb, S, D).astype(o_ref.dtype)


def _pick_tb(nb, max_tb=8):
    """Sequences per grid step: largest divisor of nb that is <= max_tb.
    (At production batch sizes this yields an even number of batch tiles for
    v7x megacore sharding; MXU row occupancy is prioritized at tiny nb.)"""
    for t in range(min(nb, max_tb), 0, -1):
        if nb % t == 0:
            return t
    return 1


def _encoder_vmem_limit(tb, S, D, I):
    """Scoped-VMEM budget: double-buffered per-layer weights (layer streaming)
    + activation carry + f32 intermediates.  Clamped to >=32 MiB (above v5e's
    16 MiB default) and <=48 MiB (headroom under v7x's 64 MiB physical)."""
    w = (D * 3 * D + D * D + D * I + I * D) * 2 + (3 * D + 7 * D + 2 * I) * 4
    act = 4 * tb * S * D * 2 + 2 * tb * S * 4
    scratch = tb * S * (3 * D + I + 4 * D) * 4
    need = 2 * w + act + scratch + (8 << 20)
    return int(max(32 << 20, min(need, 48 << 20)))


def encoder_stack(x, pad3, stacked, *, num_heads):
    """x: (NB, S, D) bf16; pad3: (NB, 1, S) f32; stacked: dict of (L, ...) weights."""
    NB, S, D = x.shape
    L = stacked["wqkv"].shape[0]
    I = stacked["fc1_w"].shape[2]
    Dh = D // num_heads
    tb = _pick_tb(NB)
    num_tiles = NB // tb

    xmap = lambda b, l: (b, 0, 0)      # activation: constant over L (carry)
    wmap = lambda b, l: (l, 0, 0)      # weights: streamed over the L grid axis

    return pl.pallas_call(
        functools.partial(_encoder_stack_kernel, num_heads=num_heads,
                          head_dim=Dh, tb=tb, seq=S),
        out_shape=jax.ShapeDtypeStruct((NB, S, D), x.dtype),
        grid=(num_tiles, L),
        in_specs=[
            pl.BlockSpec((tb, S, D), xmap),          # x (embeddings)
            pl.BlockSpec((tb, 1, S), xmap),          # padding mask
            pl.BlockSpec((None, 1, D), wmap),        # ln1_g
            pl.BlockSpec((None, 1, D), wmap),        # ln1_b
            pl.BlockSpec((None, D, 3 * D), wmap),    # wqkv (fused, scale folded)
            pl.BlockSpec((None, 1, 3 * D), wmap),    # bqkv
            pl.BlockSpec((None, D, D), wmap),        # wo
            pl.BlockSpec((None, 1, D), wmap),        # bo
            pl.BlockSpec((None, 1, D), wmap),        # ln2_g
            pl.BlockSpec((None, 1, D), wmap),        # ln2_b
            pl.BlockSpec((None, D, I), wmap),        # fc1_w
            pl.BlockSpec((None, 1, I), wmap),        # fc1_b
            pl.BlockSpec((None, I, D), wmap),        # fc2_w
            pl.BlockSpec((None, 1, D), wmap),        # fc2_b
        ],
        out_specs=pl.BlockSpec((tb, S, D), xmap),
        compiler_params=pltpu.CompilerParams(
            dimension_semantics=("parallel", "arbitrary"),
            vmem_limit_bytes=_encoder_vmem_limit(tb, S, D, I)),
    )(x, pad3,
      stacked["ln1_g"], stacked["ln1_b"],
      stacked["wqkv"], stacked["bqkv"], stacked["wo"], stacked["bo"],
      stacked["ln2_g"], stacked["ln2_b"],
      stacked["fc1_w"], stacked["fc1_b"], stacked["fc2_w"], stacked["fc2_b"])


# --- fused tail: final LN + text projection + orthogonalized shift + L2 norm ---


def _project_shift_norm_kernel(pooled_ref, g_ref, b_ref, wp_ref, shift_ref,
                               gt_lbl_ref, cf_lbl_ref, o_ref, *, batch, eps):
    """final LN -> text projection -> orthogonalized shift add -> concat -> norm.

      proj[b,n]    = (tgt[b]·shift[n] / ||tgt[b]||^2) * tgt[b]
      shifted[b,n] = shift[n] - proj[b,n]
      true_out[b]  = true[b] + shifted[b, gt_lbl[b]]
      cf_out[b]    = cf[b]   + shifted[b, cf_lbl[b]]
      out = normalize(concat([true_out, cf_out], 0), dim=-1)
    The label gather is a one-hot contraction (all 2-D ops)."""
    B = batch
    h = _ln(pooled_ref[...].astype(jnp.float32), g_ref[...], b_ref[...])
    emb = jnp.dot(h.astype(jnp.bfloat16), wp_ref[...],
                  preferred_element_type=jnp.float32)               # (3B, P)
    true_e = emb[0:B]
    cf_e = emb[B:2 * B]
    tgt = emb[2 * B:3 * B]
    shift = shift_ref[...].astype(jnp.float32)                      # (N, P)
    N = shift.shape[0]

    # tgt @ shift^T without a relayout (transposed contraction).
    coeff = lax.dot_general(tgt, shift, (((1,), (1,)), ((), ())),
                            preferred_element_type=jnp.float32)     # (B, N)
    inv_denom = 1.0 / (jnp.sum(tgt * tgt, axis=1, keepdims=True) + eps)   # (B, 1)

    lbl_iota = lax.broadcasted_iota(jnp.int32, (B, N), 1)
    gt_oh = (lbl_iota == gt_lbl_ref[...]).astype(jnp.float32)       # (B, N)
    cf_oh = (lbl_iota == cf_lbl_ref[...]).astype(jnp.float32)       # (B, N)

    gt_sel_shift = jnp.dot(gt_oh, shift, preferred_element_type=jnp.float32)
    cf_sel_shift = jnp.dot(cf_oh, shift, preferred_element_type=jnp.float32)
    gt_sel_coeff = jnp.sum(gt_oh * coeff, axis=1, keepdims=True)    # (B, 1)
    cf_sel_coeff = jnp.sum(cf_oh * coeff, axis=1, keepdims=True)    # (B, 1)

    true_out = true_e + gt_sel_shift - (gt_sel_coeff * inv_denom) * tgt
    cf_out = cf_e + cf_sel_shift - (cf_sel_coeff * inv_denom) * tgt

    out = jnp.concatenate([true_out, cf_out], axis=0)               # (2B, P)
    inv_norm = lax.rsqrt(jnp.sum(out * out, axis=-1, keepdims=True) + eps)
    o_ref[...] = (out * inv_norm).astype(o_ref.dtype)


def project_shift_normalize(pooled, g, b, wp, shift, gt_lbl, cf_lbl, batch):
    M, D = pooled.shape
    P = wp.shape[1]
    N = shift.shape[0]
    full = lambda i: (0, 0)
    return pl.pallas_call(
        functools.partial(_project_shift_norm_kernel, batch=batch, eps=NORM_EPS),
        out_shape=jax.ShapeDtypeStruct((2 * batch, P), jnp.float32),
        grid=(1,),
        in_specs=[
            pl.BlockSpec((M, D), full),            # pooled hidden states (3B, D)
            pl.BlockSpec((1, D), full),            # final_ln_g
            pl.BlockSpec((1, D), full),            # final_ln_b
            pl.BlockSpec((D, P), full),            # text_projection
            pl.BlockSpec((N, P), full),            # number_shift_vectors
            pl.BlockSpec((batch, 1), full),        # gt_label_idx
            pl.BlockSpec((batch, 1), full),        # cf_label_idx
        ],
        out_specs=pl.BlockSpec((2 * batch, P), full),
    )(pooled, g, b, wp, shift, gt_lbl, cf_lbl)


# ----------------------------- parameters / glue ------------------------------


def init_params(key, cfg):
    D, I, P = cfg["hidden"], cfg["inter"], cfg["proj"]
    V, S, L, N = cfg["vocab"], cfg["seq"], cfg["layers"], cfg["n_shift"]
    H = cfg["heads"]
    Dh = D // H
    scale = Dh ** -0.5
    wdt = jnp.bfloat16          # matmul weights / activations in bf16 (f32 accumulation)
    keys = jax.random.split(key, 4 + L)
    params = {
        "token_embedding": (0.02 * jax.random.normal(keys[0], (V, D))).astype(wdt),
        "position_embedding": (0.02 * jax.random.normal(keys[1], (S, D))).astype(wdt),
        "final_ln_g": jnp.ones((1, D), jnp.float32),
        "final_ln_b": jnp.zeros((1, D), jnp.float32),
        "text_projection": (0.02 * jax.random.normal(keys[2], (D, P))).astype(wdt),
        "number_shift_vectors": jax.random.normal(keys[3], (N, P), jnp.float32),
    }

    def layer_params(k):
        lk = jax.random.split(k, 6)
        # Attention scale folded into Wq (and bq, which is zero here).
        wq = (0.02 * scale) * jax.random.normal(lk[0], (D, D), jnp.float32)
        wk = 0.02 * jax.random.normal(lk[1], (D, D), jnp.float32)
        wv = 0.02 * jax.random.normal(lk[2], (D, D), jnp.float32)
        return {
            "ln1_g": jnp.ones((1, D), jnp.float32),
            "ln1_b": jnp.zeros((1, D), jnp.float32),
            "wqkv": jnp.concatenate([wq, wk, wv], axis=1).astype(wdt),   # (D, 3D)
            "bqkv": jnp.zeros((1, 3 * D), jnp.float32),
            "wo": (0.02 * jax.random.normal(lk[3], (D, D))).astype(wdt),
            "bo": jnp.zeros((1, D), jnp.float32),
            "ln2_g": jnp.ones((1, D), jnp.float32),
            "ln2_b": jnp.zeros((1, D), jnp.float32),
            "fc1_w": (0.02 * jax.random.normal(lk[4], (D, I))).astype(wdt),
            "fc1_b": jnp.zeros((1, I), jnp.float32),
            "fc2_w": (0.02 * jax.random.normal(lk[5], (I, D))).astype(wdt),
            "fc2_b": jnp.zeros((1, D), jnp.float32),
        }

    per_layer = [layer_params(keys[4 + l]) for l in range(L)]
    # Stack per-layer weights into (L, ...) arrays for layer-streaming in-grid.
    params["layers"] = jax.tree_util.tree_map(
        lambda *xs: jnp.stack(xs, axis=0), *per_layer)
    return params


def clip_text_forward(params, cfg, input_ids, attention_mask):
    """CLIPTextModel: embeddings -> causal transformer encoder -> pooled hidden."""
    NB, S = input_ids.shape
    H = cfg["heads"]

    # Embedding lookup (data-dependent gather) done in host JAX.
    x = (params["token_embedding"][input_ids]
         + params["position_embedding"][None, :S, :]).astype(jnp.bfloat16)
    pad3 = attention_mask.astype(jnp.float32).reshape(NB, 1, S)

    x = encoder_stack(x, pad3, params["layers"], num_heads=H)      # (NB, S, D)

    # pooled_output: hidden state at the (first) EOS position (eos_token_id != 2 path).
    # Host-side gather: cheaper than streaming the full (NB,S,D) slab through the
    # tail kernel.  Per-token final LN commutes with token selection, so the tail
    # kernel applies LN + projection to the pooled rows only.
    eos_pos = jnp.argmax((input_ids == cfg["eos_token_id"]).astype(jnp.int32), axis=-1)
    return x[jnp.arange(NB), eos_pos]                               # (NB, D)


def custom_clip_forward(params, cfg,
                        gt_input_ids, true_attention_mask, gt_label_idx,
                        cf_input_ids, cf_attention_mask, cf_label_idx,
                        target_input_ids, target_attention_mask):
    B = gt_input_ids.shape[0]
    # Batch the three encoder passes into one (weights read from HBM once per layer).
    input_ids = jnp.concatenate([gt_input_ids, cf_input_ids, target_input_ids], axis=0)
    attn_mask = jnp.concatenate([true_attention_mask, cf_attention_mask,
                                 target_attention_mask], axis=0)
    pooled = clip_text_forward(params, cfg, input_ids, attn_mask)   # (3B, D)

    return project_shift_normalize(
        pooled, params["final_ln_g"], params["final_ln_b"],
        params["text_projection"], params["number_shift_vectors"],
        gt_label_idx.astype(jnp.int32).reshape(-1, 1),
        cf_label_idx.astype(jnp.int32).reshape(-1, 1),
        batch=B,
    )


# ---------------------------------- main ------------------------------------


if __name__ == "__main__":
    cfg = dict(hidden=32, heads=2, inter=64, layers=2, vocab=64, seq=8,
               proj=16, n_shift=5, eos_token_id=63)

    key = jax.random.PRNGKey(0)
    pkey, dkey = jax.random.split(key)
    params = init_params(pkey, cfg)

    B, S = 2, cfg["seq"]
    k1, k2, k3, k4, k5 = jax.random.split(dkey, 5)
    gt_input_ids = jax.random.randint(k1, (B, S), 1, cfg["vocab"] - 1,
                                      jnp.int32).at[:, -1].set(cfg["eos_token_id"])
    cf_input_ids = jax.random.randint(k2, (B, S), 1, cfg["vocab"] - 1,
                                      jnp.int32).at[:, -1].set(cfg["eos_token_id"])
    target_input_ids = jax.random.randint(k3, (B, S), 1, cfg["vocab"] - 1,
                                          jnp.int32).at[:, -1].set(cfg["eos_token_id"])
    true_attention_mask = jnp.ones((B, S), jnp.int32)
    cf_attention_mask = jnp.ones((B, S), jnp.int32)
    target_attention_mask = jnp.ones((B, S), jnp.int32)
    gt_label_idx = jax.random.randint(k4, (B,), 0, cfg["n_shift"], jnp.int32)
    cf_label_idx = jax.random.randint(k5, (B,), 0, cfg["n_shift"], jnp.int32)

    out = custom_clip_forward(params, cfg,
                              gt_input_ids, true_attention_mask, gt_label_idx,
                              cf_input_ids, cf_attention_mask, cf_label_idx,
                              target_input_ids, target_attention_mask)
    out = jax.block_until_ready(out)

    assert out.shape == (2 * B, cfg["proj"])
    assert bool(jnp.all(jnp.isfinite(out)))
    # rows are L2-normalized
    assert bool(jnp.allclose(jnp.linalg.norm(out, axis=-1), 1.0, atol=1e-4))
    print("KERNEL_OK")
</pallas_src>

<mosaic_0001>
module attributes {stable_mosaic.version = 11 : i64} {
  func.func @_encoder_stack_kernel(%arg0: i32, %arg1: i32, %arg2: memref<6x8x32xbf16, #tpu.memory_space<vmem>>, %arg3: memref<6x1x8xf32, #tpu.memory_space<vmem>>, %arg4: memref<1x1x32xf32, #tpu.memory_space<vmem>>, %arg5: memref<1x1x32xf32, #tpu.memory_space<vmem>>, %arg6: memref<1x32x96xbf16, #tpu.memory_space<vmem>>, %arg7: memref<1x1x96xf32, #tpu.memory_space<vmem>>, %arg8: memref<1x32x32xbf16, #tpu.memory_space<vmem>>, %arg9: memref<1x1x32xf32, #tpu.memory_space<vmem>>, %arg10: memref<1x1x32xf32, #tpu.memory_space<vmem>>, %arg11: memref<1x1x32xf32, #tpu.memory_space<vmem>>, %arg12: memref<1x32x64xbf16, #tpu.memory_space<vmem>>, %arg13: memref<1x1x64xf32, #tpu.memory_space<vmem>>, %arg14: memref<1x64x32xbf16, #tpu.memory_space<vmem>>, %arg15: memref<1x1x32xf32, #tpu.memory_space<vmem>>, %arg16: memref<6x8x32xbf16, #tpu.memory_space<vmem>>) attributes {dimension_semantics = [#tpu.dimension_semantics<parallel>, #tpu.dimension_semantics<arbitrary>], iteration_bounds = array<i64: 1, 2>, scalar_prefetch = 0 : i64, scratch_operands = 0 : i64, tpu.core_type = #tpu.core_type<tc>, window_params = [{transform_indices = @transform_0, window_bounds = array<i64: 6, 8, 32>}, {transform_indices = @transform_1, window_bounds = array<i64: 6, 1, 8>}, {transform_indices = @transform_2, window_bounds = array<i64: 1, 1, 32>}, {transform_indices = @transform_3, window_bounds = array<i64: 1, 1, 32>}, {transform_indices = @transform_4, window_bounds = array<i64: 1, 32, 96>}, {transform_indices = @transform_5, window_bounds = array<i64: 1, 1, 96>}, {transform_indices = @transform_6, window_bounds = array<i64: 1, 32, 32>}, {transform_indices = @transform_7, window_bounds = array<i64: 1, 1, 32>}, {transform_indices = @transform_8, window_bounds = array<i64: 1, 1, 32>}, {transform_indices = @transform_9, window_bounds = array<i64: 1, 1, 32>}, {transform_indices = @transform_10, window_bounds = array<i64: 1, 32, 64>}, {transform_indices = @transform_11, window_bounds = array<i64: 1, 1, 64>}, {transform_indices = @transform_12, window_bounds = array<i64: 1, 64, 32>}, {transform_indices = @transform_13, window_bounds = array<i64: 1, 1, 32>}, {transform_indices = @transform_14, window_bounds = array<i64: 6, 8, 32>}]} {
    %c0_i32 = arith.constant 0 : i32
    %0 = arith.cmpi eq, %arg1, %c0_i32 : i32
    %1 = arith.extui %0 : i1 to i32
    %c0_i32_0 = arith.constant 0 : i32
    %2 = arith.cmpi ne, %1, %c0_i32_0 : i32
    scf.if %2 {
      %c0_136 = arith.constant 0 : index
      %c0_137 = arith.constant 0 : index
      %c0_138 = arith.constant 0 : index
      %395 = vector.load %arg2[%c0_136, %c0_137, %c0_138] : memref<6x8x32xbf16, #tpu.memory_space<vmem>>, vector<6x8x32xbf16>
      %c0_139 = arith.constant 0 : index
      %c0_140 = arith.constant 0 : index
      %c0_141 = arith.constant 0 : index
      %396 = vector.load %arg16[%c0_139, %c0_140, %c0_141] : memref<6x8x32xbf16, #tpu.memory_space<vmem>>, vector<6x8x32xbf16>
      tpu.vector_store %arg16[%c0_139, %c0_140, %c0_141], %395 {strides = array<i32>} : memref<6x8x32xbf16, #tpu.memory_space<vmem>>, vector<6x8x32xbf16>,
    } else {
    }
    %c0 = arith.constant 0 : index
    %c0_1 = arith.constant 0 : index
    %c0_2 = arith.constant 0 : index
    %3 = vector.load %arg16[%c0, %c0_1, %c0_2] : memref<6x8x32xbf16, #tpu.memory_space<vmem>>, vector<6x8x32xbf16>
    %4 = arith.extf %3 : vector<6x8x32xbf16> to vector<6x8x32xf32>
    %5 = vector.shape_cast %4 : vector<6x8x32xf32> to vector<48x32xf32>
    %c0_3 = arith.constant 0 : index
    %c0_4 = arith.constant 0 : index
    %c0_5 = arith.constant 0 : index
    %6 = vector.load %arg4[%c0_3, %c0_4, %c0_5] : memref<1x1x32xf32, #tpu.memory_space<vmem>>, vector<1x1x32xf32>
    %7 = vector.shape_cast %6 : vector<1x1x32xf32> to vector<1x32xf32>
    %c0_6 = arith.constant 0 : index
    %c0_7 = arith.constant 0 : index
    %c0_8 = arith.constant 0 : index
    %8 = vector.load %arg5[%c0_6, %c0_7, %c0_8] : memref<1x1x32xf32, #tpu.memory_space<vmem>>, vector<1x1x32xf32>
    %9 = vector.shape_cast %8 : vector<1x1x32xf32> to vector<1x32xf32>
    %cst = arith.constant dense<0.000000e+00> : vector<48xf32>
    %10 = vector.multi_reduction <add>, %5, %cst [1] : vector<48x32xf32> to vector<48xf32>
    %11 = vector.shape_cast %10 : vector<48xf32> to vector<48x1xf32>
    %cst_9 = arith.constant 3.200000e+01 : f32
    %12 = vector.broadcast %cst_9 : f32 to vector<48x1xf32>
    %13 = arith.divf %11, %12 : vector<48x1xf32>
    %14 = vector.broadcast %13 : vector<48x1xf32> to vector<48x32xf32>
    %15 = arith.subf %5, %14 : vector<48x32xf32>
    %16 = arith.mulf %15, %15 : vector<48x32xf32>
    %cst_10 = arith.constant dense<0.000000e+00> : vector<48xf32>
    %17 = vector.multi_reduction <add>, %16, %cst_10 [1] : vector<48x32xf32> to vector<48xf32>
    %18 = vector.shape_cast %17 : vector<48xf32> to vector<48x1xf32>
    %cst_11 = arith.constant 3.200000e+01 : f32
    %19 = vector.broadcast %cst_11 : f32 to vector<48x1xf32>
    %20 = arith.divf %18, %19 : vector<48x1xf32>
    %21 = vector.broadcast %13 : vector<48x1xf32> to vector<48x32xf32>
    %22 = arith.subf %5, %21 : vector<48x32xf32>
    %cst_12 = arith.constant 9.99999974E-6 : f32
    %23 = vector.broadcast %cst_12 : f32 to vector<48x1xf32>
    %24 = arith.addf %20, %23 : vector<48x1xf32>
    %25 = math.rsqrt %24 : vector<48x1xf32>
    %26 = vector.broadcast %25 : vector<48x1xf32> to vector<48x32xf32>
    %27 = arith.mulf %22, %26 : vector<48x32xf32>
    %28 = vector.broadcast %7 : vector<1x32xf32> to vector<48x32xf32>
    %29 = arith.mulf %27, %28 : vector<48x32xf32>
    %30 = vector.broadcast %9 : vector<1x32xf32> to vector<48x32xf32>
    %31 = arith.addf %29, %30 : vector<48x32xf32>
    %32 = arith.truncf %31 : vector<48x32xf32> to vector<48x32xbf16>
    %c0_13 = arith.constant 0 : index
    %c0_14 = arith.constant 0 : index
    %c0_15 = arith.constant 0 : index
    %33 = vector.load %arg6[%c0_13, %c0_14, %c0_15] : memref<1x32x96xbf16, #tpu.memory_space<vmem>>, vector<1x32x96xbf16>
    %34 = vector.shape_cast %33 : vector<1x32x96xbf16> to vector<32x96xbf16>
    %cst_16 = arith.constant dense<0.000000e+00> : vector<48x96xf32>
    %35 = tpu.matmul %32, %34, %cst_16 {dimension_numbers = #tpu.dot_dimension_numbers<[1], [0], [0], [1], [0, 0, 1, 1], [], []>} : vector<48x32xbf16>, vector<32x96xbf16>, vector<48x96xf32> -> vector<48x96xf32>
    %c0_17 = arith.constant 0 : index
    %c0_18 = arith.constant 0 : index
    %c0_19 = arith.constant 0 : index
    %36 = vector.load %arg7[%c0_17, %c0_18, %c0_19] : memref<1x1x96xf32, #tpu.memory_space<vmem>>, vector<1x1x96xf32>
    %37 = vector.shape_cast %36 : vector<1x1x96xf32> to vector<1x96xf32>
    %38 = vector.broadcast %37 : vector<1x96xf32> to vector<48x96xf32>
    %39 = arith.addf %35, %38 : vector<48x96xf32>
    %40 = tpu.iota {dimensions = array<i32: 0>} : vector<8x8xi32>
    %41 = tpu.iota {dimensions = array<i32: 1>} : vector<8x8xi32>
    %42 = arith.cmpi sle, %41, %40 : vector<8x8xi32>
    %c0_20 = arith.constant 0 : index
    %c0_21 = arith.constant 0 : index
    %c0_22 = arith.constant 0 : index
    %43 = vector.load %arg3[%c0_20, %c0_21, %c0_22] : memref<6x1x8xf32, #tpu.memory_space<vmem>>, vector<1x1x8xf32>
    %44 = vector.shape_cast %43 : vector<1x1x8xf32> to vector<1x8xf32>
    %cst_23 = arith.constant 5.000000e-01 : f32
    %45 = vector.broadcast %cst_23 : f32 to vector<1x8xf32>
    %46 = arith.cmpf ogt, %44, %45 : vector<1x8xf32>
    %47 = vector.broadcast %46 : vector<1x8xi1> to vector<8x8xi1>
    %48 = arith.andi %42, %47 : vector<8x8xi1>
    %49 = vector.extract_strided_slice %39 {offsets = [0, 0], sizes = [8, 32], strides = [1, 1]} : vector<48x96xf32> to vector<8x32xf32>
    %50 = vector.extract_strided_slice %39 {offsets = [0, 32], sizes = [8, 32], strides = [1, 1]} : vector<48x96xf32> to vector<8x32xf32>
    %51 = vector.extract_strided_slice %39 {offsets = [0, 64], sizes = [8, 32], strides = [1, 1]} : vector<48x96xf32> to vector<8x32xf32>
    %52 = vector.extract_strided_slice %49 {offsets = [0, 0], sizes = [8, 16], strides = [1, 1]} : vector<8x32xf32> to vector<8x16xf32>
    %53 = vector.extract_strided_slice %50 {offsets = [0, 0], sizes = [8, 16], strides = [1, 1]} : vector<8x32xf32> to vector<8x16xf32>
    %54 = vector.extract_strided_slice %51 {offsets = [0, 0], sizes = [8, 16], strides = [1, 1]} : vector<8x32xf32> to vector<8x16xf32>
    %cst_24 = arith.constant dense<0.000000e+00> : vector<8x8xf32>
    %55 = tpu.matmul %52, %53, %cst_24 {dimension_numbers = #tpu.dot_dimension_numbers<[1], [1], [0], [0], [0, 0, 1, 0], [], []>} : vector<8x16xf32>, vector<8x16xf32>, vector<8x8xf32> -> vector<8x8xf32>
    %cst_25 = arith.constant -1.000000e+09 : f32
    %56 = vector.broadcast %cst_25 : f32 to vector<8x8xf32>
    %57 = arith.select %48, %55, %56 : vector<8x8xi1>, vector<8x8xf32>
    %cst_26 = arith.constant dense<0xFF800000> : vector<8xf32>
    %58 = vector.multi_reduction <maximumf>, %57, %cst_26 [1] : vector<8x8xf32> to vector<8xf32>
    %59 = vector.shape_cast %58 : vector<8xf32> to vector<8x1xf32>
    %60 = vector.broadcast %59 : vector<8x1xf32> to vector<8x8xf32>
    %61 = arith.subf %57, %60 : vector<8x8xf32>
    %62 = math.exp %61 : vector<8x8xf32>
    %cst_27 = arith.constant dense<0.000000e+00> : vector<8xf32>
    %63 = vector.multi_reduction <add>, %62, %cst_27 [1] : vector<8x8xf32> to vector<8xf32>
    %64 = vector.shape_cast %63 : vector<8xf32> to vector<8x1xf32>
    %65 = tpu.reciprocal %64 {approx = true} : vector<8x1xf32> -> vector<8x1xf32>
    %66 = vector.broadcast %65 : vector<8x1xf32> to vector<8x8xf32>
    %67 = arith.mulf %62, %66 : vector<8x8xf32>
    %68 = arith.truncf %67 : vector<8x8xf32> to vector<8x8xbf16>
    %69 = arith.truncf %54 : vector<8x16xf32> to vector<8x16xbf16>
    %cst_28 = arith.constant dense<0.000000e+00> : vector<8x16xf32>
    %70 = tpu.matmul %68, %69, %cst_28 {dimension_numbers = #tpu.dot_dimension_numbers<[1], [0], [0], [1], [0, 0, 1, 1], [], []>} : vector<8x8xbf16>, vector<8x16xbf16>, vector<8x16xf32> -> vector<8x16xf32>
    %71 = vector.extract_strided_slice %49 {offsets = [0, 16], sizes = [8, 16], strides = [1, 1]} : vector<8x32xf32> to vector<8x16xf32>
    %72 = vector.extract_strided_slice %50 {offsets = [0, 16], sizes = [8, 16], strides = [1, 1]} : vector<8x32xf32> to vector<8x16xf32>
    %73 = vector.extract_strided_slice %51 {offsets = [0, 16], sizes = [8, 16], strides = [1, 1]} : vector<8x32xf32> to vector<8x16xf32>
    %cst_29 = arith.constant dense<0.000000e+00> : vector<8x8xf32>
    %74 = tpu.matmul %71, %72, %cst_29 {dimension_numbers = #tpu.dot_dimension_numbers<[1], [1], [0], [0], [0, 0, 1, 0], [], []>} : vector<8x16xf32>, vector<8x16xf32>, vector<8x8xf32> -> vector<8x8xf32>
    %cst_30 = arith.constant -1.000000e+09 : f32
    %75 = vector.broadcast %cst_30 : f32 to vector<8x8xf32>
    %76 = arith.select %48, %74, %75 : vector<8x8xi1>, vector<8x8xf32>
    %cst_31 = arith.constant dense<0xFF800000> : vector<8xf32>
    %77 = vector.multi_reduction <maximumf>, %76, %cst_31 [1] : vector<8x8xf32> to vector<8xf32>
    %78 = vector.shape_cast %77 : vector<8xf32> to vector<8x1xf32>
    %79 = vector.broadcast %78 : vector<8x1xf32> to vector<8x8xf32>
    %80 = arith.subf %76, %79 : vector<8x8xf32>
    %81 = math.exp %80 : vector<8x8xf32>
    %cst_32 = arith.constant dense<0.000000e+00> : vector<8xf32>
    %82 = vector.multi_reduction <add>, %81, %cst_32 [1] : vector<8x8xf32> to vector<8xf32>
    %83 = vector.shape_cast %82 : vector<8xf32> to vector<8x1xf32>
    %84 = tpu.reciprocal %83 {approx = true} : vector<8x1xf32> -> vector<8x1xf32>
    %85 = vector.broadcast %84 : vector<8x1xf32> to vector<8x8xf32>
    %86 = arith.mulf %81, %85 : vector<8x8xf32>
    %87 = arith.truncf %86 : vector<8x8xf32> to vector<8x8xbf16>
    %88 = arith.truncf %73 : vector<8x16xf32> to vector<8x16xbf16>
    %cst_33 = arith.constant dense<0.000000e+00> : vector<8x16xf32>
    %89 = tpu.matmul %87, %88, %cst_33 {dimension_numbers = #tpu.dot_dimension_numbers<[1], [0], [0], [1], [0, 0, 1, 1], [], []>} : vector<8x8xbf16>, vector<8x16xbf16>, vector<8x16xf32> -> vector<8x16xf32>
    %90 = tpu.concatenate %70, %89 in 1 : vector<8x16xf32>, vector<8x16xf32> -> vector<8x32xf32>
    %c1 = arith.constant 1 : index
    %c0_34 = arith.constant 0 : index
    %c0_35 = arith.constant 0 : index
    %91 = vector.load %arg3[%c1, %c0_34, %c0_35] : memref<6x1x8xf32, #tpu.memory_space<vmem>>, vector<1x1x8xf32>
    %92 = vector.shape_cast %91 : vector<1x1x8xf32> to vector<1x8xf32>
    %cst_36 = arith.constant 5.000000e-01 : f32
    %93 = vector.broadcast %cst_36 : f32 to vector<1x8xf32>
    %94 = arith.cmpf ogt, %92, %93 : vector<1x8xf32>
    %95 = vector.broadcast %94 : vector<1x8xi1> to vector<8x8xi1>
    %96 = arith.andi %42, %95 : vector<8x8xi1>
    %97 = vector.extract_strided_slice %39 {offsets = [8, 0], sizes = [8, 32], strides = [1, 1]} : vector<48x96xf32> to vector<8x32xf32>
    %98 = vector.extract_strided_slice %39 {offsets = [8, 32], sizes = [8, 32], strides = [1, 1]} : vector<48x96xf32> to vector<8x32xf32>
    %99 = vector.extract_strided_slice %39 {offsets = [8, 64], sizes = [8, 32], strides = [1, 1]} : vector<48x96xf32> to vector<8x32xf32>
    %100 = vector.extract_strided_slice %97 {offsets = [0, 0], sizes = [8, 16], strides = [1, 1]} : vector<8x32xf32> to vector<8x16xf32>
    %101 = vector.extract_strided_slice %98 {offsets = [0, 0], sizes = [8, 16], strides = [1, 1]} : vector<8x32xf32> to vector<8x16xf32>
    %102 = vector.extract_strided_slice %99 {offsets = [0, 0], sizes = [8, 16], strides = [1, 1]} : vector<8x32xf32> to vector<8x16xf32>
    %cst_37 = arith.constant dense<0.000000e+00> : vector<8x8xf32>
    %103 = tpu.matmul %100, %101, %cst_37 {dimension_numbers = #tpu.dot_dimension_numbers<[1], [1], [0], [0], [0, 0, 1, 0], [], []>} : vector<8x16xf32>, vector<8x16xf32>, vector<8x8xf32> -> vector<8x8xf32>
    %cst_38 = arith.constant -1.000000e+09 : f32
    %104 = vector.broadcast %cst_38 : f32 to vector<8x8xf32>
    %105 = arith.select %96, %103, %104 : vector<8x8xi1>, vector<8x8xf32>
    %cst_39 = arith.constant dense<0xFF800000> : vector<8xf32>
    %106 = vector.multi_reduction <maximumf>, %105, %cst_39 [1] : vector<8x8xf32> to vector<8xf32>
    %107 = vector.shape_cast %106 : vector<8xf32> to vector<8x1xf32>
    %108 = vector.broadcast %107 : vector<8x1xf32> to vector<8x8xf32>
    %109 = arith.subf %105, %108 : vector<8x8xf32>
    %110 = math.exp %109 : vector<8x8xf32>
    %cst_40 = arith.constant dense<0.000000e+00> : vector<8xf32>
    %111 = vector.multi_reduction <add>, %110, %cst_40 [1] : vector<8x8xf32> to vector<8xf32>
    %112 = vector.shape_cast %111 : vector<8xf32> to vector<8x1xf32>
    %113 = tpu.reciprocal %112 {approx = true} : vector<8x1xf32> -> vector<8x1xf32>
    %114 = vector.broadcast %113 : vector<8x1xf32> to vector<8x8xf32>
    %115 = arith.mulf %110, %114 : vector<8x8xf32>
    %116 = arith.truncf %115 : vector<8x8xf32> to vector<8x8xbf16>
    %117 = arith.truncf %102 : vector<8x16xf32> to vector<8x16xbf16>
    %cst_41 = arith.constant dense<0.000000e+00> : vector<8x16xf32>
    %118 = tpu.matmul %116, %117, %cst_41 {dimension_numbers = #tpu.dot_dimension_numbers<[1], [0], [0], [1], [0, 0, 1, 1], [], []>} : vector<8x8xbf16>, vector<8x16xbf16>, vector<8x16xf32> -> vector<8x16xf32>
    %119 = vector.extract_strided_slice %97 {offsets = [0, 16], sizes = [8, 16], strides = [1, 1]} : vector<8x32xf32> to vector<8x16xf32>
    %120 = vector.extract_strided_slice %98 {offsets = [0, 16], sizes = [8, 16], strides = [1, 1]} : vector<8x32xf32> to vector<8x16xf32>
    %121 = vector.extract_strided_slice %99 {offsets = [0, 16], sizes = [8, 16], strides = [1, 1]} : vector<8x32xf32> to vector<8x16xf32>
    %cst_42 = arith.constant dense<0.000000e+00> : vector<8x8xf32>
    %122 = tpu.matmul %119, %120, %cst_42 {dimension_numbers = #tpu.dot_dimension_numbers<[1], [1], [0], [0], [0, 0, 1, 0], [], []>} : vector<8x16xf32>, vector<8x16xf32>, vector<8x8xf32> -> vector<8x8xf32>
    %cst_43 = arith.constant -1.000000e+09 : f32
    %123 = vector.broadcast %cst_43 : f32 to vector<8x8xf32>
    %124 = arith.select %96, %122, %123 : vector<8x8xi1>, vector<8x8xf32>
    %cst_44 = arith.constant dense<0xFF800000> : vector<8xf32>
    %125 = vector.multi_reduction <maximumf>, %124, %cst_44 [1] : vector<8x8xf32> to vector<8xf32>
    %126 = vector.shape_cast %125 : vector<8xf32> to vector<8x1xf32>
    %127 = vector.broadcast %126 : vector<8x1xf32> to vector<8x8xf32>
    %128 = arith.subf %124, %127 : vector<8x8xf32>
    %129 = math.exp %128 : vector<8x8xf32>
    %cst_45 = arith.constant dense<0.000000e+00> : vector<8xf32>
    %130 = vector.multi_reduction <add>, %129, %cst_45 [1] : vector<8x8xf32> to vector<8xf32>
    %131 = vector.shape_cast %130 : vector<8xf32> to vector<8x1xf32>
    %132 = tpu.reciprocal %131 {approx = true} : vector<8x1xf32> -> vector<8x1xf32>
    %133 = vector.broadcast %132 : vector<8x1xf32> to vector<8x8xf32>
    %134 = arith.mulf %129, %133 : vector<8x8xf32>
    %135 = arith.truncf %134 : vector<8x8xf32> to vector<8x8xbf16>
    %136 = arith.truncf %121 : vector<8x16xf32> to vector<8x16xbf16>
    %cst_46 = arith.constant dense<0.000000e+00> : vector<8x16xf32>
    %137 = tpu.matmul %135, %136, %cst_46 {dimension_numbers = #tpu.dot_dimension_numbers<[1], [0], [0], [1], [0, 0, 1, 1], [], []>} : vector<8x8xbf16>, vector<8x16xbf16>, vector<8x16xf32> -> vector<8x16xf32>
    %138 = tpu.concatenate %118, %137 in 1 : vector<8x16xf32>, vector<8x16xf32> -> vector<8x32xf32>
    %c2 = arith.constant 2 : index
    %c0_47 = arith.constant 0 : index
    %c0_48 = arith.constant 0 : index
    %139 = vector.load %arg3[%c2, %c0_47, %c0_48] : memref<6x1x8xf32, #tpu.memory_space<vmem>>, vector<1x1x8xf32>
    %140 = vector.shape_cast %139 : vector<1x1x8xf32> to vector<1x8xf32>
    %cst_49 = arith.constant 5.000000e-01 : f32
    %141 = vector.broadcast %cst_49 : f32 to vector<1x8xf32>
    %142 = arith.cmpf ogt, %140, %141 : vector<1x8xf32>
    %143 = vector.broadcast %142 : vector<1x8xi1> to vector<8x8xi1>
    %144 = arith.andi %42, %143 : vector<8x8xi1>
    %145 = vector.extract_strided_slice %39 {offsets = [16, 0], sizes = [8, 32], strides = [1, 1]} : vector<48x96xf32> to vector<8x32xf32>
    %146 = vector.extract_strided_slice %39 {offsets = [16, 32], sizes = [8, 32], strides = [1, 1]} : vector<48x96xf32> to vector<8x32xf32>
    %147 = vector.extract_strided_slice %39 {offsets = [16, 64], sizes = [8, 32], strides = [1, 1]} : vector<48x96xf32> to vector<8x32xf32>
    %148 = vector.extract_strided_slice %145 {offsets = [0, 0], sizes = [8, 16], strides = [1, 1]} : vector<8x32xf32> to vector<8x16xf32>
    %149 = vector.extract_strided_slice %146 {offsets = [0, 0], sizes = [8, 16], strides = [1, 1]} : vector<8x32xf32> to vector<8x16xf32>
    %150 = vector.extract_strided_slice %147 {offsets = [0, 0], sizes = [8, 16], strides = [1, 1]} : vector<8x32xf32> to vector<8x16xf32>
    %cst_50 = arith.constant dense<0.000000e+00> : vector<8x8xf32>
    %151 = tpu.matmul %148, %149, %cst_50 {dimension_numbers = #tpu.dot_dimension_numbers<[1], [1], [0], [0], [0, 0, 1, 0], [], []>} : vector<8x16xf32>, vector<8x16xf32>, vector<8x8xf32> -> vector<8x8xf32>
    %cst_51 = arith.constant -1.000000e+09 : f32
    %152 = vector.broadcast %cst_51 : f32 to vector<8x8xf32>
    %153 = arith.select %144, %151, %152 : vector<8x8xi1>, vector<8x8xf32>
    %cst_52 = arith.constant dense<0xFF800000> : vector<8xf32>
    %154 = vector.multi_reduction <maximumf>, %153, %cst_52 [1] : vector<8x8xf32> to vector<8xf32>
    %155 = vector.shape_cast %154 : vector<8xf32> to vector<8x1xf32>
    %156 = vector.broadcast %155 : vector<8x1xf32> to vector<8x8xf32>
    %157 = arith.subf %153, %156 : vector<8x8xf32>
    %158 = math.exp %157 : vector<8x8xf32>
    %cst_53 = arith.constant dense<0.000000e+00> : vector<8xf32>
    %159 = vector.multi_reduction <add>, %158, %cst_53 [1] : vector<8x8xf32> to vector<8xf32>
    %160 = vector.shape_cast %159 : vector<8xf32> to vector<8x1xf32>
    %161 = tpu.reciprocal %160 {approx = true} : vector<8x1xf32> -> vector<8x1xf32>
    %162 = vector.broadcast %161 : vector<8x1xf32> to vector<8x8xf32>
    %163 = arith.mulf %158, %162 : vector<8x8xf32>
    %164 = arith.truncf %163 : vector<8x8xf32> to vector<8x8xbf16>
    %165 = arith.truncf %150 : vector<8x16xf32> to vector<8x16xbf16>
    %cst_54 = arith.constant dense<0.000000e+00> : vector<8x16xf32>
    %166 = tpu.matmul %164, %165, %cst_54 {dimension_numbers = #tpu.dot_dimension_numbers<[1], [0], [0], [1], [0, 0, 1, 1], [], []>} : vector<8x8xbf16>, vector<8x16xbf16>, vector<8x16xf32> -> vector<8x16xf32>
    %167 = vector.extract_strided_slice %145 {offsets = [0, 16], sizes = [8, 16], strides = [1, 1]} : vector<8x32xf32> to vector<8x16xf32>
    %168 = vector.extract_strided_slice %146 {offsets = [0, 16], sizes = [8, 16], strides = [1, 1]} : vector<8x32xf32> to vector<8x16xf32>
    %169 = vector.extract_strided_slice %147 {offsets = [0, 16], sizes = [8, 16], strides = [1, 1]} : vector<8x32xf32> to vector<8x16xf32>
    %cst_55 = arith.constant dense<0.000000e+00> : vector<8x8xf32>
    %170 = tpu.matmul %167, %168, %cst_55 {dimension_numbers = #tpu.dot_dimension_numbers<[1], [1], [0], [0], [0, 0, 1, 0], [], []>} : vector<8x16xf32>, vector<8x16xf32>, vector<8x8xf32> -> vector<8x8xf32>
    %cst_56 = arith.constant -1.000000e+09 : f32
    %171 = vector.broadcast %cst_56 : f32 to vector<8x8xf32>
    %172 = arith.select %144, %170, %171 : vector<8x8xi1>, vector<8x8xf32>
    %cst_57 = arith.constant dense<0xFF800000> : vector<8xf32>
    %173 = vector.multi_reduction <maximumf>, %172, %cst_57 [1] : vector<8x8xf32> to vector<8xf32>
    %174 = vector.shape_cast %173 : vector<8xf32> to vector<8x1xf32>
    %175 = vector.broadcast %174 : vector<8x1xf32> to vector<8x8xf32>
    %176 = arith.subf %172, %175 : vector<8x8xf32>
    %177 = math.exp %176 : vector<8x8xf32>
    %cst_58 = arith.constant dense<0.000000e+00> : vector<8xf32>
    %178 = vector.multi_reduction <add>, %177, %cst_58 [1] : vector<8x8xf32> to vector<8xf32>
    %179 = vector.shape_cast %178 : vector<8xf32> to vector<8x1xf32>
    %180 = tpu.reciprocal %179 {approx = true} : vector<8x1xf32> -> vector<8x1xf32>
    %181 = vector.broadcast %180 : vector<8x1xf32> to vector<8x8xf32>
    %182 = arith.mulf %177, %181 : vector<8x8xf32>
    %183 = arith.truncf %182 : vector<8x8xf32> to vector<8x8xbf16>
    %184 = arith.truncf %169 : vector<8x16xf32> to vector<8x16xbf16>
    %cst_59 = arith.constant dense<0.000000e+00> : vector<8x16xf32>
    %185 = tpu.matmul %183, %184, %cst_59 {dimension_numbers = #tpu.dot_dimension_numbers<[1], [0], [0], [1], [0, 0, 1, 1], [], []>} : vector<8x8xbf16>, vector<8x16xbf16>, vector<8x16xf32> -> vector<8x16xf32>
    %186 = tpu.concatenate %166, %185 in 1 : vector<8x16xf32>, vector<8x16xf32> -> vector<8x32xf32>
    %c3 = arith.constant 3 : index
    %c0_60 = arith.constant 0 : index
    %c0_61 = arith.constant 0 : index
    %187 = vector.load %arg3[%c3, %c0_60, %c0_61] : memref<6x1x8xf32, #tpu.memory_space<vmem>>, vector<1x1x8xf32>
    %188 = vector.shape_cast %187 : vector<1x1x8xf32> to vector<1x8xf32>
    %cst_62 = arith.constant 5.000000e-01 : f32
    %189 = vector.broadcast %cst_62 : f32 to vector<1x8xf32>
    %190 = arith.cmpf ogt, %188, %189 : vector<1x8xf32>
    %191 = vector.broadcast %190 : vector<1x8xi1> to vector<8x8xi1>
    %192 = arith.andi %42, %191 : vector<8x8xi1>
    %193 = vector.extract_strided_slice %39 {offsets = [24, 0], sizes = [8, 32], strides = [1, 1]} : vector<48x96xf32> to vector<8x32xf32>
    %194 = vector.extract_strided_slice %39 {offsets = [24, 32], sizes = [8, 32], strides = [1, 1]} : vector<48x96xf32> to vector<8x32xf32>
    %195 = vector.extract_strided_slice %39 {offsets = [24, 64], sizes = [8, 32], strides = [1, 1]} : vector<48x96xf32> to vector<8x32xf32>
    %196 = vector.extract_strided_slice %193 {offsets = [0, 0], sizes = [8, 16], strides = [1, 1]} : vector<8x32xf32> to vector<8x16xf32>
    %197 = vector.extract_strided_slice %194 {offsets = [0, 0], sizes = [8, 16], strides = [1, 1]} : vector<8x32xf32> to vector<8x16xf32>
    %198 = vector.extract_strided_slice %195 {offsets = [0, 0], sizes = [8, 16], strides = [1, 1]} : vector<8x32xf32> to vector<8x16xf32>
    %cst_63 = arith.constant dense<0.000000e+00> : vector<8x8xf32>
    %199 = tpu.matmul %196, %197, %cst_63 {dimension_numbers = #tpu.dot_dimension_numbers<[1], [1], [0], [0], [0, 0, 1, 0], [], []>} : vector<8x16xf32>, vector<8x16xf32>, vector<8x8xf32> -> vector<8x8xf32>
    %cst_64 = arith.constant -1.000000e+09 : f32
    %200 = vector.broadcast %cst_64 : f32 to vector<8x8xf32>
    %201 = arith.select %192, %199, %200 : vector<8x8xi1>, vector<8x8xf32>
    %cst_65 = arith.constant dense<0xFF800000> : vector<8xf32>
    %202 = vector.multi_reduction <maximumf>, %201, %cst_65 [1] : vector<8x8xf32> to vector<8xf32>
    %203 = vector.shape_cast %202 : vector<8xf32> to vector<8x1xf32>
    %204 = vector.broadcast %203 : vector<8x1xf32> to vector<8x8xf32>
    %205 = arith.subf %201, %204 : vector<8x8xf32>
    %206 = math.exp %205 : vector<8x8xf32>
    %cst_66 = arith.constant dense<0.000000e+00> : vector<8xf32>
    %207 = vector.multi_reduction <add>, %206, %cst_66 [1] : vector<8x8xf32> to vector<8xf32>
    %208 = vector.shape_cast %207 : vector<8xf32> to vector<8x1xf32>
    %209 = tpu.reciprocal %208 {approx = true} : vector<8x1xf32> -> vector<8x1xf32>
    %210 = vector.broadcast %209 : vector<8x1xf32> to vector<8x8xf32>
    %211 = arith.mulf %206, %210 : vector<8x8xf32>
    %212 = arith.truncf %211 : vector<8x8xf32> to vector<8x8xbf16>
    %213 = arith.truncf %198 : vector<8x16xf32> to vector<8x16xbf16>
    %cst_67 = arith.constant dense<0.000000e+00> : vector<8x16xf32>
    %214 = tpu.matmul %212, %213, %cst_67 {dimension_numbers = #tpu.dot_dimension_numbers<[1], [0], [0], [1], [0, 0, 1, 1], [], []>} : vector<8x8xbf16>, vector<8x16xbf16>, vector<8x16xf32> -> vector<8x16xf32>
    %215 = vector.extract_strided_slice %193 {offsets = [0, 16], sizes = [8, 16], strides = [1, 1]} : vector<8x32xf32> to vector<8x16xf32>
    %216 = vector.extract_strided_slice %194 {offsets = [0, 16], sizes = [8, 16], strides = [1, 1]} : vector<8x32xf32> to vector<8x16xf32>
    %217 = vector.extract_strided_slice %195 {offsets = [0, 16], sizes = [8, 16], strides = [1, 1]} : vector<8x32xf32> to vector<8x16xf32>
    %cst_68 = arith.constant dense<0.000000e+00> : vector<8x8xf32>
    %218 = tpu.matmul %215, %216, %cst_68 {dimension_numbers = #tpu.dot_dimension_numbers<[1], [1], [0], [0], [0, 0, 1, 0], [], []>} : vector<8x16xf32>, vector<8x16xf32>, vector<8x8xf32> -> vector<8x8xf32>
    %cst_69 = arith.constant -1.000000e+09 : f32
    %219 = vector.broadcast %cst_69 : f32 to vector<8x8xf32>
    %220 = arith.select %192, %218, %219 : vector<8x8xi1>, vector<8x8xf32>
    %cst_70 = arith.constant dense<0xFF800000> : vector<8xf32>
    %221 = vector.multi_reduction <maximumf>, %220, %cst_70 [1] : vector<8x8xf32> to vector<8xf32>
    %222 = vector.shape_cast %221 : vector<8xf32> to vector<8x1xf32>
    %223 = vector.broadcast %222 : vector<8x1xf32> to vector<8x8xf32>
    %224 = arith.subf %220, %223 : vector<8x8xf32>
    %225 = math.exp %224 : vector<8x8xf32>
    %cst_71 = arith.constant dense<0.000000e+00> : vector<8xf32>
    %226 = vector.multi_reduction <add>, %225, %cst_71 [1] : vector<8x8xf32> to vector<8xf32>
    %227 = vector.shape_cast %226 : vector<8xf32> to vector<8x1xf32>
    %228 = tpu.reciprocal %227 {approx = true} : vector<8x1xf32> -> vector<8x1xf32>
    %229 = vector.broadcast %228 : vector<8x1xf32> to vector<8x8xf32>
    %230 = arith.mulf %225, %229 : vector<8x8xf32>
    %231 = arith.truncf %230 : vector<8x8xf32> to vector<8x8xbf16>
    %232 = arith.truncf %217 : vector<8x16xf32> to vector<8x16xbf16>
    %cst_72 = arith.constant dense<0.000000e+00> : vector<8x16xf32>
    %233 = tpu.matmul %231, %232, %cst_72 {dimension_numbers = #tpu.dot_dimension_numbers<[1], [0], [0], [1], [0, 0, 1, 1], [], []>} : vector<8x8xbf16>, vector<8x16xbf16>, vector<8x16xf32> -> vector<8x16xf32>
    %234 = tpu.concatenate %214, %233 in 1 : vector<8x16xf32>, vector<8x16xf32> -> vector<8x32xf32>
    %c4 = arith.constant 4 : index
    %c0_73 = arith.constant 0 : index
    %c0_74 = arith.constant 0 : index
    %235 = vector.load %arg3[%c4, %c0_73, %c0_74] : memref<6x1x8xf32, #tpu.memory_space<vmem>>, vector<1x1x8xf32>
    %236 = vector.shape_cast %235 : vector<1x1x8xf32> to vector<1x8xf32>
    %cst_75 = arith.constant 5.000000e-01 : f32
    %237 = vector.broadcast %cst_75 : f32 to vector<1x8xf32>
    %238 = arith.cmpf ogt, %236, %237 : vector<1x8xf32>
    %239 = vector.broadcast %238 : vector<1x8xi1> to vector<8x8xi1>
    %240 = arith.andi %42, %239 : vector<8x8xi1>
    %241 = vector.extract_strided_slice %39 {offsets = [32, 0], sizes = [8, 32], strides = [1, 1]} : vector<48x96xf32> to vector<8x32xf32>
    %242 = vector.extract_strided_slice %39 {offsets = [32, 32], sizes = [8, 32], strides = [1, 1]} : vector<48x96xf32> to vector<8x32xf32>
    %243 = vector.extract_strided_slice %39 {offsets = [32, 64], sizes = [8, 32], strides = [1, 1]} : vector<48x96xf32> to vector<8x32xf32>
    %244 = vector.extract_strided_slice %241 {offsets = [0, 0], sizes = [8, 16], strides = [1, 1]} : vector<8x32xf32> to vector<8x16xf32>
    %245 = vector.extract_strided_slice %242 {offsets = [0, 0], sizes = [8, 16], strides = [1, 1]} : vector<8x32xf32> to vector<8x16xf32>
    %246 = vector.extract_strided_slice %243 {offsets = [0, 0], sizes = [8, 16], strides = [1, 1]} : vector<8x32xf32> to vector<8x16xf32>
    %cst_76 = arith.constant dense<0.000000e+00> : vector<8x8xf32>
    %247 = tpu.matmul %244, %245, %cst_76 {dimension_numbers = #tpu.dot_dimension_numbers<[1], [1], [0], [0], [0, 0, 1, 0], [], []>} : vector<8x16xf32>, vector<8x16xf32>, vector<8x8xf32> -> vector<8x8xf32>
    %cst_77 = arith.constant -1.000000e+09 : f32
    %248 = vector.broadcast %cst_77 : f32 to vector<8x8xf32>
    %249 = arith.select %240, %247, %248 : vector<8x8xi1>, vector<8x8xf32>
    %cst_78 = arith.constant dense<0xFF800000> : vector<8xf32>
    %250 = vector.multi_reduction <maximumf>, %249, %cst_78 [1] : vector<8x8xf32> to vector<8xf32>
    %251 = vector.shape_cast %250 : vector<8xf32> to vector<8x1xf32>
    %252 = vector.broadcast %251 : vector<8x1xf32> to vector<8x8xf32>
    %253 = arith.subf %249, %252 : vector<8x8xf32>
    %254 = math.exp %253 : vector<8x8xf32>
    %cst_79 = arith.constant dense<0.000000e+00> : vector<8xf32>
    %255 = vector.multi_reduction <add>, %254, %cst_79 [1] : vector<8x8xf32> to vector<8xf32>
    %256 = vector.shape_cast %255 : vector<8xf32> to vector<8x1xf32>
    %257 = tpu.reciprocal %256 {approx = true} : vector<8x1xf32> -> vector<8x1xf32>
    %258 = vector.broadcast %257 : vector<8x1xf32> to vector<8x8xf32>
    %259 = arith.mulf %254, %258 : vector<8x8xf32>
    %260 = arith.truncf %259 : vector<8x8xf32> to vector<8x8xbf16>
    %261 = arith.truncf %246 : vector<8x16xf32> to vector<8x16xbf16>
    %cst_80 = arith.constant dense<0.000000e+00> : vector<8x16xf32>
    %262 = tpu.matmul %260, %261, %cst_80 {dimension_numbers = #tpu.dot_dimension_numbers<[1], [0], [0], [1], [0, 0, 1, 1], [], []>} : vector<8x8xbf16>, vector<8x16xbf16>, vector<8x16xf32> -> vector<8x16xf32>
    %263 = vector.extract_strided_slice %241 {offsets = [0, 16], sizes = [8, 16], strides = [1, 1]} : vector<8x32xf32> to vector<8x16xf32>
    %264 = vector.extract_strided_slice %242 {offsets = [0, 16], sizes = [8, 16], strides = [1, 1]} : vector<8x32xf32> to vector<8x16xf32>
    %265 = vector.extract_strided_slice %243 {offsets = [0, 16], sizes = [8, 16], strides = [1, 1]} : vector<8x32xf32> to vector<8x16xf32>
    %cst_81 = arith.constant dense<0.000000e+00> : vector<8x8xf32>
    %266 = tpu.matmul %263, %264, %cst_81 {dimension_numbers = #tpu.dot_dimension_numbers<[1], [1], [0], [0], [0, 0, 1, 0], [], []>} : vector<8x16xf32>, vector<8x16xf32>, vector<8x8xf32> -> vector<8x8xf32>
    %cst_82 = arith.constant -1.000000e+09 : f32
    %267 = vector.broadcast %cst_82 : f32 to vector<8x8xf32>
    %268 = arith.select %240, %266, %267 : vector<8x8xi1>, vector<8x8xf32>
    %cst_83 = arith.constant dense<0xFF800000> : vector<8xf32>
    %269 = vector.multi_reduction <maximumf>, %268, %cst_83 [1] : vector<8x8xf32> to vector<8xf32>
    %270 = vector.shape_cast %269 : vector<8xf32> to vector<8x1xf32>
    %271 = vector.broadcast %270 : vector<8x1xf32> to vector<8x8xf32>
    %272 = arith.subf %268, %271 : vector<8x8xf32>
    %273 = math.exp %272 : vector<8x8xf32>
    %cst_84 = arith.constant dense<0.000000e+00> : vector<8xf32>
    %274 = vector.multi_reduction <add>, %273, %cst_84 [1] : vector<8x8xf32> to vector<8xf32>
    %275 = vector.shape_cast %274 : vector<8xf32> to vector<8x1xf32>
    %276 = tpu.reciprocal %275 {approx = true} : vector<8x1xf32> -> vector<8x1xf32>
    %277 = vector.broadcast %276 : vector<8x1xf32> to vector<8x8xf32>
    %278 = arith.mulf %273, %277 : vector<8x8xf32>
    %279 = arith.truncf %278 : vector<8x8xf32> to vector<8x8xbf16>
    %280 = arith.truncf %265 : vector<8x16xf32> to vector<8x16xbf16>
    %cst_85 = arith.constant dense<0.000000e+00> : vector<8x16xf32>
    %281 = tpu.matmul %279, %280, %cst_85 {dimension_numbers = #tpu.dot_dimension_numbers<[1], [0], [0], [1], [0, 0, 1, 1], [], []>} : vector<8x8xbf16>, vector<8x16xbf16>, vector<8x16xf32> -> vector<8x16xf32>
    %282 = tpu.concatenate %262, %281 in 1 : vector<8x16xf32>, vector<8x16xf32> -> vector<8x32xf32>
    %c5 = arith.constant 5 : index
    %c0_86 = arith.constant 0 : index
    %c0_87 = arith.constant 0 : index
    %283 = vector.load %arg3[%c5, %c0_86, %c0_87] : memref<6x1x8xf32, #tpu.memory_space<vmem>>, vector<1x1x8xf32>
    %284 = vector.shape_cast %283 : vector<1x1x8xf32> to vector<1x8xf32>
    %cst_88 = arith.constant 5.000000e-01 : f32
    %285 = vector.broadcast %cst_88 : f32 to vector<1x8xf32>
    %286 = arith.cmpf ogt, %284, %285 : vector<1x8xf32>
    %287 = vector.broadcast %286 : vector<1x8xi1> to vector<8x8xi1>
    %288 = arith.andi %42, %287 : vector<8x8xi1>
    %289 = vector.extract_strided_slice %39 {offsets = [40, 0], sizes = [8, 32], strides = [1, 1]} : vector<48x96xf32> to vector<8x32xf32>
    %290 = vector.extract_strided_slice %39 {offsets = [40, 32], sizes = [8, 32], strides = [1, 1]} : vector<48x96xf32> to vector<8x32xf32>
    %291 = vector.extract_strided_slice %39 {offsets = [40, 64], sizes = [8, 32], strides = [1, 1]} : vector<48x96xf32> to vector<8x32xf32>
    %292 = vector.extract_strided_slice %289 {offsets = [0, 0], sizes = [8, 16], strides = [1, 1]} : vector<8x32xf32> to vector<8x16xf32>
    %293 = vector.extract_strided_slice %290 {offsets = [0, 0], sizes = [8, 16], strides = [1, 1]} : vector<8x32xf32> to vector<8x16xf32>
    %294 = vector.extract_strided_slice %291 {offsets = [0, 0], sizes = [8, 16], strides = [1, 1]} : vector<8x32xf32> to vector<8x16xf32>
    %cst_89 = arith.constant dense<0.000000e+00> : vector<8x8xf32>
    %295 = tpu.matmul %292, %293, %cst_89 {dimension_numbers = #tpu.dot_dimension_numbers<[1], [1], [0], [0], [0, 0, 1, 0], [], []>} : vector<8x16xf32>, vector<8x16xf32>, vector<8x8xf32> -> vector<8x8xf32>
    %cst_90 = arith.constant -1.000000e+09 : f32
    %296 = vector.broadcast %cst_90 : f32 to vector<8x8xf32>
    %297 = arith.select %288, %295, %296 : vector<8x8xi1>, vector<8x8xf32>
    %cst_91 = arith.constant dense<0xFF800000> : vector<8xf32>
    %298 = vector.multi_reduction <maximumf>, %297, %cst_91 [1] : vector<8x8xf32> to vector<8xf32>
    %299 = vector.shape_cast %298 : vector<8xf32> to vector<8x1xf32>
    %300 = vector.broadcast %299 : vector<8x1xf32> to vector<8x8xf32>
    %301 = arith.subf %297, %300 : vector<8x8xf32>
    %302 = math.exp %301 : vector<8x8xf32>
    %cst_92 = arith.constant dense<0.000000e+00> : vector<8xf32>
    %303 = vector.multi_reduction <add>, %302, %cst_92 [1] : vector<8x8xf32> to vector<8xf32>
    %304 = vector.shape_cast %303 : vector<8xf32> to vector<8x1xf32>
    %305 = tpu.reciprocal %304 {approx = true} : vector<8x1xf32> -> vector<8x1xf32>
    %306 = vector.broadcast %305 : vector<8x1xf32> to vector<8x8xf32>
    %307 = arith.mulf %302, %306 : vector<8x8xf32>
    %308 = arith.truncf %307 : vector<8x8xf32> to vector<8x8xbf16>
    %309 = arith.truncf %294 : vector<8x16xf32> to vector<8x16xbf16>
    %cst_93 = arith.constant dense<0.000000e+00> : vector<8x16xf32>
    %310 = tpu.matmul %308, %309, %cst_93 {dimension_numbers = #tpu.dot_dimension_numbers<[1], [0], [0], [1], [0, 0, 1, 1], [], []>} : vector<8x8xbf16>, vector<8x16xbf16>, vector<8x16xf32> -> vector<8x16xf32>
    %311 = vector.extract_strided_slice %289 {offsets = [0, 16], sizes = [8, 16], strides = [1, 1]} : vector<8x32xf32> to vector<8x16xf32>
    %312 = vector.extract_strided_slice %290 {offsets = [0, 16], sizes = [8, 16], strides = [1, 1]} : vector<8x32xf32> to vector<8x16xf32>
    %313 = vector.extract_strided_slice %291 {offsets = [0, 16], sizes = [8, 16], strides = [1, 1]} : vector<8x32xf32> to vector<8x16xf32>
    %cst_94 = arith.constant dense<0.000000e+00> : vector<8x8xf32>
    %314 = tpu.matmul %311, %312, %cst_94 {dimension_numbers = #tpu.dot_dimension_numbers<[1], [1], [0], [0], [0, 0, 1, 0], [], []>} : vector<8x16xf32>, vector<8x16xf32>, vector<8x8xf32> -> vector<8x8xf32>
    %cst_95 = arith.constant -1.000000e+09 : f32
    %315 = vector.broadcast %cst_95 : f32 to vector<8x8xf32>
    %316 = arith.select %288, %314, %315 : vector<8x8xi1>, vector<8x8xf32>
    %cst_96 = arith.constant dense<0xFF800000> : vector<8xf32>
    %317 = vector.multi_reduction <maximumf>, %316, %cst_96 [1] : vector<8x8xf32> to vector<8xf32>
    %318 = vector.shape_cast %317 : vector<8xf32> to vector<8x1xf32>
    %319 = vector.broadcast %318 : vector<8x1xf32> to vector<8x8xf32>
    %320 = arith.subf %316, %319 : vector<8x8xf32>
    %321 = math.exp %320 : vector<8x8xf32>
    %cst_97 = arith.constant dense<0.000000e+00> : vector<8xf32>
    %322 = vector.multi_reduction <add>, %321, %cst_97 [1] : vector<8x8xf32> to vector<8xf32>
    %323 = vector.shape_cast %322 : vector<8xf32> to vector<8x1xf32>
    %324 = tpu.reciprocal %323 {approx = true} : vector<8x1xf32> -> vector<8x1xf32>
    %325 = vector.broadcast %324 : vector<8x1xf32> to vector<8x8xf32>
    %326 = arith.mulf %321, %325 : vector<8x8xf32>
    %327 = arith.truncf %326 : vector<8x8xf32> to vector<8x8xbf16>
    %328 = arith.truncf %313 : vector<8x16xf32> to vector<8x16xbf16>
    %cst_98 = arith.constant dense<0.000000e+00> : vector<8x16xf32>
    %329 = tpu.matmul %327, %328, %cst_98 {dimension_numbers = #tpu.dot_dimension_numbers<[1], [0], [0], [1], [0, 0, 1, 1], [], []>} : vector<8x8xbf16>, vector<8x16xbf16>, vector<8x16xf32> -> vector<8x16xf32>
    %330 = tpu.concatenate %310, %329 in 1 : vector<8x16xf32>, vector<8x16xf32> -> vector<8x32xf32>
    %331 = tpu.concatenate %90, %138, %186, %234, %282, %330 in 0 : vector<8x32xf32>, vector<8x32xf32>, vector<8x32xf32>, vector<8x32xf32>, vector<8x32xf32>, vector<8x32xf32> -> vector<48x32xf32>
    %332 = arith.truncf %331 : vector<48x32xf32> to vector<48x32xbf16>
    %c0_99 = arith.constant 0 : index
    %c0_100 = arith.constant 0 : index
    %c0_101 = arith.constant 0 : index
    %333 = vector.load %arg8[%c0_99, %c0_100, %c0_101] : memref<1x32x32xbf16, #tpu.memory_space<vmem>>, vector<1x32x32xbf16>
    %334 = vector.shape_cast %333 : vector<1x32x32xbf16> to vector<32x32xbf16>
    %cst_102 = arith.constant dense<0.000000e+00> : vector<48x32xf32>
    %335 = tpu.matmul %332, %334, %cst_102 {dimension_numbers = #tpu.dot_dimension_numbers<[1], [0], [0], [1], [0, 0, 1, 1], [], []>} : vector<48x32xbf16>, vector<32x32xbf16>, vector<48x32xf32> -> vector<48x32xf32>
    %c0_103 = arith.constant 0 : index
    %c0_104 = arith.constant 0 : index
    %c0_105 = arith.constant 0 : index
    %336 = vector.load %arg9[%c0_103, %c0_104, %c0_105] : memref<1x1x32xf32, #tpu.memory_space<vmem>>, vector<1x1x32xf32>
    %337 = vector.shape_cast %336 : vector<1x1x32xf32> to vector<1x32xf32>
    %338 = vector.broadcast %337 : vector<1x32xf32> to vector<48x32xf32>
    %339 = arith.addf %335, %338 : vector<48x32xf32>
    %340 = arith.addf %5, %339 : vector<48x32xf32>
    %c0_106 = arith.constant 0 : index
    %c0_107 = arith.constant 0 : index
    %c0_108 = arith.constant 0 : index
    %341 = vector.load %arg10[%c0_106, %c0_107, %c0_108] : memref<1x1x32xf32, #tpu.memory_space<vmem>>, vector<1x1x32xf32>
    %342 = vector.shape_cast %341 : vector<1x1x32xf32> to vector<1x32xf32>
    %c0_109 = arith.constant 0 : index
    %c0_110 = arith.constant 0 : index
    %c0_111 = arith.constant 0 : index
    %343 = vector.load %arg11[%c0_109, %c0_110, %c0_111] : memref<1x1x32xf32, #tpu.memory_space<vmem>>, vector<1x1x32xf32>
    %344 = vector.shape_cast %343 : vector<1x1x32xf32> to vector<1x32xf32>
    %cst_112 = arith.constant dense<0.000000e+00> : vector<48xf32>
    %345 = vector.multi_reduction <add>, %340, %cst_112 [1] : vector<48x32xf32> to vector<48xf32>
    %346 = vector.shape_cast %345 : vector<48xf32> to vector<48x1xf32>
    %cst_113 = arith.constant 3.200000e+01 : f32
    %347 = vector.broadcast %cst_113 : f32 to vector<48x1xf32>
    %348 = arith.divf %346, %347 : vector<48x1xf32>
    %349 = vector.broadcast %348 : vector<48x1xf32> to vector<48x32xf32>
    %350 = arith.subf %340, %349 : vector<48x32xf32>
    %351 = arith.mulf %350, %350 : vector<48x32xf32>
    %cst_114 = arith.constant dense<0.000000e+00> : vector<48xf32>
    %352 = vector.multi_reduction <add>, %351, %cst_114 [1] : vector<48x32xf32> to vector<48xf32>
    %353 = vector.shape_cast %352 : vector<48xf32> to vector<48x1xf32>
    %cst_115 = arith.constant 3.200000e+01 : f32
    %354 = vector.broadcast %cst_115 : f32 to vector<48x1xf32>
    %355 = arith.divf %353, %354 : vector<48x1xf32>
    %356 = vector.broadcast %348 : vector<48x1xf32> to vector<48x32xf32>
    %357 = arith.subf %340, %356 : vector<48x32xf32>
    %cst_116 = arith.constant 9.99999974E-6 : f32
    %358 = vector.broadcast %cst_116 : f32 to vector<48x1xf32>
    %359 = arith.addf %355, %358 : vector<48x1xf32>
    %360 = math.rsqrt %359 : vector<48x1xf32>
    %361 = vector.broadcast %360 : vector<48x1xf32> to vector<48x32xf32>
    %362 = arith.mulf %357, %361 : vector<48x32xf32>
    %363 = vector.broadcast %342 : vector<1x32xf32> to vector<48x32xf32>
    %364 = arith.mulf %362, %363 : vector<48x32xf32>
    %365 = vector.broadcast %344 : vector<1x32xf32> to vector<48x32xf32>
    %366 = arith.addf %364, %365 : vector<48x32xf32>
    %367 = arith.truncf %366 : vector<48x32xf32> to vector<48x32xbf16>
    %c0_117 = arith.constant 0 : index
    %c0_118 = arith.constant 0 : index
    %c0_119 = arith.constant 0 : index
    %368 = vector.load %arg12[%c0_117, %c0_118, %c0_119] : memref<1x32x64xbf16, #tpu.memory_space<vmem>>, vector<1x32x64xbf16>
    %369 = vector.shape_cast %368 : vector<1x32x64xbf16> to vector<32x64xbf16>
    %cst_120 = arith.constant dense<0.000000e+00> : vector<48x64xf32>
    %370 = tpu.matmul %367, %369, %cst_120 {dimension_numbers = #tpu.dot_dimension_numbers<[1], [0], [0], [1], [0, 0, 1, 1], [], []>} : vector<48x32xbf16>, vector<32x64xbf16>, vector<48x64xf32> -> vector<48x64xf32>
    %c0_121 = arith.constant 0 : index
    %c0_122 = arith.constant 0 : index
    %c0_123 = arith.constant 0 : index
    %371 = vector.load %arg13[%c0_121, %c0_122, %c0_123] : memref<1x1x64xf32, #tpu.memory_space<vmem>>, vector<1x1x64xf32>
    %372 = vector.shape_cast %371 : vector<1x1x64xf32> to vector<1x64xf32>
    %373 = vector.broadcast %372 : vector<1x64xf32> to vector<48x64xf32>
    %374 = arith.addf %370, %373 : vector<48x64xf32>
    %cst_124 = arith.constant 1.702000e+00 : f32
    %375 = vector.broadcast %cst_124 : f32 to vector<48x64xf32>
    %376 = arith.mulf %375, %374 : vector<48x64xf32>
    %377 = arith.negf %376 : vector<48x64xf32>
    %378 = math.exp %377 : vector<48x64xf32>
    %cst_125 = arith.constant 1.000000e+00 : f32
    %379 = vector.broadcast %cst_125 : f32 to vector<48x64xf32>
    %380 = arith.addf %379, %378 : vector<48x64xf32>
    %381 = arith.divf %379, %380 : vector<48x64xf32>
    %382 = arith.mulf %374, %381 : vector<48x64xf32>
    %383 = arith.truncf %382 : vector<48x64xf32> to vector<48x64xbf16>
    %c0_126 = arith.constant 0 : index
    %c0_127 = arith.constant 0 : index
    %c0_128 = arith.constant 0 : index
    %384 = vector.load %arg14[%c0_126, %c0_127, %c0_128] : memref<1x64x32xbf16, #tpu.memory_space<vmem>>, vector<1x64x32xbf16>
    %385 = vector.shape_cast %384 : vector<1x64x32xbf16> to vector<64x32xbf16>
    %cst_129 = arith.constant dense<0.000000e+00> : vector<48x32xf32>
    %386 = tpu.matmul %383, %385, %cst_129 {dimension_numbers = #tpu.dot_dimension_numbers<[1], [0], [0], [1], [0, 0, 1, 1], [], []>} : vector<48x64xbf16>, vector<64x32xbf16>, vector<48x32xf32> -> vector<48x32xf32>
    %c0_130 = arith.constant 0 : index
    %c0_131 = arith.constant 0 : index
    %c0_132 = arith.constant 0 : index
    %387 = vector.load %arg15[%c0_130, %c0_131, %c0_132] : memref<1x1x32xf32, #tpu.memory_space<vmem>>, vector<1x1x32xf32>
    %388 = vector.shape_cast %387 : vector<1x1x32xf32> to vector<1x32xf32>
    %389 = vector.broadcast %388 : vector<1x32xf32> to vector<48x32xf32>
    %390 = arith.addf %386, %389 : vector<48x32xf32>
    %391 = arith.addf %340, %390 : vector<48x32xf32>
    %392 = vector.shape_cast %391 : vector<48x32xf32> to vector<6x8x32xf32>
    %393 = arith.truncf %392 : vector<6x8x32xf32> to vector<6x8x32xbf16>
    %c0_133 = arith.constant 0 : index
    %c0_134 = arith.constant 0 : index
    %c0_135 = arith.constant 0 : index
    %394 = vector.load %arg16[%c0_133, %c0_134, %c0_135] : memref<6x8x32xbf16, #tpu.memory_space<vmem>>, vector<6x8x32xbf16>
    tpu.vector_store %arg16[%c0_133, %c0_134, %c0_135], %393 {strides = array<i32>} : memref<6x8x32xbf16, #tpu.memory_space<vmem>>, vector<6x8x32xbf16>,
    return
  }
  func.func @transform_0(%arg0: i32, %arg1: i32) -> (i32, i32, i32) {
    %c0_i32 = arith.constant 0 : i32
    %c0_i32_0 = arith.constant 0 : i32
    %c0_i32_1 = arith.constant 0 : i32
    return %arg0, %c0_i32, %c0_i32_0 : i32, i32, i32
  }
  func.func @transform_1(%arg0: i32, %arg1: i32) -> (i32, i32, i32) {
    %c0_i32 = arith.constant 0 : i32
    %c0_i32_0 = arith.constant 0 : i32
    %c0_i32_1 = arith.constant 0 : i32
    return %arg0, %c0_i32, %c0_i32_0 : i32, i32, i32
  }
  func.func @transform_2(%arg0: i32, %arg1: i32) -> (i32, i32, i32) {
    %c0_i32 = arith.constant 0 : i32
    %c0_i32_0 = arith.constant 0 : i32
    %c0_i32_1 = arith.constant 0 : i32
    return %arg1, %c0_i32, %c0_i32_0 : i32, i32, i32
  }
  func.func @transform_3(%arg0: i32, %arg1: i32) -> (i32, i32, i32) {
    %c0_i32 = arith.constant 0 : i32
    %c0_i32_0 = arith.constant 0 : i32
    %c0_i32_1 = arith.constant 0 : i32
    return %arg1, %c0_i32, %c0_i32_0 : i32, i32, i32
  }
  func.func @transform_4(%arg0: i32, %arg1: i32) -> (i32, i32, i32) {
    %c0_i32 = arith.constant 0 : i32
    %c0_i32_0 = arith.constant 0 : i32
    %c0_i32_1 = arith.constant 0 : i32
    return %arg1, %c0_i32, %c0_i32_0 : i32, i32, i32
  }
  func.func @transform_5(%arg0: i32, %arg1: i32) -> (i32, i32, i32) {
    %c0_i32 = arith.constant 0 : i32
    %c0_i32_0 = arith.constant 0 : i32
    %c0_i32_1 = arith.constant 0 : i32
    return %arg1, %c0_i32, %c0_i32_0 : i32, i32, i32
  }
  func.func @transform_6(%arg0: i32, %arg1: i32) -> (i32, i32, i32) {
    %c0_i32 = arith.constant 0 : i32
    %c0_i32_0 = arith.constant 0 : i32
    %c0_i32_1 = arith.constant 0 : i32
    return %arg1, %c0_i32, %c0_i32_0 : i32, i32, i32
  }
  func.func @transform_7(%arg0: i32, %arg1: i32) -> (i32, i32, i32) {
    %c0_i32 = arith.constant 0 : i32
    %c0_i32_0 = arith.constant 0 : i32
    %c0_i32_1 = arith.constant 0 : i32
    return %arg1, %c0_i32, %c0_i32_0 : i32, i32, i32
  }
  func.func @transform_8(%arg0: i32, %arg1: i32) -> (i32, i32, i32) {
    %c0_i32 = arith.constant 0 : i32
    %c0_i32_0 = arith.constant 0 : i32
    %c0_i32_1 = arith.constant 0 : i32
    return %arg1, %c0_i32, %c0_i32_0 : i32, i32, i32
  }
  func.func @transform_9(%arg0: i32, %arg1: i32) -> (i32, i32, i32) {
    %c0_i32 = arith.constant 0 : i32
    %c0_i32_0 = arith.constant 0 : i32
    %c0_i32_1 = arith.constant 0 : i32
    return %arg1, %c0_i32, %c0_i32_0 : i32, i32, i32
  }
  func.func @transform_10(%arg0: i32, %arg1: i32) -> (i32, i32, i32) {
    %c0_i32 = arith.constant 0 : i32
    %c0_i32_0 = arith.constant 0 : i32
    %c0_i32_1 = arith.constant 0 : i32
    return %arg1, %c0_i32, %c0_i32_0 : i32, i32, i32
  }
  func.func @transform_11(%arg0: i32, %arg1: i32) -> (i32, i32, i32) {
    %c0_i32 = arith.constant 0 : i32
    %c0_i32_0 = arith.constant 0 : i32
    %c0_i32_1 = arith.constant 0 : i32
    return %arg1, %c0_i32, %c0_i32_0 : i32, i32, i32
  }
  func.func @transform_12(%arg0: i32, %arg1: i32) -> (i32, i32, i32) {
    %c0_i32 = arith.constant 0 : i32
    %c0_i32_0 = arith.constant 0 : i32
    %c0_i32_1 = arith.constant 0 : i32
    return %arg1, %c0_i32, %c0_i32_0 : i32, i32, i32
  }
  func.func @transform_13(%arg0: i32, %arg1: i32) -> (i32, i32, i32) {
    %c0_i32 = arith.constant 0 : i32
    %c0_i32_0 = arith.constant 0 : i32
    %c0_i32_1 = arith.constant 0 : i32
    return %arg1, %c0_i32, %c0_i32_0 : i32, i32, i32
  }
  func.func @transform_14(%arg0: i32, %arg1: i32) -> (i32, i32, i32) {
    %c0_i32 = arith.constant 0 : i32
    %c0_i32_0 = arith.constant 0 : i32
    %c0_i32_1 = arith.constant 0 : i32
    return %arg0, %c0_i32, %c0_i32_0 : i32, i32, i32
  }
}

</mosaic_0001>

<llo_original>
// kernel: tpu_custom_call.1
$region0: #{tpu_custom_call.1}
  #allocation0 [shape = 'u32[]', space=smem, size = 0x4, offset = 0x4, fixed_abs, tag = 'smem constant byte address 0x4 - core index']
  #allocation1 [shape = 'u32[144,128]{1,0:T(1,128)}', space=vmem, size = 0x12000, scoped, tag = 'internal scratch']
  %s0 = inlined_call_operand.hbm [shape: bf16[6,8,32], index: 0, kind: input, shape index: {}]
  %s1 = inlined_call_operand.hbm [shape: f32[6,1,8], index: 1, kind: input, shape index: {}]
  %s2 = inlined_call_operand.vmem [shape: f32[2,1,32], index: 2, kind: input, shape index: {}]
  %s3 = inlined_call_operand.vmem [shape: f32[2,1,32], index: 3, kind: input, shape index: {}]
  %s4 = inlined_call_operand.vmem [shape: bf16[2,32,96], index: 4, kind: input, shape index: {}]
  %s5 = inlined_call_operand.vmem [shape: f32[2,1,96], index: 5, kind: input, shape index: {}]
  %s6 = inlined_call_operand.vmem [shape: bf16[2,32,32], index: 6, kind: input, shape index: {}]
  %s7 = inlined_call_operand.vmem [shape: f32[2,1,32], index: 7, kind: input, shape index: {}]
  %s8 = inlined_call_operand.vmem [shape: f32[2,1,32], index: 8, kind: input, shape index: {}]
  %s9 = inlined_call_operand.vmem [shape: f32[2,1,32], index: 9, kind: input, shape index: {}]
  %s10 = inlined_call_operand.vmem [shape: bf16[2,32,64], index: 10, kind: input, shape index: {}]
  %s11 = inlined_call_operand.hbm [shape: f32[2,1,64], index: 11, kind: input, shape index: {}]
  %s12 = inlined_call_operand.vmem [shape: bf16[2,64,32], index: 12, kind: input, shape index: {}]
  %s13 = inlined_call_operand.vmem [shape: f32[2,1,32], index: 13, kind: input, shape index: {}]
  %s14 = inlined_call_operand.hbm [shape: bf16[6,8,32], index: 14, kind: output, shape index: {}]
  %s15 = sld [smem:[#allocation0]]
  $region105: #{tpu_custom_call.1} parent=0
    _
  %s17 = ssub.s32 1, %s15
  %s18 = scalar_select 0, %s17, %s15
  $region1: #{tpu_custom_call.1} parent=0
    #allocation2 [shape = 'u8[12288]{0}', space=vmem, size = 0x3000, scoped, tag = 'input window, operand 0, single buffered']
    #allocation3 [shape = 's32[2]{0}', space=sflag, size = 0x8, scoped, tag = 'scoped memory for tpu_custom_call.1']
    #allocation4 [shape = 's32[2]{0}', space=sflag, size = 0x8, scoped, tag = 'scoped memory for tpu_custom_call.1']
    #allocation5 [shape = 'u8[3072]{0}', space=vmem, size = 0xc00, scoped, tag = 'input window, operand 1, single buffered']
    #allocation6 [shape = 's32[1]{0}', space=sflag, size = 0x4, scoped, tag = 'scoped memory for tpu_custom_call.1']
    #allocation7 [shape = 'u8[1024]{0}', space=vmem, size = 0x400, scoped, tag = 'input window, operand 11']
    #allocation8 [shape = 'u8[12288]{0}', space=vmem, size = 0x3000, scoped, tag = 'output window, operand 0, single buffered']
    %19 = vsyncpa [#allocation3], 0
    %20 = vsyncpa [#allocation6], 0
    %21 = vsyncpa [#allocation4], 0
    loop: start=0, step=1, limit=4
    $region2: #{tpu_custom_call.1} parent=1 // loop_pre_header
      _
    $region3: #{tpu_custom_call.1} parent=1 // loop_header
      %s23 = sphi 0, %s27
      %p24 = scmp.ge.s32.totalorder %s23, 4
      %s30 = sphi 0, %s42
      %s31 = sphi 0, %s38
      %s32 = sphi 0, %s30
      %s33 = sphi 0, %s31
      %s34 = sphi 0, %s32
      %s35 = sphi 0, %s33
      %s45 = sphi 0, %s47
      %s48 = sphi 0, %s45
      %s49 = sphi 0, %s48
      %s65 = sphi 0, %s49
      %s71 = sphi 0, %s73
      %s74 = sphi 0, %s71
      %s75 = sphi 0, %s74
      %s91 = sphi 0, %s75
      %s97 = sphi 0, %s99
      %s100 = sphi 0, %s97
      %s101 = sphi 0, %s100
      %s117 = sphi 0, %s101
      %s123 = sphi 0, %s125
      %s126 = sphi 0, %s123
      %s127 = sphi 0, %s126
      %s143 = sphi 0, %s127
      %s149 = sphi 0, %s151
      %s152 = sphi 0, %s149
      %s153 = sphi 0, %s152
      %s169 = sphi 0, %s153
      %s175 = sphi 0, %s177
      %s178 = sphi 0, %s175
      %s179 = sphi 0, %s178
      %s195 = sphi 0, %s179
      %s201 = sphi 0, %s203
      %s204 = sphi 0, %s201
      %s205 = sphi 0, %s204
      %s221 = sphi 0, %s205
      %s227 = sphi 0, %s229
      %s230 = sphi 0, %s227
      %s231 = sphi 0, %s230
      %s247 = sphi 0, %s231
      %s253 = sphi 0, %s255
      %s256 = sphi 0, %s253
      %s257 = sphi 0, %s256
      %s273 = sphi 0, %s257
      %s279 = sphi 0, %s281
      %s282 = sphi 0, %s279
      %s283 = sphi 0, %s282
      %s299 = sphi 0, %s283
      %s305 = sphi 0, %s307
      %s308 = sphi 0, %s305
      %s309 = sphi 0, %s308
      %s325 = sphi 0, %s309
      %s331 = sphi 0, %s333
      %s334 = sphi 0, %s331
      %s335 = sphi 0, %s334
      %s351 = sphi 0, %s335
      %s357 = sphi 0, %s359
      %s360 = sphi 0, %s357
      %s361 = sphi 0, %s360
      %s377 = sphi 0, %s361
      %s383 = sphi 0, %s385
      %s386 = sphi 0, %s383
      %s387 = sphi 0, %s386
      %s403 = sphi 0, %s387
      %s409 = sphi 0, %s411
      %s412 = sphi 0, %s409
      %s413 = sphi 0, %s412
      %s429 = sphi 0, %s413
    $region4: #{tpu_custom_call.1} parent=1 // loop_header_branch
      %26 = sbr.rel (%p24) target = $region8
    $region5: #{tpu_custom_call.1} parent=1 // loop_body
      %s28 = ssub.s32 %s23, 1
      %s29 = ssub.s32 %s23, 2
      %s36 = sadd.s32 1, %s31
      %p37 = scmp.ge.s32.totalorder %s36, 2
      %s38 = scalar_select %p37, 0, %s36
      %s39 = sadd.s32 1, %s30
      %s40 = scalar_select %p37, %s39, %s30
      %p41 = scmp.ge.s32.totalorder %s40, 1
      %s42 = scalar_select %p41, 0, %s40
      %s43 = ssub.s32 %s30, %s42
      %p44 = scmp.eq.s32.totalorder %s43, 0
      %s46 = sadd.s32 %s45, 1
      %s47 = scalar_select %p44, %s45, %s46
      %p50 = pneg %p44
      %p51 = scmp.eq.s32.totalorder %s23, 1
      %p52 = por %p50, %p51
      %p53 = scmp.ne.s32.totalorder %s45, %s48
      %p54 = scmp.eq.s32.totalorder %s23, 0
      %p55 = por %p53, %p54
      %p56 = scmp.ne.s32.totalorder %s45, %s48
      %p57 = scmp.eq.s32.totalorder %s28, 1
      %p58 = por %p56, %p57
      %p59 = scmp.ne.s32.totalorder %s48, %s49
      %p60 = scmp.eq.s32.totalorder %s28, 0
      %p61 = por %p59, %p60
      %p62 = scmp.ne.s32.totalorder %s48, %s49
      %p63 = scmp.eq.s32.totalorder %s29, 1
      %p64 = por %p62, %p63
      %p66 = scmp.ne.s32.totalorder %s49, %s65
      %p67 = scmp.eq.s32.totalorder %s29, 0
      %p68 = por %p66, %p67
      %s69 = ssub.s32 %s30, %s42
      %p70 = scmp.eq.s32.totalorder %s69, 0
      %s72 = sadd.s32 %s71, 1
      %s73 = scalar_select %p70, %s71, %s72
      %p76 = pneg %p70
      %p77 = scmp.eq.s32.totalorder %s23, 1
      %p78 = por %p76, %p77
      %p79 = scmp.ne.s32.totalorder %s71, %s74
      %p80 = scmp.eq.s32.totalorder %s23, 0
      %p81 = por %p79, %p80
      %p82 = scmp.ne.s32.totalorder %s71, %s74
      %p83 = scmp.eq.s32.totalorder %s28, 1
      %p84 = por %p82, %p83
      %p85 = scmp.ne.s32.totalorder %s74, %s75
      %p86 = scmp.eq.s32.totalorder %s28, 0
      %p87 = por %p85, %p86
      %p88 = scmp.ne.s32.totalorder %s74, %s75
      %p89 = scmp.eq.s32.totalorder %s29, 1
      %p90 = por %p88, %p89
      %p92 = scmp.ne.s32.totalorder %s75, %s91
      %p93 = scmp.eq.s32.totalorder %s29, 0
      %p94 = por %p92, %p93
      %s95 = ssub.s32 %s31, %s38
      %p96 = scmp.eq.s32.totalorder %s95, 0
      %s98 = sadd.s32 %s97, 1
      %s99 = scalar_select %p96, %s97, %s98
      %p102 = pneg %p96
      %p103 = scmp.eq.s32.totalorder %s23, 1
      %p104 = por %p102, %p103
      %p105 = scmp.ne.s32.totalorder %s97, %s100
      %p106 = scmp.eq.s32.totalorder %s23, 0
      %p107 = por %p105, %p106
      %p108 = scmp.ne.s32.totalorder %s97, %s100
      %p109 = scmp.eq.s32.totalorder %s28, 1
      %p110 = por %p108, %p109
      %p111 = scmp.ne.s32.totalorder %s100, %s101
      %p112 = scmp.eq.s32.totalorder %s28, 0
      %p113 = por %p111, %p112
      %p114 = scmp.ne.s32.totalorder %s100, %s101
      %p115 = scmp.eq.s32.totalorder %s29, 1
      %p116 = por %p114, %p115
      %p118 = scmp.ne.s32.totalorder %s101, %s117
      %p119 = scmp.eq.s32.totalorder %s29, 0
      %p120 = por %p118, %p119
      %s121 = ssub.s32 %s31, %s38
      %p122 = scmp.eq.s32.totalorder %s121, 0
      %s124 = sadd.s32 %s123, 1
      %s125 = scalar_select %p122, %s123, %s124
      %p128 = pneg %p122
      %p129 = scmp.eq.s32.totalorder %s23, 1
      %p130 = por %p128, %p129
      %p131 = scmp.ne.s32.totalorder %s123, %s126
      %p132 = scmp.eq.s32.totalorder %s23, 0
      %p133 = por %p131, %p132
      %p134 = scmp.ne.s32.totalorder %s123, %s126
      %p135 = scmp.eq.s32.totalorder %s28, 1
      %p136 = por %p134, %p135
      %p137 = scmp.ne.s32.totalorder %s126, %s127
      %p138 = scmp.eq.s32.totalorder %s28, 0
      %p139 = por %p137, %p138
      %p140 = scmp.ne.s32.totalorder %s126, %s127
      %p141 = scmp.eq.s32.totalorder %s29, 1
      %p142 = por %p140, %p141
      %p144 = scmp.ne.s32.totalorder %s127, %s143
      %p145 = scmp.eq.s32.totalorder %s29, 0
      %p146 = por %p144, %p145
      %s147 = ssub.s32 %s31, %s38
      %p148 = scmp.eq.s32.totalorder %s147, 0
      %s150 = sadd.s32 %s149, 1
      %s151 = scalar_select %p148, %s149, %s150
      %p154 = pneg %p148
      %p155 = scmp.eq.s32.totalorder %s23, 1
      %p156 = por %p154, %p155
      %p157 = scmp.ne.s32.totalorder %s149, %s152
      %p158 = scmp.eq.s32.totalorder %s23, 0
      %p159 = por %p157, %p158
      %p160 = scmp.ne.s32.totalorder %s149, %s152
      %p161 = scmp.eq.s32.totalorder %s28, 1
      %p162 = por %p160, %p161
      %p163 = scmp.ne.s32.totalorder %s152, %s153
      %p164 = scmp.eq.s32.totalorder %s28, 0
      %p165 = por %p163, %p164
      %p166 = scmp.ne.s32.totalorder %s152, %s153
      %p167 = scmp.eq.s32.totalorder %s29, 1
      %p168 = por %p166, %p167
      %p170 = scmp.ne.s32.totalorder %s153, %s169
      %p171 = scmp.eq.s32.totalorder %s29, 0
      %p172 = por %p170, %p171
      %s173 = ssub.s32 %s31, %s38
      %p174 = scmp.eq.s32.totalorder %s173, 0
      %s176 = sadd.s32 %s175, 1
      %s177 = scalar_select %p174, %s175, %s176
      %p180 = pneg %p174
      %p181 = scmp.eq.s32.totalorder %s23, 1
      %p182 = por %p180, %p181
      %p183 = scmp.ne.s32.totalorder %s175, %s178
      %p184 = scmp.eq.s32.totalorder %s23, 0
      %p185 = por %p183, %p184
      %p186 = scmp.ne.s32.totalorder %s175, %s178
      %p187 = scmp.eq.s32.totalorder %s28, 1
      %p188 = por %p186, %p187
      %p189 = scmp.ne.s32.totalorder %s178, %s179
      %p190 = scmp.eq.s32.totalorder %s28, 0
      %p191 = por %p189, %p190
      %p192 = scmp.ne.s32.totalorder %s178, %s179
      %p193 = scmp.eq.s32.totalorder %s29, 1
      %p194 = por %p192, %p193
      %p196 = scmp.ne.s32.totalorder %s179, %s195
      %p197 = scmp.eq.s32.totalorder %s29, 0
      %p198 = por %p196, %p197
      %s199 = ssub.s32 %s31, %s38
      %p200 = scmp.eq.s32.totalorder %s199, 0
      %s202 = sadd.s32 %s201, 1
      %s203 = scalar_select %p200, %s201, %s202
      %p206 = pneg %p200
      %p207 = scmp.eq.s32.totalorder %s23, 1
      %p208 = por %p206, %p207
      %p209 = scmp.ne.s32.totalorder %s201, %s204
      %p210 = scmp.eq.s32.totalorder %s23, 0
      %p211 = por %p209, %p210
      %p212 = scmp.ne.s32.totalorder %s201, %s204
      %p213 = scmp.eq.s32.totalorder %s28, 1
      %p214 = por %p212, %p213
      %p215 = scmp.ne.s32.totalorder %s204, %s205
      %p216 = scmp.eq.s32.totalorder %s28, 0
      %p217 = por %p215, %p216
      %p218 = scmp.ne.s32.totalorder %s204, %s205
      %p219 = scmp.eq.s32.totalorder %s29, 1
      %p220 = por %p218, %p219
      %p222 = scmp.ne.s32.totalorder %s205, %s221
      %p223 = scmp.eq.s32.totalorder %s29, 0
      %p224 = por %p222, %p223
      %s225 = ssub.s32 %s31, %s38
      %p226 = scmp.eq.s32.totalorder %s225, 0
      %s228 = sadd.s32 %s227, 1
      %s229 = scalar_select %p226, %s227, %s228
      %p232 = pneg %p226
      %p233 = scmp.eq.s32.totalorder %s23, 1
      %p234 = por %p232, %p233
      %p235 = scmp.ne.s32.totalorder %s227, %s230
      %p236 = scmp.eq.s32.totalorder %s23, 0
      %p237 = por %p235, %p236
      %p238 = scmp.ne.s32.totalorder %s227, %s230
      %p239 = scmp.eq.s32.totalorder %s28, 1
      %p240 = por %p238, %p239
      %p241 = scmp.ne.s32.totalorder %s230, %s231
      %p242 = scmp.eq.s32.totalorder %s28, 0
      %p243 = por %p241, %p242
      %p244 = scmp.ne.s32.totalorder %s230, %s231
      %p245 = scmp.eq.s32.totalorder %s29, 1
      %p246 = por %p244, %p245
      %p248 = scmp.ne.s32.totalorder %s231, %s247
      %p249 = scmp.eq.s32.totalorder %s29, 0
      %p250 = por %p248, %p249
      %s251 = ssub.s32 %s31, %s38
      %p252 = scmp.eq.s32.totalorder %s251, 0
      %s254 = sadd.s32 %s253, 1
      %s255 = scalar_select %p252, %s253, %s254
      %p258 = pneg %p252
      %p259 = scmp.eq.s32.totalorder %s23, 1
      %p260 = por %p258, %p259
      %p261 = scmp.ne.s32.totalorder %s253, %s256
      %p262 = scmp.eq.s32.totalorder %s23, 0
      %p263 = por %p261, %p262
      %p264 = scmp.ne.s32.totalorder %s253, %s256
      %p265 = scmp.eq.s32.totalorder %s28, 1
      %p266 = por %p264, %p265
      %p267 = scmp.ne.s32.totalorder %s256, %s257
      %p268 = scmp.eq.s32.totalorder %s28, 0
      %p269 = por %p267, %p268
      %p270 = scmp.ne.s32.totalorder %s256, %s257
      %p271 = scmp.eq.s32.totalorder %s29, 1
      %p272 = por %p270, %p271
      %p274 = scmp.ne.s32.totalorder %s257, %s273
      %p275 = scmp.eq.s32.totalorder %s29, 0
      %p276 = por %p274, %p275
      %s277 = ssub.s32 %s31, %s38
      %p278 = scmp.eq.s32.totalorder %s277, 0
      %s280 = sadd.s32 %s279, 1
      %s281 = scalar_select %p278, %s279, %s280
      %p284 = pneg %p278
      %p285 = scmp.eq.s32.totalorder %s23, 1
      %p286 = por %p284, %p285
      %p287 = scmp.ne.s32.totalorder %s279, %s282
      %p288 = scmp.eq.s32.totalorder %s23, 0
      %p289 = por %p287, %p288
      %p290 = scmp.ne.s32.totalorder %s279, %s282
      %p291 = scmp.eq.s32.totalorder %s28, 1
      %p292 = por %p290, %p291
      %p293 = scmp.ne.s32.totalorder %s282, %s283
      %p294 = scmp.eq.s32.totalorder %s28, 0
      %p295 = por %p293, %p294
      %p296 = scmp.ne.s32.totalorder %s282, %s283
      %p297 = scmp.eq.s32.totalorder %s29, 1
      %p298 = por %p296, %p297
      %p300 = scmp.ne.s32.totalorder %s283, %s299
      %p301 = scmp.eq.s32.totalorder %s29, 0
      %p302 = por %p300, %p301
      %s303 = ssub.s32 %s31, %s38
      %p304 = scmp.eq.s32.totalorder %s303, 0
      %s306 = sadd.s32 %s305, 1
      %s307 = scalar_select %p304, %s305, %s306
      %p310 = pneg %p304
      %p311 = scmp.eq.s32.totalorder %s23, 1
      %p312 = por %p310, %p311
      %p313 = scmp.ne.s32.totalorder %s305, %s308
      %p314 = scmp.eq.s32.totalorder %s23, 0
      %p315 = por %p313, %p314
      %p316 = scmp.ne.s32.totalorder %s305, %s308
      %p317 = scmp.eq.s32.totalorder %s28, 1
      %p318 = por %p316, %p317
      %p319 = scmp.ne.s32.totalorder %s308, %s309
      %p320 = scmp.eq.s32.totalorder %s28, 0
      %p321 = por %p319, %p320
      %p322 = scmp.ne.s32.totalorder %s308, %s309
      %p323 = scmp.eq.s32.totalorder %s29, 1
      %p324 = por %p322, %p323
      %p326 = scmp.ne.s32.totalorder %s309, %s325
      %p327 = scmp.eq.s32.totalorder %s29, 0
      %p328 = por %p326, %p327
      %s329 = ssub.s32 %s31, %s38
      %p330 = scmp.eq.s32.totalorder %s329, 0
      %s332 = sadd.s32 %s331, 1
      %s333 = scalar_select %p330, %s331, %s332
      %p336 = pneg %p330
      %p337 = scmp.eq.s32.totalorder %s23, 1
      %p338 = por %p336, %p337
      %p339 = scmp.ne.s32.totalorder %s331, %s334
      %p340 = scmp.eq.s32.totalorder %s23, 0
      %p341 = por %p339, %p340
      %p342 = scmp.ne.s32.totalorder %s331, %s334
      %p343 = scmp.eq.s32.totalorder %s28, 1
      %p344 = por %p342, %p343
      %p345 = scmp.ne.s32.totalorder %s334, %s335
      %p346 = scmp.eq.s32.totalorder %s28, 0
      %p347 = por %p345, %p346
      %p348 = scmp.ne.s32.totalorder %s334, %s335
      %p349 = scmp.eq.s32.totalorder %s29, 1
      %p350 = por %p348, %p349
      %p352 = scmp.ne.s32.totalorder %s335, %s351
      %p353 = scmp.eq.s32.totalorder %s29, 0
      %p354 = por %p352, %p353
      %s355 = ssub.s32 %s31, %s38
      %p356 = scmp.eq.s32.totalorder %s355, 0
      %s358 = sadd.s32 %s357, 1
      %s359 = scalar_select %p356, %s357, %s358
      %p362 = pneg %p356
      %p363 = scmp.eq.s32.totalorder %s23, 1
      %p364 = por %p362, %p363
      %p365 = scmp.ne.s32.totalorder %s357, %s360
      %p366 = scmp.eq.s32.totalorder %s23, 0
      %p367 = por %p365, %p366
      %p368 = scmp.ne.s32.totalorder %s357, %s360
      %p369 = scmp.eq.s32.totalorder %s28, 1
      %p370 = por %p368, %p369
      %p371 = scmp.ne.s32.totalorder %s360, %s361
      %p372 = scmp.eq.s32.totalorder %s28, 0
      %p373 = por %p371, %p372
      %p374 = scmp.ne.s32.totalorder %s360, %s361
      %p375 = scmp.eq.s32.totalorder %s29, 1
      %p376 = por %p374, %p375
      %p378 = scmp.ne.s32.totalorder %s361, %s377
      %p379 = scmp.eq.s32.totalorder %s29, 0
      %p380 = por %p378, %p379
      %s381 = ssub.s32 %s31, %s38
      %p382 = scmp.eq.s32.totalorder %s381, 0
      %s384 = sadd.s32 %s383, 1
      %s385 = scalar_select %p382, %s383, %s384
      %p388 = pneg %p382
      %p389 = scmp.eq.s32.totalorder %s23, 1
      %p390 = por %p388, %p389
      %p391 = scmp.ne.s32.totalorder %s383, %s386
      %p392 = scmp.eq.s32.totalorder %s23, 0
      %p393 = por %p391, %p392
      %p394 = scmp.ne.s32.totalorder %s383, %s386
      %p395 = scmp.eq.s32.totalorder %s28, 1
      %p396 = por %p394, %p395
      %p397 = scmp.ne.s32.totalorder %s386, %s387
      %p398 = scmp.eq.s32.totalorder %s28, 0
      %p399 = por %p397, %p398
      %p400 = scmp.ne.s32.totalorder %s386, %s387
      %p401 = scmp.eq.s32.totalorder %s29, 1
      %p402 = por %p400, %p401
      %p404 = scmp.ne.s32.totalorder %s387, %s403
      %p405 = scmp.eq.s32.totalorder %s29, 0
      %p406 = por %p404, %p405
      %s407 = ssub.s32 %s30, %s42
      %p408 = scmp.eq.s32.totalorder %s407, 0
      %s410 = sadd.s32 %s409, 1
      %s411 = scalar_select %p408, %s409, %s410
      %p414 = pneg %p408
      %p415 = scmp.eq.s32.totalorder %s23, 1
      %p416 = por %p414, %p415
      %p417 = scmp.ne.s32.totalorder %s409, %s412
      %p418 = scmp.eq.s32.totalorder %s23, 0
      %p419 = por %p417, %p418
      %p420 = scmp.ne.s32.totalorder %s409, %s412
      %p421 = scmp.eq.s32.totalorder %s28, 1
      %p422 = por %p420, %p421
      %p423 = scmp.ne.s32.totalorder %s412, %s413
      %p424 = scmp.eq.s32.totalorder %s28, 0
      %p425 = por %p423, %p424
      %p426 = scmp.ne.s32.totalorder %s412, %s413
      %p427 = scmp.eq.s32.totalorder %s29, 1
      %p428 = por %p426, %p427
      %p430 = scmp.ne.s32.totalorder %s413, %s429
      %p431 = scmp.eq.s32.totalorder %s29, 0
      %p432 = por %p430, %p431
      %p433 = scmp.le.s32.totalorder 1, %s23
      %p434 = scmp.lt.s32.totalorder %s23, 3
      %p435 = pnand %p433, %p434
      %p436 = pneg %p435
      // Predicated region
      $region9: #{tpu_custom_call.1} parent=5 // pred_check
        _
      $region10: #{tpu_custom_call.1} parent=5 // pred_check_branch
        %438 = sbr.rel (%p435) target = $region12
      $region11: #{tpu_custom_call.1} parent=5 // pred_region
        %s439 = ssub.s32 %s23, 1
        // Predicated region
        $region13: #{tpu_custom_call.1} parent=11 // pred_check
          %p440 = pneg %p61
        $region14: #{tpu_custom_call.1} parent=11 // pred_check_branch
          %442 = sbr.rel (%p440) target = $region16
        $region15: #{tpu_custom_call.1} parent=11 // pred_region
          %s443 = smul.u32 6, %s32
          %s445 = ssub.s32 384, 384
          %446 = vsyncadd [#allocation3], %s445
          %s447 = smul.addr %s443, 64
          %s448 = scalar_lea.hbm %s0, %s447
          %s449 = sshll.u32 [#allocation2], 4
          %s450 = int_to_ptr.vmem [resolvable:$true] %s449
          %455 = dma.hbm_to_vmem [thread:$0]  %s448, 384, %s450, [#allocation3], 64, 64, 4
        $region16: #{tpu_custom_call.1} parent=11 // pred_fallthru
          _
        // Predicated region
        $region17: #{tpu_custom_call.1} parent=11 // pred_check
          %p456 = pneg %p87
        $region18: #{tpu_custom_call.1} parent=11 // pred_check_branch
          %458 = sbr.rel (%p456) target = $region20
        $region19: #{tpu_custom_call.1} parent=11 // pred_region
          %s459 = smul.u32 6, %s32
          %s461 = ssub.s32 96, 96
          %462 = vsyncadd [#allocation6], %s461
          %s463 = smul.addr %s459, 16
          %s464 = scalar_lea.hbm %s1, %s463
          %s465 = sshll.u32 [#allocation5], 4
          %s466 = int_to_ptr.vmem [resolvable:$true] %s465
          %471 = dma.hbm_to_vmem [thread:$0]  %s464, 96, %s466, [#allocation6], 16, 16, 1
        $region20: #{tpu_custom_call.1} parent=11 // pred_fallthru
          _
      $region12: #{tpu_custom_call.1} parent=5 // pred_fallthru
        _
      %p472 = scmp.lt.s32.totalorder %s23, 2
      // Predicated region
      $region21: #{tpu_custom_call.1} parent=5 // pred_check
        %p473 = pneg %p472
      $region22: #{tpu_custom_call.1} parent=5 // pred_check_branch
        %475 = sbr.rel (%p473) target = $region24
      $region23: #{tpu_custom_call.1} parent=5 // pred_region
        // Predicated region
        $region25: #{tpu_custom_call.1} parent=23 // pred_check
          %p476 = pneg %p107
        $region26: #{tpu_custom_call.1} parent=23 // pred_check_branch
          %478 = sbr.rel (%p476) target = $region28
        $region27: #{tpu_custom_call.1} parent=23 // pred_region
          %p479 = scmp.lt.s32.totalorder %s31, 1
          %s480 = scalar_select %p479, %s31, 1
          %s481 = scalar_lea.vmem %s2, %s480
        $region28: #{tpu_custom_call.1} parent=23 // pred_fallthru
          _
        // Predicated region
        $region29: #{tpu_custom_call.1} parent=23 // pred_check
          %p482 = pneg %p133
        $region30: #{tpu_custom_call.1} parent=23 // pred_check_branch
          %484 = sbr.rel (%p482) target = $region32
        $region31: #{tpu_custom_call.1} parent=23 // pred_region
          %p485 = scmp.lt.s32.totalorder %s31, 1
          %s486 = scalar_select %p485, %s31, 1
          %s487 = scalar_lea.vmem %s3, %s486
        $region32: #{tpu_custom_call.1} parent=23 // pred_fallthru
          _
        // Predicated region
        $region33: #{tpu_custom_call.1} parent=23 // pred_check
          %p488 = pneg %p159
        $region34: #{tpu_custom_call.1} parent=23 // pred_check_branch
          %490 = sbr.rel (%p488) target = $region36
        $region35: #{tpu_custom_call.1} parent=23 // pred_region
          %p491 = scmp.lt.s32.totalorder %s31, 1
          %s492 = scalar_select %p491, %s31, 1
          %s493 = smul.addr %s492, 4
          %s494 = smul.addr %s493, 4
          %s495 = scalar_lea.vmem %s4, %s494
        $region36: #{tpu_custom_call.1} parent=23 // pred_fallthru
          _
        // Predicated region
        $region37: #{tpu_custom_call.1} parent=23 // pred_check
          %p496 = pneg %p185
        $region38: #{tpu_custom_call.1} parent=23 // pred_check_branch
          %498 = sbr.rel (%p496) target = $region40
        $region39: #{tpu_custom_call.1} parent=23 // pred_region
          %p499 = scmp.lt.s32.totalorder %s31, 1
          %s500 = scalar_select %p499, %s31, 1
          %s501 = scalar_lea.vmem %s5, %s500
        $region40: #{tpu_custom_call.1} parent=23 // pred_fallthru
          _
        // Predicated region
        $region41: #{tpu_custom_call.1} parent=23 // pred_check
          %p502 = pneg %p211
        $region42: #{tpu_custom_call.1} parent=23 // pred_check_branch
          %504 = sbr.rel (%p502) target = $region44
        $region43: #{tpu_custom_call.1} parent=23 // pred_region
          %p505 = scmp.lt.s32.totalorder %s31, 1
          %s506 = scalar_select %p505, %s31, 1
          %s507 = smul.addr %s506, 4
          %s508 = smul.addr %s507, 4
          %s509 = scalar_lea.vmem %s6, %s508
        $region44: #{tpu_custom_call.1} parent=23 // pred_fallthru
          _
        // Predicated region
        $region45: #{tpu_custom_call.1} parent=23 // pred_check
          %p510 = pneg %p237
        $region46: #{tpu_custom_call.1} parent=23 // pred_check_branch
          %512 = sbr.rel (%p510) target = $region48
        $region47: #{tpu_custom_call.1} parent=23 // pred_region
          %p513 = scmp.lt.s32.totalorder %s31, 1
          %s514 = scalar_select %p513, %s31, 1
          %s515 = scalar_lea.vmem %s7, %s514
        $region48: #{tpu_custom_call.1} parent=23 // pred_fallthru
          _
        // Predicated region
        $region49: #{tpu_custom_call.1} parent=23 // pred_check
          %p516 = pneg %p263
        $region50: #{tpu_custom_call.1} parent=23 // pred_check_branch
          %518 = sbr.rel (%p516) target = $region52
        $region51: #{tpu_custom_call.1} parent=23 // pred_region
          %p519 = scmp.lt.s32.totalorder %s31, 1
          %s520 = scalar_select %p519, %s31, 1
          %s521 = scalar_lea.vmem %s8, %s520
        $region52: #{tpu_custom_call.1} parent=23 // pred_fallthru
          _
        // Predicated region
        $region53: #{tpu_custom_call.1} parent=23 // pred_check
          %p522 = pneg %p289
        $region54: #{tpu_custom_call.1} parent=23 // pred_check_branch
          %524 = sbr.rel (%p522) target = $region56
        $region55: #{tpu_custom_call.1} parent=23 // pred_region
          %p525 = scmp.lt.s32.totalorder %s31, 1
          %s526 = scalar_select %p525, %s31, 1
          %s527 = scalar_lea.vmem %s9, %s526
        $region56: #{tpu_custom_call.1} parent=23 // pred_fallthru
          _
        // Predicated region
        $region57: #{tpu_custom_call.1} parent=23 // pred_check
          %p528 = pneg %p315
        $region58: #{tpu_custom_call.1} parent=23 // pred_check_branch
          %530 = sbr.rel (%p528) target = $region60
        $region59: #{tpu_custom_call.1} parent=23 // pred_region
          %p531 = scmp.lt.s32.totalorder %s31, 1
          %s532 = scalar_select %p531, %s31, 1
          %s533 = smul.addr %s532, 4
          %s534 = smul.addr %s533, 4
          %s535 = scalar_lea.vmem %s10, %s534
        $region60: #{tpu_custom_call.1} parent=23 // pred_fallthru
          _
        // Predicated region
        $region61: #{tpu_custom_call.1} parent=23 // pred_check
          %p536 = pneg %p341
        $region62: #{tpu_custom_call.1} parent=23 // pred_check_branch
          %538 = sbr.rel (%p536) target = $region64
        $region63: #{tpu_custom_call.1} parent=23 // pred_region
          %s539 = sand.u32 %s23, 1
          %s540 = scalar_lea.sflag [#allocation3], %s539
          %s541 = sand.u32 %s331, 1
          %s542 = scalar_lea.vmem [#allocation7], %s541
          %s544 = ssub.s32 16, 16
          %545 = vsyncadd %s540, %s544
          %s546 = smul.addr %s31, 16
          %s547 = scalar_lea.hbm %s11, %s546
          %s549 = sshll.u32 %s542, 4
          %s550 = int_to_ptr.vmem [resolvable:$true] %s549
          %552 = dma.hbm_to_vmem [thread:$0]  %s547, 16, %s550, %s540
        $region64: #{tpu_custom_call.1} parent=23 // pred_fallthru
          _
        // Predicated region
        $region65: #{tpu_custom_call.1} parent=23 // pred_check
          %p553 = pneg %p367
        $region66: #{tpu_custom_call.1} parent=23 // pred_check_branch
          %555 = sbr.rel (%p553) target = $region68
        $region67: #{tpu_custom_call.1} parent=23 // pred_region
          %p556 = scmp.lt.s32.totalorder %s31, 1
          %s557 = scalar_select %p556, %s31, 1
          %s558 = smul.addr %s557, 8
          %s559 = smul.addr %s558, 4
          %s560 = scalar_lea.vmem %s12, %s559
        $region68: #{tpu_custom_call.1} parent=23 // pred_fallthru
          _
        // Predicated region
        $region69: #{tpu_custom_call.1} parent=23 // pred_check
          %p561 = pneg %p393
        $region70: #{tpu_custom_call.1} parent=23 // pred_check_branch
          %563 = sbr.rel (%p561) target = $region72
        $region71: #{tpu_custom_call.1} parent=23 // pred_region
          %p564 = scmp.lt.s32.totalorder %s31, 1
          %s565 = scalar_select %p564, %s31, 1
          %s566 = scalar_lea.vmem %s13, %s565
        $region72: #{tpu_custom_call.1} parent=23 // pred_fallthru
          _
      $region24: #{tpu_custom_call.1} parent=5 // pred_fallthru
        _
      %p567 = scmp.le.s32.totalorder 1, %s23
      %p568 = scmp.lt.s32.totalorder %s23, 3
      %p569 = pnand %p567, %p568
      %p570 = pneg %p569
      // Predicated region
      $region73: #{tpu_custom_call.1} parent=5 // pred_check
        _
      $region74: #{tpu_custom_call.1} parent=5 // pred_check_branch
        %572 = sbr.rel (%p569) target = $region76
      $region75: #{tpu_custom_call.1} parent=5 // pred_region
        %s573 = ssub.s32 %s23, 1
        // Predicated region
        $region77: #{tpu_custom_call.1} parent=75 // pred_check
          %p574 = pneg %p61
        $region78: #{tpu_custom_call.1} parent=75 // pred_check_branch
          %576 = sbr.rel (%p574) target = $region80
        $region79: #{tpu_custom_call.1} parent=75 // pred_region
          %577 = dma.done [#allocation3], 384
        $region80: #{tpu_custom_call.1} parent=75 // pred_fallthru
          _
        // Predicated region
        $region81: #{tpu_custom_call.1} parent=75 // pred_check
          %p578 = pneg %p87
        $region82: #{tpu_custom_call.1} parent=75 // pred_check_branch
          %580 = sbr.rel (%p578) target = $region84
        $region83: #{tpu_custom_call.1} parent=75 // pred_region
          %581 = dma.done [#allocation6], 96
        $region84: #{tpu_custom_call.1} parent=75 // pred_fallthru
          _
        %s582 = sand.u32 %s28, 1
        %s583 = scalar_lea.sflag [#allocation3], %s582
        %s584 = sand.u32 %s334, 1
        %s585 = scalar_lea.vmem [#allocation7], %s584
        // Predicated region
        $region85: #{tpu_custom_call.1} parent=75 // pred_check
          %p586 = pneg %p347
        $region86: #{tpu_custom_call.1} parent=75 // pred_check_branch
          %588 = sbr.rel (%p586) target = $region88
        $region87: #{tpu_custom_call.1} parent=75 // pred_region
          %589 = dma.done %s583, 16
        $region88: #{tpu_custom_call.1} parent=75 // pred_fallthru
          _
        %p590 = pneg %p61
        %p591 = pneg %p58
        %p592 = pneg %p87
        %p593 = pneg %p84
        %p594 = scmp.lt.s32.totalorder %s33, 1
        %s595 = scalar_select %p594, %s33, 1
        %s596 = scalar_lea.vmem %s2, %s595
        %p597 = pneg %p113
        %p598 = pneg %p110
        %p599 = scmp.lt.s32.totalorder %s33, 1
        %s600 = scalar_select %p599, %s33, 1
        %s601 = scalar_lea.vmem %s3, %s600
        %p602 = pneg %p139
        %p603 = pneg %p136
        %p604 = scmp.lt.s32.totalorder %s33, 1
        %s605 = scalar_select %p604, %s33, 1
        %s606 = smul.addr %s605, 4
        %s607 = smul.addr %s606, 4
        %s608 = scalar_lea.vmem %s4, %s607
        %p609 = pneg %p165
        %p610 = pneg %p162
        %p611 = scmp.lt.s32.totalorder %s33, 1
        %s612 = scalar_select %p611, %s33, 1
        %s613 = scalar_lea.vmem %s5, %s612
        %p614 = pneg %p191
        %p615 = pneg %p188
        %p616 = scmp.lt.s32.totalorder %s33, 1
        %s617 = scalar_select %p616, %s33, 1
        %s618 = smul.addr %s617, 4
        %s619 = smul.addr %s618, 4
        %s620 = scalar_lea.vmem %s6, %s619
        %p621 = pneg %p217
        %p622 = pneg %p214
        %p623 = scmp.lt.s32.totalorder %s33, 1
        %s624 = scalar_select %p623, %s33, 1
        %s625 = scalar_lea.vmem %s7, %s624
        %p626 = pneg %p243
        %p627 = pneg %p240
        %p628 = scmp.lt.s32.totalorder %s33, 1
        %s629 = scalar_select %p628, %s33, 1
        %s630 = scalar_lea.vmem %s8, %s629
        %p631 = pneg %p269
        %p632 = pneg %p266
        %p633 = scmp.lt.s32.totalorder %s33, 1
        %s634 = scalar_select %p633, %s33, 1
        %s635 = scalar_lea.vmem %s9, %s634
        %p636 = pneg %p295
        %p637 = pneg %p292
        %p638 = scmp.lt.s32.totalorder %s33, 1
        %s639 = scalar_select %p638, %s33, 1
        %s640 = smul.addr %s639, 4
        %s641 = smul.addr %s640, 4
        %s642 = scalar_lea.vmem %s10, %s641
        %p643 = pneg %p321
        %p644 = pneg %p318
        %s645 = sand.u32 %s28, 1
        %s646 = scalar_lea.sflag [#allocation3], %s645
        %s647 = sand.u32 %s334, 1
        %s648 = scalar_lea.vmem [#allocation7], %s647
        %p649 = pneg %p347
        %p650 = pneg %p344
        %p651 = scmp.lt.s32.totalorder %s33, 1
        %s652 = scalar_select %p651, %s33, 1
        %s653 = smul.addr %s652, 8
        %s654 = smul.addr %s653, 4
        %s655 = scalar_lea.vmem %s12, %s654
        %p656 = pneg %p373
        %p657 = pneg %p370
        %p658 = scmp.lt.s32.totalorder %s33, 1
        %s659 = scalar_select %p658, %s33, 1
        %s660 = scalar_lea.vmem %s13, %s659
        %p661 = pneg %p399
        %p662 = pneg %p396
        %p663 = pneg %p425
        %p664 = pneg %p422
        %s665 = smul.u32 6, %s32
        %s666 = smul.u32 6, %s32
        %p667 = scmp.lt.s32.totalorder %s33, 1
        %s668 = scalar_select %p667, %s33, 1
        %s669 = scalar_lea.vmem %s2, %s668
        %p670 = scmp.lt.s32.totalorder %s33, 1
        %s671 = scalar_select %p670, %s33, 1
        %s672 = scalar_lea.vmem %s3, %s671
        %p673 = scmp.lt.s32.totalorder %s33, 1
        %s674 = scalar_select %p673, %s33, 1
        %s675 = smul.addr %s674, 4
        %s676 = smul.addr %s675, 4
        %s677 = scalar_lea.vmem %s4, %s676
        %p678 = scmp.lt.s32.totalorder %s33, 1
        %s679 = scalar_select %p678, %s33, 1
        %s680 = scalar_lea.vmem %s5, %s679
        %p681 = scmp.lt.s32.totalorder %s33, 1
        %s682 = scalar_select %p681, %s33, 1
        %s683 = smul.addr %s682, 4
        %s684 = smul.addr %s683, 4
        %s685 = scalar_lea.vmem %s6, %s684
        %p686 = scmp.lt.s32.totalorder %s33, 1
        %s687 = scalar_select %p686, %s33, 1
        %s688 = scalar_lea.vmem %s7, %s687
        %p689 = scmp.lt.s32.totalorder %s33, 1
        %s690 = scalar_select %p689, %s33, 1
        %s691 = scalar_lea.vmem %s8, %s690
        %p692 = scmp.lt.s32.totalorder %s33, 1
        %s693 = scalar_select %p692, %s33, 1
        %s694 = scalar_lea.vmem %s9, %s693
        %p695 = scmp.lt.s32.totalorder %s33, 1
        %s696 = scalar_select %p695, %s33, 1
        %s697 = smul.addr %s696, 4
        %s698 = smul.addr %s697, 4
        %s699 = scalar_lea.vmem %s10, %s698
        %p700 = scmp.lt.s32.totalorder %s33, 1
        %s701 = scalar_select %p700, %s33, 1
        %s702 = smul.addr %s701, 8
        %s703 = smul.addr %s702, 4
        %s704 = scalar_lea.vmem %s12, %s703
        %p705 = scmp.lt.s32.totalorder %s33, 1
        %s706 = scalar_select %p705, %s33, 1
        %s707 = scalar_lea.vmem %s13, %s706
        %s708 = smul.u32 6, %s32
        %p710 = scmp.eq.s32.totalorder %s33, 0
        // Predicated region
        $region89: #{tpu_custom_call.1} parent=75 // pred_check
          %p711 = pneg %p710
        $region90: #{tpu_custom_call.1} parent=75 // pred_check_branch
          %713 = sbr.rel (%p711) target = $region92
        $region91: #{tpu_custom_call.1} parent=75 // pred_region
          %v714 = vld [vmem:[#allocation2] sm:$0xf]
          %v715 = vld [vmem:[#allocation2 + $0x4] sm:$0xf]
          %v716 = vld [vmem:[#allocation2 + $0x8] sm:$0xf]
          %v717 = vld [vmem:[#allocation2 + $0xc] sm:$0xf]
          %v718 = vld [vmem:[#allocation2 + $0x10] sm:$0xf]
          %v719 = vld [vmem:[#allocation2 + $0x14] sm:$0xf]
          %vm720 = vcmask 257024
          %721 = vst.msk [vmem:[#allocation8] sm:$0xf] %vm720, %v714
          %722 = vst.msk [vmem:[#allocation8 + $0x4] sm:$0xf] %vm720, %v715
          %723 = vst.msk [vmem:[#allocation8 + $0x8] sm:$0xf] %vm720, %v716
          %724 = vst.msk [vmem:[#allocation8 + $0xc] sm:$0xf] %vm720, %v717
          %725 = vst.msk [vmem:[#allocation8 + $0x10] sm:$0xf] %vm720, %v718
          %726 = vst.msk [vmem:[#allocation8 + $0x14] sm:$0xf] %vm720, %v719
        $region92: #{tpu_custom_call.1} parent=75 // pred_fallthru
          _
        %v727 = vld [vmem:[#allocation8] sm:$0xf]
        %v728 = vld [vmem:[#allocation8 + $0x4] sm:$0xf]
        %v729 = vld [vmem:[#allocation8 + $0x8] sm:$0xf]
        %v730 = vld [vmem:[#allocation8 + $0xc] sm:$0xf]
        %v731 = vld [vmem:[#allocation8 + $0x10] sm:$0xf]
        %v732 = vld [vmem:[#allocation8 + $0x14] sm:$0xf]
        %v733 = vunpack.c.l.bf16 %v727
        %v734 = vunpack.c.l.bf16 %v728
        %v735 = vunpack.c.l.bf16 %v729
        %v736 = vunpack.c.l.bf16 %v730
        %v737 = vunpack.c.l.bf16 %v731
        %v738 = vunpack.c.l.bf16 %v732
        %v739 = vld [vmem:[%s669] sm:$0x1]
        %v740 = vld [vmem:[%s672] sm:$0x1]
        %vm741 = vcmask 261120
        %v742 = vsel %vm741, %v733, 0.0
        %743 = vadd.xlane.f32.xlu0 %v742
        %v744 = vpop.xlane.xlu0 %743
        %v745 = vsel %vm741, %v734, 0.0
        %746 = vadd.xlane.f32.xlu0 %v745
        %v747 = vpop.xlane.xlu0 %746
        %v748 = vsel %vm741, %v735, 0.0
        %749 = vadd.xlane.f32.xlu0 %v748
        %v750 = vpop.xlane.xlu0 %749
        %v751 = vsel %vm741, %v736, 0.0
        %752 = vadd.xlane.f32.xlu0 %v751
        %v753 = vpop.xlane.xlu0 %752
        %v754 = vsel %vm741, %v737, 0.0
        %755 = vadd.xlane.f32.xlu0 %v754
        %v756 = vpop.xlane.xlu0 %755
        %v757 = vsel %vm741, %v738, 0.0
        %758 = vadd.xlane.f32.xlu0 %v757
        %v759 = vpop.xlane.xlu0 %758
        %v760 = vrcp.pop 32.0
        %v761 = vmul.f32 %v744, %v760
        %v762 = vmul.f32 %v747, %v760
        %v763 = vmul.f32 %v750, %v760
        %v764 = vmul.f32 %v753, %v760
        %v765 = vmul.f32 %v756, %v760
        %v766 = vmul.f32 %v759, %v760
        %v767 = vsub.f32 %v733, %v761
        %v768 = vsub.f32 %v734, %v762
        %v769 = vsub.f32 %v735, %v763
        %v770 = vsub.f32 %v736, %v764
        %v771 = vsub.f32 %v737, %v765
        %v772 = vsub.f32 %v738, %v766
        %v773 = vmul.f32 %v767, %v767
        %v774 = vmul.f32 %v768, %v768
        %v775 = vmul.f32 %v769, %v769
        %v776 = vmul.f32 %v770, %v770
        %v777 = vmul.f32 %v771, %v771
        %v778 = vmul.f32 %v772, %v772
        %v779 = vsel %vm741, %v773, 0.0
        %780 = vadd.xlane.f32.xlu0 %v779
        %v781 = vpop.xlane.xlu0 %780
        %v782 = vsel %vm741, %v774, 0.0
        %783 = vadd.xlane.f32.xlu0 %v782
        %v784 = vpop.xlane.xlu0 %783
        %v785 = vsel %vm741, %v775, 0.0
        %786 = vadd.xlane.f32.xlu0 %v785
        %v787 = vpop.xlane.xlu0 %786
        %v788 = vsel %vm741, %v776, 0.0
        %789 = vadd.xlane.f32.xlu0 %v788
        %v790 = vpop.xlane.xlu0 %789
        %v791 = vsel %vm741, %v777, 0.0
        %792 = vadd.xlane.f32.xlu0 %v791
        %v793 = vpop.xlane.xlu0 %792
        %v794 = vsel %vm741, %v778, 0.0
        %795 = vadd.xlane.f32.xlu0 %v794
        %v796 = vpop.xlane.xlu0 %795
        %v797 = vmul.f32 %v781, %v760
        %v798 = vmul.f32 %v784, %v760
        %v799 = vmul.f32 %v787, %v760
        %v800 = vmul.f32 %v790, %v760
        %v801 = vmul.f32 %v793, %v760
        %v802 = vmul.f32 %v796, %v760
        %v803 = vadd.f32 %v797, 1e-05
        %v804 = vadd.f32 %v798, 1e-05
        %v805 = vadd.f32 %v799, 1e-05
        %v806 = vadd.f32 %v800, 1e-05
        %v807 = vadd.f32 %v801, 1e-05
        %v808 = vadd.f32 %v802, 1e-05
        %v809 = vrsqrt.pop %v803
        %v810 = vrsqrt.pop %v804
        %v811 = vrsqrt.pop %v805
        %v812 = vrsqrt.pop %v806
        %v813 = vrsqrt.pop %v807
        %v814 = vrsqrt.pop %v808
        %v815 = vmul.f32 %v767, %v809
        %v816 = vmul.f32 %v768, %v810
        %v817 = vmul.f32 %v769, %v811
        %v818 = vmul.f32 %v770, %v812
        %v819 = vmul.f32 %v771, %v813
        %v820 = vmul.f32 %v772, %v814
        %v822 = vlaneseq
        %v823 = vshrl.u32 %v822, 7
        %v824 = vsub.s32 0, %v823
        %v825 = vrot.slane %v739, %v824
        %v827 = vmul.f32 %v815, %v825
        %v828 = vmul.f32 %v816, %v825
        %v829 = vmul.f32 %v817, %v825
        %v830 = vmul.f32 %v818, %v825
        %v831 = vmul.f32 %v819, %v825
        %v832 = vmul.f32 %v820, %v825
        %v834 = vlaneseq
        %v835 = vshrl.u32 %v834, 7
        %v836 = vsub.s32 0, %v835
        %v837 = vrot.slane %v740, %v836
        %v839 = vadd.f32 %v827, %v837
        %v840 = vadd.f32 %v828, %v837
        %v841 = vadd.f32 %v829, %v837
        %v842 = vadd.f32 %v830, %v837
        %v843 = vadd.f32 %v831, %v837
        %v844 = vadd.f32 %v832, %v837
        %v845 = vpack.c.bf16 %v840, %v839
        %v846 = vpack.c.bf16 %v842, %v841
        %v847 = vpack.c.bf16 %v844, %v843
        %v848 = vld [vmem:[%s677] sm:$0xf]
        %v849 = vld [vmem:[%s677 + $0x4] sm:$0xf]
        %v850 = vld [vmem:[%s677 + $0x8] sm:$0xf]
        %v851 = vld [vmem:[%s677 + $0xc] sm:$0xf]
        %v852 = vld [vmem:[%s680] sm:$0x1]
        %v854 = vlaneseq
        %v855 = vshrl.u32 %v854, 7
        %v856 = vsub.s32 0, %v855
        %v857 = vrot.slane %v852, %v856
        %v863 = vunpack.c.l.b16 %v848
        %v864 = vunpack.c.l.b16 %v849
        %v865 = vunpack.c.l.b16 %v850
        %v866 = vunpack.c.l.b16 %v851
        %v867 = vpack.c.b16 %v864, %v863
        %v868 = vpack.c.b16 %v866, %v865
        %v872 = vsel %vm741, %v845, 0
        %v875 = vsel %vm741, %v846, 0
        %v878 = vsel %vm741, %v847, 0
        %880 = vmatprep.subr.bf16.mxu0 0
        %881 = vmatpush1.bf16.msra.mxu0 %v867
        %882 = vmatprep.subr.bf16.mxu0 0
        %883 = vmatpush1.bf16.msra.mxu0 %v868
        %884 = vmatprep.subr.bf16.mxu0 0
        %885 = vmatpush1.bf16.msra.mxu0 0
        %886 = vmatprep.subr.bf16.mxu0 0
        %887 = vmatpush1.bf16.msra.mxu0 0
        %888 = vmatprep.subr.bf16.mxu0 0
        %889 = vmatpush1.bf16.msra.mxu0 0
        %890 = vmatprep.subr.bf16.mxu0 0
        %891 = vmatpush1.bf16.msra.mxu0 0
        %892 = vmatprep.subr.bf16.mxu0 0
        %893 = vmatpush1.bf16.msra.mxu0 0
        %894 = vmatprep.subr.bf16.mxu0 0
        %895 = vmatpush1.bf16.msra.mxu0 0
        %896 = vmatprep.subr.bf16.mxu0 0
        %897 = vmatpush1.bf16.msra.mxu0 0
        %898 = vmatprep.subr.bf16.mxu0 0
        %899 = vmatpush1.bf16.msra.mxu0 0
        %900 = vmatprep.subr.bf16.mxu0 0
        %901 = vmatpush1.bf16.msra.mxu0 0
        %902 = vmatprep.subr.bf16.mxu0 0
        %903 = vmatpush1.bf16.msra.mxu0 0
        %904 = vmatprep.subr.bf16.mxu0 0
        %905 = vmatpush1.bf16.msra.mxu0 0
        %906 = vmatprep.subr.bf16.mxu0 0
        %907 = vmatpush1.bf16.msra.mxu0 0
        %908 = vmatprep.subr.bf16.mxu0 0
        %909 = vmatpush1.bf16.msra.mxu0 0
        %910 = vmatprep.subr.bf16.mxu0 0
        %911 = vmatpush1.bf16.msra.mxu0 0
        %912 = vmatprep.mubr.bf16.mxu0 0
        %913 = vmatmul.mubr.bf16.gmra.mrb[0].mxu0 %v872
        %v914 = vpop.f32.mrb[0].mxu0
        %v915 = vadd.f32 %v857, %v914
        %v916 = vpop.f32.mrb[0].mxu0
        %v917 = vpop.f32.mrb[0].mxu0
        %v918 = vadd.f32 %v857, %v917
        %v919 = vpop.f32.mrb[0].mxu0
        %920 = vmatprep.mubr.bf16.mxu0 0
        %921 = vmatmul.mubr.bf16.gmra.mrb[0].mxu0 %v875
        %v922 = vpop.f32.mrb[0].mxu0
        %v923 = vadd.f32 %v857, %v922
        %v924 = vpop.f32.mrb[0].mxu0
        %v925 = vpop.f32.mrb[0].mxu0
        %v926 = vadd.f32 %v857, %v925
        %v927 = vpop.f32.mrb[0].mxu0
        %928 = vmatprep.mubr.bf16.mxu0 0
        %929 = vmatmul.mubr.bf16.gmra.mrb[0].mxu0 %v878
        %v930 = vpop.f32.mrb[0].mxu0
        %v931 = vadd.f32 %v857, %v930
        %v932 = vpop.f32.mrb[0].mxu0
        %v933 = vpop.f32.mrb[0].mxu0
        %v934 = vadd.f32 %v857, %v933
        %v935 = vpop.f32.mrb[0].mxu0
        %936 = vdwg.mxu0
        %v937 = vlaneseq
        %v938 = vshrl.u32 %v937, 7
        %v939 = vlaneseq
        %v940 = vand.u32 %v939, 127
        %vm941 = vcmp.le.s32.totalorder %v940, %v938
        %v942 = vld [vmem:[#allocation5] sm:$0x1]
        %vm943 = vcmp.gt.f32.partialorder %v942, 0.5
        %v944 = vsel %vm943, 1, 0
        %v945 = vlaneseq
        %v946 = vshrl.u32 %v945, 7
        %v947 = vsub.s32 0, %v946
        %v948 = vrot.slane %v944, %v947
        %vm949 = vcmp.eq.s32.totalorder %v948, 1
        %vm950 = vmand %vm941, %vm949
        %952 = vrot.lane.b32.xlu0 %v915, 96
        %v953 = vpop.permute.xlu0 %952
        %vm954 = vcmask 130048
        %v955 = vsel %vm954, %v915, 0
        %v957 = vsel %vm954, %v953, 0
        %959 = vmatprep.subr.mxu0 0.0
        %960 = vmatpush1.xpose.msra.mxu0 %v957
        %961 = vmatprep.subr.mxu0 0.0
        %962 = vmatpush1.xpose.msra.mxu0 0.0
        %963 = vmatprep.subr.mxu0 0.0
        %964 = vmatpush1.xpose.msra.mxu0 0.0
        %965 = vmatprep.subr.mxu0 0.0
        %966 = vmatpush1.xpose.msra.mxu0 0.0
        %967 = vmatprep.subr.mxu0 0.0
        %968 = vmatpush1.xpose.msra.mxu0 0.0
        %969 = vmatprep.subr.mxu0 0.0
        %970 = vmatpush1.xpose.msra.mxu0 0.0
        %971 = vmatprep.subr.mxu0 0.0
        %972 = vmatpush1.xpose.msra.mxu0 0.0
        %973 = vmatprep.subr.mxu0 0.0
        %974 = vmatpush1.xpose.msra.mxu0 0.0
        %975 = vmatprep.subr.mxu0 0.0
        %976 = vmatpush1.xpose.msra.mxu0 0.0
        %977 = vmatprep.subr.mxu0 0.0
        %978 = vmatpush1.xpose.msra.mxu0 0.0
        %979 = vmatprep.subr.mxu0 0.0
        %980 = vmatpush1.xpose.msra.mxu0 0.0
        %981 = vmatprep.subr.mxu0 0.0
        %982 = vmatpush1.xpose.msra.mxu0 0.0
        %983 = vmatprep.subr.mxu0 0.0
        %984 = vmatpush1.xpose.msra.mxu0 0.0
        %985 = vmatprep.subr.mxu0 0.0
        %986 = vmatpush1.xpose.msra.mxu0 0.0
        %987 = vmatprep.subr.mxu0 0.0
        %988 = vmatpush1.xpose.msra.mxu0 0.0
        %989 = vmatprep.subr.mxu0 0.0
        %990 = vmatpush1.xpose.msra.mxu0 0.0
        %991 = vmatprep.subr.mxu0 0.0
        %992 = vmatpush1.xpose.msra.mxu0 0.0
        %993 = vmatprep.subr.mxu0 0.0
        %994 = vmatpush1.xpose.msra.mxu0 0.0
        %995 = vmatprep.subr.mxu0 0.0
        %996 = vmatpush1.xpose.msra.mxu0 0.0
        %997 = vmatprep.subr.mxu0 0.0
        %998 = vmatpush1.xpose.msra.mxu0 0.0
        %999 = vmatprep.subr.mxu0 0.0
        %1000 = vmatpush1.xpose.msra.mxu0 0.0
        %1001 = vmatprep.subr.mxu0 0.0
        %1002 = vmatpush1.xpose.msra.mxu0 0.0
        %1003 = vmatprep.subr.mxu0 0.0
        %1004 = vmatpush1.xpose.msra.mxu0 0.0
        %1005 = vmatprep.subr.mxu0 0.0
        %1006 = vmatpush1.xpose.msra.mxu0 0.0
        %1007 = vmatprep.subr.mxu0 0.0
        %1008 = vmatpush1.xpose.msra.mxu0 0.0
        %1009 = vmatprep.subr.mxu0 0.0
        %1010 = vmatpush1.xpose.msra.mxu0 0.0
        %1011 = vmatprep.subr.mxu0 0.0
        %1012 = vmatpush1.xpose.msra.mxu0 0.0
        %1013 = vmatprep.subr.mxu0 0.0
        %1014 = vmatpush1.xpose.msra.mxu0 0.0
        %1015 = vmatprep.subr.mxu0 0.0
        %1016 = vmatpush1.xpose.msra.mxu0 0.0
        %1017 = vmatprep.subr.mxu0 0.0
        %1018 = vmatpush1.xpose.msra.mxu0 0.0
        %1019 = vmatprep.subr.mxu0 0.0
        %1020 = vmatpush1.xpose.msra.mxu0 0.0
        %1021 = vmatprep.subr.mxu0 0.0
        %1022 = vmatpush1.xpose.msra.mxu0 0.0
        %1023 = vmatprep.mubr.f32.mxu0 0.0
        %1024 = vmatmul.mubr.f32.gmra.mrb[0].mxu0 %v955
        %v1025 = vpop.f32.mrb[0].mxu0
        %v1026 = vadd.f32 0.0, %v1025
        %v1027 = vpop.f32.mrb[0].mxu0
        %1028 = vdwg.mxu0
        %v1029 = vsel %vm950, %v1026, -1e+09
        %vm1030 = vcmask 64512
        %v1031 = vsel %vm1030, %v1029, -inf
        %1032 = vmax.xlane.f32.xlu0 %v1031
        %v1033 = vpop.xlane.xlu0 %1032
        %v1034 = vsub.f32 %v1029, %v1033
        %v1035 = vmul.f32 %v1034, 1.442695
        %v1036 = vpow.pop %v1035
        %v1037 = vsel %vm1030, %v1036, 0.0
        %1038 = vadd.xlane.f32.xlu0 %v1037
        %v1039 = vpop.xlane.xlu0 %1038
        %v1040 = vrcp.pop %v1039
        %v1041 = vmul.f32 %v1036, %v1040
        %v1042 = vpack.c.bf16 %v1041, %v1041
        %v1043 = vpack.c.bf16 %v915, %v915
        %1045 = vrot.lane.b32.xlu0 %v1043, 64
        %v1046 = vpop.permute.xlu0 %1045
        %v1048 = vsel %vm1030, %v1042, 0
        %vm1050 = vcmask 1043456
        %v1052 = vsel %vm1050, %v1046, 0
        %1054 = vmatprep.subr.bf16.mxu0 0
        %1055 = vmatpush1.bf16.msra.mxu0 %v1052
        %1056 = vmatprep.subr.bf16.mxu0 0
        %1057 = vmatpush1.bf16.msra.mxu0 0
        %1058 = vmatprep.subr.bf16.mxu0 0
        %1059 = vmatpush1.bf16.msra.mxu0 0
        %1060 = vmatprep.subr.bf16.mxu0 0
        %1061 = vmatpush1.bf16.msra.mxu0 0
        %1062 = vmatprep.subr.bf16.mxu0 0
        %1063 = vmatpush1.bf16.msra.mxu0 0
        %1064 = vmatprep.subr.bf16.mxu0 0
        %1065 = vmatpush1.bf16.msra.mxu0 0
        %1066 = vmatprep.subr.bf16.mxu0 0
        %1067 = vmatpush1.bf16.msra.mxu0 0
        %1068 = vmatprep.subr.bf16.mxu0 0
        %1069 = vmatpush1.bf16.msra.mxu0 0
        %1070 = vmatprep.subr.bf16.mxu0 0
        %1071 = vmatpush1.bf16.msra.mxu0 0
        %1072 = vmatprep.subr.bf16.mxu0 0
        %1073 = vmatpush1.bf16.msra.mxu0 0
        %1074 = vmatprep.subr.bf16.mxu0 0
        %1075 = vmatpush1.bf16.msra.mxu0 0
        %1076 = vmatprep.subr.bf16.mxu0 0
        %1077 = vmatpush1.bf16.msra.mxu0 0
        %1078 = vmatprep.subr.bf16.mxu0 0
        %1079 = vmatpush1.bf16.msra.mxu0 0
        %1080 = vmatprep.subr.bf16.mxu0 0
        %1081 = vmatpush1.bf16.msra.mxu0 0
        %1082 = vmatprep.subr.bf16.mxu0 0
        %1083 = vmatpush1.bf16.msra.mxu0 0
        %1084 = vmatprep.subr.bf16.mxu0 0
        %1085 = vmatpush1.bf16.msra.mxu0 0
        %1086 = vmatprep.mubr.bf16.mxu0 0
        %1087 = vmatmul.mubr.bf16.gmra.mrb[0].mxu0 %v1048
        %v1088 = vpop.f32.mrb[0].mxu0
        %v1089 = vadd.f32 0.0, %v1088
        %v1090 = vpop.f32.mrb[0].mxu0
        %v1091 = vpop.f32.mrb[0].mxu0
        %v1092 = vpop.f32.mrb[0].mxu0
        %1093 = vdwg.mxu0
        %1094 = vrot.lane.b32.xlu0 %v915, 112
        %v1095 = vpop.permute.xlu0 %1094
        %1096 = vrot.lane.b32.xlu0 %v915, 80
        %v1097 = vpop.permute.xlu0 %1096
        %v1098 = vsel %vm954, %v1095, 0
        %v1100 = vsel %vm954, %v1097, 0
        %1102 = vmatprep.subr.mxu0 0.0
        %1103 = vmatpush1.xpose.msra.mxu0 %v1100
        %1104 = vmatprep.subr.mxu0 0.0
        %1105 = vmatpush1.xpose.msra.mxu0 0.0
        %1106 = vmatprep.subr.mxu0 0.0
        %1107 = vmatpush1.xpose.msra.mxu0 0.0
        %1108 = vmatprep.subr.mxu0 0.0
        %1109 = vmatpush1.xpose.msra.mxu0 0.0
        %1110 = vmatprep.subr.mxu0 0.0
        %1111 = vmatpush1.xpose.msra.mxu0 0.0
        %1112 = vmatprep.subr.mxu0 0.0
        %1113 = vmatpush1.xpose.msra.mxu0 0.0
        %1114 = vmatprep.subr.mxu0 0.0
        %1115 = vmatpush1.xpose.msra.mxu0 0.0
        %1116 = vmatprep.subr.mxu0 0.0
        %1117 = vmatpush1.xpose.msra.mxu0 0.0
        %1118 = vmatprep.subr.mxu0 0.0
        %1119 = vmatpush1.xpose.msra.mxu0 0.0
        %1120 = vmatprep.subr.mxu0 0.0
        %1121 = vmatpush1.xpose.msra.mxu0 0.0
        %1122 = vmatprep.subr.mxu0 0.0
        %1123 = vmatpush1.xpose.msra.mxu0 0.0
        %1124 = vmatprep.subr.mxu0 0.0
        %1125 = vmatpush1.xpose.msra.mxu0 0.0
        %1126 = vmatprep.subr.mxu0 0.0
        %1127 = vmatpush1.xpose.msra.mxu0 0.0
        %1128 = vmatprep.subr.mxu0 0.0
        %1129 = vmatpush1.xpose.msra.mxu0 0.0
        %1130 = vmatprep.subr.mxu0 0.0
        %1131 = vmatpush1.xpose.msra.mxu0 0.0
        %1132 = vmatprep.subr.mxu0 0.0
        %1133 = vmatpush1.xpose.msra.mxu0 0.0
        %1134 = vmatprep.subr.mxu0 0.0
        %1135 = vmatpush1.xpose.msra.mxu0 0.0
        %1136 = vmatprep.subr.mxu0 0.0
        %1137 = vmatpush1.xpose.msra.mxu0 0.0
        %1138 = vmatprep.subr.mxu0 0.0
        %1139 = vmatpush1.xpose.msra.mxu0 0.0
        %1140 = vmatprep.subr.mxu0 0.0
        %1141 = vmatpush1.xpose.msra.mxu0 0.0
        %1142 = vmatprep.subr.mxu0 0.0
        %1143 = vmatpush1.xpose.msra.mxu0 0.0
        %1144 = vmatprep.subr.mxu0 0.0
        %1145 = vmatpush1.xpose.msra.mxu0 0.0
        %1146 = vmatprep.subr.mxu0 0.0
        %1147 = vmatpush1.xpose.msra.mxu0 0.0
        %1148 = vmatprep.subr.mxu0 0.0
        %1149 = vmatpush1.xpose.msra.mxu0 0.0
        %1150 = vmatprep.subr.mxu0 0.0
        %1151 = vmatpush1.xpose.msra.mxu0 0.0
        %1152 = vmatprep.subr.mxu0 0.0
        %1153 = vmatpush1.xpose.msra.mxu0 0.0
        %1154 = vmatprep.subr.mxu0 0.0
        %1155 = vmatpush1.xpose.msra.mxu0 0.0
        %1156 = vmatprep.subr.mxu0 0.0
        %1157 = vmatpush1.xpose.msra.mxu0 0.0
        %1158 = vmatprep.subr.mxu0 0.0
        %1159 = vmatpush1.xpose.msra.mxu0 0.0
        %1160 = vmatprep.subr.mxu0 0.0
        %1161 = vmatpush1.xpose.msra.mxu0 0.0
        %1162 = vmatprep.subr.mxu0 0.0
        %1163 = vmatpush1.xpose.msra.mxu0 0.0
        %1164 = vmatprep.subr.mxu0 0.0
        %1165 = vmatpush1.xpose.msra.mxu0 0.0
        %1166 = vmatprep.mubr.f32.mxu0 0.0
        %1167 = vmatmul.mubr.f32.gmra.mrb[0].mxu0 %v1098
        %v1168 = vpop.f32.mrb[0].mxu0
        %v1169 = vadd.f32 0.0, %v1168
        %v1170 = vpop.f32.mrb[0].mxu0
        %1171 = vdwg.mxu0
        %v1172 = vsel %vm950, %v1169, -1e+09
        %v1173 = vsel %vm1030, %v1172, -inf
        %1174 = vmax.xlane.f32.xlu0 %v1173
        %v1175 = vpop.xlane.xlu0 %1174
        %v1176 = vsub.f32 %v1172, %v1175
        %v1177 = vmul.f32 %v1176, 1.442695
        %v1178 = vpow.pop %v1177
        %v1179 = vsel %vm1030, %v1178, 0.0
        %1180 = vadd.xlane.f32.xlu0 %v1179
        %v1181 = vpop.xlane.xlu0 %1180
        %v1182 = vrcp.pop %v1181
        %v1183 = vmul.f32 %v1178, %v1182
        %v1184 = vpack.c.bf16 %v1183, %v1183
        %1185 = vrot.lane.b32.xlu0 %v1043, 48
        %v1186 = vpop.permute.xlu0 %1185
        %v1188 = vsel %vm1030, %v1184, 0
        %v1191 = vsel %vm1050, %v1186, 0
        %1193 = vmatprep.subr.bf16.mxu0 0
        %1194 = vmatpush1.bf16.msra.mxu0 %v1191
        %1195 = vmatprep.subr.bf16.mxu0 0
        %1196 = vmatpush1.bf16.msra.mxu0 0
        %1197 = vmatprep.subr.bf16.mxu0 0
        %1198 = vmatpush1.bf16.msra.mxu0 0
        %1199 = vmatprep.subr.bf16.mxu0 0
        %1200 = vmatpush1.bf16.msra.mxu0 0
        %1201 = vmatprep.subr.bf16.mxu0 0
        %1202 = vmatpush1.bf16.msra.mxu0 0
        %1203 = vmatprep.subr.bf16.mxu0 0
        %1204 = vmatpush1.bf16.msra.mxu0 0
        %1205 = vmatprep.subr.bf16.mxu0 0
        %1206 = vmatpush1.bf16.msra.mxu0 0
        %1207 = vmatprep.subr.bf16.mxu0 0
        %1208 = vmatpush1.bf16.msra.mxu0 0
        %1209 = vmatprep.subr.bf16.mxu0 0
        %1210 = vmatpush1.bf16.msra.mxu0 0
        %1211 = vmatprep.subr.bf16.mxu0 0
        %1212 = vmatpush1.bf16.msra.mxu0 0
        %1213 = vmatprep.subr.bf16.mxu0 0
        %1214 = vmatpush1.bf16.msra.mxu0 0
        %1215 = vmatprep.subr.bf16.mxu0 0
        %1216 = vmatpush1.bf16.msra.mxu0 0
        %1217 = vmatprep.subr.bf16.mxu0 0
        %1218 = vmatpush1.bf16.msra.mxu0 0
        %1219 = vmatprep.subr.bf16.mxu0 0
        %1220 = vmatpush1.bf16.msra.mxu0 0
        %1221 = vmatprep.subr.bf16.mxu0 0
        %1222 = vmatpush1.bf16.msra.mxu0 0
        %1223 = vmatprep.subr.bf16.mxu0 0
        %1224 = vmatpush1.bf16.msra.mxu0 0
        %1225 = vmatprep.mubr.bf16.mxu0 0
        %1226 = vmatmul.mubr.bf16.gmra.mrb[0].mxu0 %v1188
        %v1227 = vpop.f32.mrb[0].mxu0
        %v1228 = vadd.f32 0.0, %v1227
        %v1229 = vpop.f32.mrb[0].mxu0
        %v1230 = vpop.f32.mrb[0].mxu0
        %v1231 = vpop.f32.mrb[0].mxu0
        %1232 = vdwg.mxu0
        %1234 = vrot.lane.b32.xlu0 %v1228, 16
        %v1235 = vpop.permute.xlu0 %1234
        %v1237 = vsel %vm954, %v1089, %v1235
        %s1238 = scalar_lea.vmem [#allocation5], 1
        %v1239 = vld [vmem:[%s1238] sm:$0x1]
        %vm1240 = vcmp.gt.f32.partialorder %v1239, 0.5
        %v1241 = vsel %vm1240, 1, 0
        %v1242 = vlaneseq
        %v1243 = vshrl.u32 %v1242, 7
        %v1244 = vsub.s32 0, %v1243
        %v1245 = vrot.slane %v1241, %v1244
        %vm1246 = vcmp.eq.s32.totalorder %v1245, 1
        %vm1247 = vmand %vm941, %vm1246
        %1249 = vrot.lane.b32.xlu0 %v918, 96
        %v1250 = vpop.permute.xlu0 %1249
        %v1251 = vsel %vm954, %v918, 0
        %v1253 = vsel %vm954, %v1250, 0
        %1255 = vmatprep.subr.mxu0 0.0
        %1256 = vmatpush1.xpose.msra.mxu0 %v1253
        %1257 = vmatprep.subr.mxu0 0.0
        %1258 = vmatpush1.xpose.msra.mxu0 0.0
        %1259 = vmatprep.subr.mxu0 0.0
        %1260 = vmatpush1.xpose.msra.mxu0 0.0
        %1261 = vmatprep.subr.mxu0 0.0
        %1262 = vmatpush1.xpose.msra.mxu0 0.0
        %1263 = vmatprep.subr.mxu0 0.0
        %1264 = vmatpush1.xpose.msra.mxu0 0.0
        %1265 = vmatprep.subr.mxu0 0.0
        %1266 = vmatpush1.xpose.msra.mxu0 0.0
        %1267 = vmatprep.subr.mxu0 0.0
        %1268 = vmatpush1.xpose.msra.mxu0 0.0
        %1269 = vmatprep.subr.mxu0 0.0
        %1270 = vmatpush1.xpose.msra.mxu0 0.0
        %1271 = vmatprep.subr.mxu0 0.0
        %1272 = vmatpush1.xpose.msra.mxu0 0.0
        %1273 = vmatprep.subr.mxu0 0.0
        %1274 = vmatpush1.xpose.msra.mxu0 0.0
        %1275 = vmatprep.subr.mxu0 0.0
        %1276 = vmatpush1.xpose.msra.mxu0 0.0
        %1277 = vmatprep.subr.mxu0 0.0
        %1278 = vmatpush1.xpose.msra.mxu0 0.0
        %1279 = vmatprep.subr.mxu0 0.0
        %1280 = vmatpush1.xpose.msra.mxu0 0.0
        %1281 = vmatprep.subr.mxu0 0.0
        %1282 = vmatpush1.xpose.msra.mxu0 0.0
        %1283 = vmatprep.subr.mxu0 0.0
        %1284 = vmatpush1.xpose.msra.mxu0 0.0
        %1285 = vmatprep.subr.mxu0 0.0
        %1286 = vmatpush1.xpose.msra.mxu0 0.0
        %1287 = vmatprep.subr.mxu0 0.0
        %1288 = vmatpush1.xpose.msra.mxu0 0.0
        %1289 = vmatprep.subr.mxu0 0.0
        %1290 = vmatpush1.xpose.msra.mxu0 0.0
        %1291 = vmatprep.subr.mxu0 0.0
        %1292 = vmatpush1.xpose.msra.mxu0 0.0
        %1293 = vmatprep.subr.mxu0 0.0
        %1294 = vmatpush1.xpose.msra.mxu0 0.0
        %1295 = vmatprep.subr.mxu0 0.0
        %1296 = vmatpush1.xpose.msra.mxu0 0.0
        %1297 = vmatprep.subr.mxu0 0.0
        %1298 = vmatpush1.xpose.msra.mxu0 0.0
        %1299 = vmatprep.subr.mxu0 0.0
        %1300 = vmatpush1.xpose.msra.mxu0 0.0
        %1301 = vmatprep.subr.mxu0 0.0
        %1302 = vmatpush1.xpose.msra.mxu0 0.0
        %1303 = vmatprep.subr.mxu0 0.0
        %1304 = vmatpush1.xpose.msra.mxu0 0.0
        %1305 = vmatprep.subr.mxu0 0.0
        %1306 = vmatpush1.xpose.msra.mxu0 0.0
        %1307 = vmatprep.subr.mxu0 0.0
        %1308 = vmatpush1.xpose.msra.mxu0 0.0
        %1309 = vmatprep.subr.mxu0 0.0
        %1310 = vmatpush1.xpose.msra.mxu0 0.0
        %1311 = vmatprep.subr.mxu0 0.0
        %1312 = vmatpush1.xpose.msra.mxu0 0.0
        %1313 = vmatprep.subr.mxu0 0.0
        %1314 = vmatpush1.xpose.msra.mxu0 0.0
        %1315 = vmatprep.subr.mxu0 0.0
        %1316 = vmatpush1.xpose.msra.mxu0 0.0
        %1317 = vmatprep.subr.mxu0 0.0
        %1318 = vmatpush1.xpose.msra.mxu0 0.0
        %1319 = vmatprep.mubr.f32.mxu0 0.0
        %1320 = vmatmul.mubr.f32.gmra.mrb[0].mxu0 %v1251
        %v1321 = vpop.f32.mrb[0].mxu0
        %v1322 = vadd.f32 0.0, %v1321
        %v1323 = vpop.f32.mrb[0].mxu0
        %1324 = vdwg.mxu0
        %v1325 = vsel %vm1247, %v1322, -1e+09
        %v1326 = vsel %vm1030, %v1325, -inf
        %1327 = vmax.xlane.f32.xlu0 %v1326
        %v1328 = vpop.xlane.xlu0 %1327
        %v1329 = vsub.f32 %v1325, %v1328
        %v1330 = vmul.f32 %v1329, 1.442695
        %v1331 = vpow.pop %v1330
        %v1332 = vsel %vm1030, %v1331, 0.0
        %1333 = vadd.xlane.f32.xlu0 %v1332
        %v1334 = vpop.xlane.xlu0 %1333
        %v1335 = vrcp.pop %v1334
        %v1336 = vmul.f32 %v1331, %v1335
        %v1337 = vpack.c.bf16 %v1336, %v1336
        %v1338 = vpack.c.bf16 %v918, %v918
        %1340 = vrot.lane.b32.xlu0 %v1338, 64
        %v1341 = vpop.permute.xlu0 %1340
        %v1343 = vsel %vm1030, %v1337, 0
        %v1346 = vsel %vm1050, %v1341, 0
        %1348 = vmatprep.subr.bf16.mxu0 0
        %1349 = vmatpush1.bf16.msra.mxu0 %v1346
        %1350 = vmatprep.subr.bf16.mxu0 0
        %1351 = vmatpush1.bf16.msra.mxu0 0
        %1352 = vmatprep.subr.bf16.mxu0 0
        %1353 = vmatpush1.bf16.msra.mxu0 0
        %1354 = vmatprep.subr.bf16.mxu0 0
        %1355 = vmatpush1.bf16.msra.mxu0 0
        %1356 = vmatprep.subr.bf16.mxu0 0
        %1357 = vmatpush1.bf16.msra.mxu0 0
        %1358 = vmatprep.subr.bf16.mxu0 0
        %1359 = vmatpush1.bf16.msra.mxu0 0
        %1360 = vmatprep.subr.bf16.mxu0 0
        %1361 = vmatpush1.bf16.msra.mxu0 0
        %1362 = vmatprep.subr.bf16.mxu0 0
        %1363 = vmatpush1.bf16.msra.mxu0 0
        %1364 = vmatprep.subr.bf16.mxu0 0
        %1365 = vmatpush1.bf16.msra.mxu0 0
        %1366 = vmatprep.subr.bf16.mxu0 0
        %1367 = vmatpush1.bf16.msra.mxu0 0
        %1368 = vmatprep.subr.bf16.mxu0 0
        %1369 = vmatpush1.bf16.msra.mxu0 0
        %1370 = vmatprep.subr.bf16.mxu0 0
        %1371 = vmatpush1.bf16.msra.mxu0 0
        %1372 = vmatprep.subr.bf16.mxu0 0
        %1373 = vmatpush1.bf16.msra.mxu0 0
        %1374 = vmatprep.subr.bf16.mxu0 0
        %1375 = vmatpush1.bf16.msra.mxu0 0
        %1376 = vmatprep.subr.bf16.mxu0 0
        %1377 = vmatpush1.bf16.msra.mxu0 0
        %1378 = vmatprep.subr.bf16.mxu0 0
        %1379 = vmatpush1.bf16.msra.mxu0 0
        %1380 = vmatprep.mubr.bf16.mxu0 0
        %1381 = vmatmul.mubr.bf16.gmra.mrb[0].mxu0 %v1343
        %v1382 = vpop.f32.mrb[0].mxu0
        %v1383 = vadd.f32 0.0, %v1382
        %v1384 = vpop.f32.mrb[0].mxu0
        %v1385 = vpop.f32.mrb[0].mxu0
        %v1386 = vpop.f32.mrb[0].mxu0
        %1387 = vdwg.mxu0
        %1388 = vrot.lane.b32.xlu0 %v918, 112
        %v1389 = vpop.permute.xlu0 %1388
        %1390 = vrot.lane.b32.xlu0 %v918, 80
        %v1391 = vpop.permute.xlu0 %1390
        %v1392 = vsel %vm954, %v1389, 0
        %v1394 = vsel %vm954, %v1391, 0
        %1396 = vmatprep.subr.mxu0 0.0
        %1397 = vmatpush1.xpose.msra.mxu0 %v1394
        %1398 = vmatprep.subr.mxu0 0.0
        %1399 = vmatpush1.xpose.msra.mxu0 0.0
        %1400 = vmatprep.subr.mxu0 0.0
        %1401 = vmatpush1.xpose.msra.mxu0 0.0
        %1402 = vmatprep.subr.mxu0 0.0
        %1403 = vmatpush1.xpose.msra.mxu0 0.0
        %1404 = vmatprep.subr.mxu0 0.0
        %1405 = vmatpush1.xpose.msra.mxu0 0.0
        %1406 = vmatprep.subr.mxu0 0.0
        %1407 = vmatpush1.xpose.msra.mxu0 0.0
        %1408 = vmatprep.subr.mxu0 0.0
        %1409 = vmatpush1.xpose.msra.mxu0 0.0
        %1410 = vmatprep.subr.mxu0 0.0
        %1411 = vmatpush1.xpose.msra.mxu0 0.0
        %1412 = vmatprep.subr.mxu0 0.0
        %1413 = vmatpush1.xpose.msra.mxu0 0.0
        %1414 = vmatprep.subr.mxu0 0.0
        %1415 = vmatpush1.xpose.msra.mxu0 0.0
        %1416 = vmatprep.subr.mxu0 0.0
        %1417 = vmatpush1.xpose.msra.mxu0 0.0
        %1418 = vmatprep.subr.mxu0 0.0
        %1419 = vmatpush1.xpose.msra.mxu0 0.0
        %1420 = vmatprep.subr.mxu0 0.0
        %1421 = vmatpush1.xpose.msra.mxu0 0.0
        %1422 = vmatprep.subr.mxu0 0.0
        %1423 = vmatpush1.xpose.msra.mxu0 0.0
        %1424 = vmatprep.subr.mxu0 0.0
        %1425 = vmatpush1.xpose.msra.mxu0 0.0
        %1426 = vmatprep.subr.mxu0 0.0
        %1427 = vmatpush1.xpose.msra.mxu0 0.0
        %1428 = vmatprep.subr.mxu0 0.0
        %1429 = vmatpush1.xpose.msra.mxu0 0.0
        %1430 = vmatprep.subr.mxu0 0.0
        %1431 = vmatpush1.xpose.msra.mxu0 0.0
        %1432 = vmatprep.subr.mxu0 0.0
        %1433 = vmatpush1.xpose.msra.mxu0 0.0
        %1434 = vmatprep.subr.mxu0 0.0
        %1435 = vmatpush1.xpose.msra.mxu0 0.0
        %1436 = vmatprep.subr.mxu0 0.0
        %1437 = vmatpush1.xpose.msra.mxu0 0.0
        %1438 = vmatprep.subr.mxu0 0.0
        %1439 = vmatpush1.xpose.msra.mxu0 0.0
        %1440 = vmatprep.subr.mxu0 0.0
        %1441 = vmatpush1.xpose.msra.mxu0 0.0
        %1442 = vmatprep.subr.mxu0 0.0
        %1443 = vmatpush1.xpose.msra.mxu0 0.0
        %1444 = vmatprep.subr.mxu0 0.0
        %1445 = vmatpush1.xpose.msra.mxu0 0.0
        %1446 = vmatprep.subr.mxu0 0.0
        %1447 = vmatpush1.xpose.msra.mxu0 0.0
        %1448 = vmatprep.subr.mxu0 0.0
        %1449 = vmatpush1.xpose.msra.mxu0 0.0
        %1450 = vmatprep.subr.mxu0 0.0
        %1451 = vmatpush1.xpose.msra.mxu0 0.0
        %1452 = vmatprep.subr.mxu0 0.0
        %1453 = vmatpush1.xpose.msra.mxu0 0.0
        %1454 = vmatprep.subr.mxu0 0.0
        %1455 = vmatpush1.xpose.msra.mxu0 0.0
        %1456 = vmatprep.subr.mxu0 0.0
        %1457 = vmatpush1.xpose.msra.mxu0 0.0
        %1458 = vmatprep.subr.mxu0 0.0
        %1459 = vmatpush1.xpose.msra.mxu0 0.0
        %1460 = vmatprep.mubr.f32.mxu0 0.0
        %1461 = vmatmul.mubr.f32.gmra.mrb[0].mxu0 %v1392
        %v1462 = vpop.f32.mrb[0].mxu0
        %v1463 = vadd.f32 0.0, %v1462
        %v1464 = vpop.f32.mrb[0].mxu0
        %1465 = vdwg.mxu0
        %v1466 = vsel %vm1247, %v1463, -1e+09
        %v1467 = vsel %vm1030, %v1466, -inf
        %1468 = vmax.xlane.f32.xlu0 %v1467
        %v1469 = vpop.xlane.xlu0 %1468
        %v1470 = vsub.f32 %v1466, %v1469
        %v1471 = vmul.f32 %v1470, 1.442695
        %v1472 = vpow.pop %v1471
        %v1473 = vsel %vm1030, %v1472, 0.0
        %1474 = vadd.xlane.f32.xlu0 %v1473
        %v1475 = vpop.xlane.xlu0 %1474
        %v1476 = vrcp.pop %v1475
        %v1477 = vmul.f32 %v1472, %v1476
        %v1478 = vpack.c.bf16 %v1477, %v1477
        %1479 = vrot.lane.b32.xlu0 %v1338, 48
        %v1480 = vpop.permute.xlu0 %1479
        %v1482 = vsel %vm1030, %v1478, 0
        %v1485 = vsel %vm1050, %v1480, 0
        %1487 = vmatprep.subr.bf16.mxu0 0
        %1488 = vmatpush1.bf16.msra.mxu0 %v1485
        %1489 = vmatprep.subr.bf16.mxu0 0
        %1490 = vmatpush1.bf16.msra.mxu0 0
        %1491 = vmatprep.subr.bf16.mxu0 0
        %1492 = vmatpush1.bf16.msra.mxu0 0
        %1493 = vmatprep.subr.bf16.mxu0 0
        %1494 = vmatpush1.bf16.msra.mxu0 0
        %1495 = vmatprep.subr.bf16.mxu0 0
        %1496 = vmatpush1.bf16.msra.mxu0 0
        %1497 = vmatprep.subr.bf16.mxu0 0
        %1498 = vmatpush1.bf16.msra.mxu0 0
        %1499 = vmatprep.subr.bf16.mxu0 0
        %1500 = vmatpush1.bf16.msra.mxu0 0
        %1501 = vmatprep.subr.bf16.mxu0 0
        %1502 = vmatpush1.bf16.msra.mxu0 0
        %1503 = vmatprep.subr.bf16.mxu0 0
        %1504 = vmatpush1.bf16.msra.mxu0 0
        %1505 = vmatprep.subr.bf16.mxu0 0
        %1506 = vmatpush1.bf16.msra.mxu0 0
        %1507 = vmatprep.subr.bf16.mxu0 0
        %1508 = vmatpush1.bf16.msra.mxu0 0
        %1509 = vmatprep.subr.bf16.mxu0 0
        %1510 = vmatpush1.bf16.msra.mxu0 0
        %1511 = vmatprep.subr.bf16.mxu0 0
        %1512 = vmatpush1.bf16.msra.mxu0 0
        %1513 = vmatprep.subr.bf16.mxu0 0
        %1514 = vmatpush1.bf16.msra.mxu0 0
        %1515 = vmatprep.subr.bf16.mxu0 0
        %1516 = vmatpush1.bf16.msra.mxu0 0
        %1517 = vmatprep.subr.bf16.mxu0 0
        %1518 = vmatpush1.bf16.msra.mxu0 0
        %1519 = vmatprep.mubr.bf16.mxu0 0
        %1520 = vmatmul.mubr.bf16.gmra.mrb[0].mxu0 %v1482
        %v1521 = vpop.f32.mrb[0].mxu0
        %v1522 = vadd.f32 0.0, %v1521
        %v1523 = vpop.f32.mrb[0].mxu0
        %v1524 = vpop.f32.mrb[0].mxu0
        %v1525 = vpop.f32.mrb[0].mxu0
        %1526 = vdwg.mxu0
        %1528 = vrot.lane.b32.xlu0 %v1522, 16
        %v1529 = vpop.permute.xlu0 %1528
        %v1531 = vsel %vm954, %v1383, %v1529
        %s1532 = scalar_lea.vmem [#allocation5], 2
        %v1533 = vld [vmem:[%s1532] sm:$0x1]
        %vm1534 = vcmp.gt.f32.partialorder %v1533, 0.5
        %v1535 = vsel %vm1534, 1, 0
        %v1536 = vlaneseq
        %v1537 = vshrl.u32 %v1536, 7
        %v1538 = vsub.s32 0, %v1537
        %v1539 = vrot.slane %v1535, %v1538
        %vm1540 = vcmp.eq.s32.totalorder %v1539, 1
        %vm1541 = vmand %vm941, %vm1540
        %1543 = vrot.lane.b32.xlu0 %v923, 96
        %v1544 = vpop.permute.xlu0 %1543
        %v1545 = vsel %vm954, %v923, 0
        %v1547 = vsel %vm954, %v1544, 0
        %1549 = vmatprep.subr.mxu0 0.0
        %1550 = vmatpush1.xpose.msra.mxu0 %v1547
        %1551 = vmatprep.subr.mxu0 0.0
        %1552 = vmatpush1.xpose.msra.mxu0 0.0
        %1553 = vmatprep.subr.mxu0 0.0
        %1554 = vmatpush1.xpose.msra.mxu0 0.0
        %1555 = vmatprep.subr.mxu0 0.0
        %1556 = vmatpush1.xpose.msra.mxu0 0.0
        %1557 = vmatprep.subr.mxu0 0.0
        %1558 = vmatpush1.xpose.msra.mxu0 0.0
        %1559 = vmatprep.subr.mxu0 0.0
        %1560 = vmatpush1.xpose.msra.mxu0 0.0
        %1561 = vmatprep.subr.mxu0 0.0
        %1562 = vmatpush1.xpose.msra.mxu0 0.0
        %1563 = vmatprep.subr.mxu0 0.0
        %1564 = vmatpush1.xpose.msra.mxu0 0.0
        %1565 = vmatprep.subr.mxu0 0.0
        %1566 = vmatpush1.xpose.msra.mxu0 0.0
        %1567 = vmatprep.subr.mxu0 0.0
        %1568 = vmatpush1.xpose.msra.mxu0 0.0
        %1569 = vmatprep.subr.mxu0 0.0
        %1570 = vmatpush1.xpose.msra.mxu0 0.0
        %1571 = vmatprep.subr.mxu0 0.0
        %1572 = vmatpush1.xpose.msra.mxu0 0.0
        %1573 = vmatprep.subr.mxu0 0.0
        %1574 = vmatpush1.xpose.msra.mxu0 0.0
        %1575 = vmatprep.subr.mxu0 0.0
        %1576 = vmatpush1.xpose.msra.mxu0 0.0
        %1577 = vmatprep.subr.mxu0 0.0
        %1578 = vmatpush1.xpose.msra.mxu0 0.0
        %1579 = vmatprep.subr.mxu0 0.0
        %1580 = vmatpush1.xpose.msra.mxu0 0.0
        %1581 = vmatprep.subr.mxu0 0.0
        %1582 = vmatpush1.xpose.msra.mxu0 0.0
        %1583 = vmatprep.subr.mxu0 0.0
        %1584 = vmatpush1.xpose.msra.mxu0 0.0
        %1585 = vmatprep.subr.mxu0 0.0
        %1586 = vmatpush1.xpose.msra.mxu0 0.0
        %1587 = vmatprep.subr.mxu0 0.0
        %1588 = vmatpush1.xpose.msra.mxu0 0.0
        %1589 = vmatprep.subr.mxu0 0.0
        %1590 = vmatpush1.xpose.msra.mxu0 0.0
        %1591 = vmatprep.subr.mxu0 0.0
        %1592 = vmatpush1.xpose.msra.mxu0 0.0
        %1593 = vmatprep.subr.mxu0 0.0
        %1594 = vmatpush1.xpose.msra.mxu0 0.0
        %1595 = vmatprep.subr.mxu0 0.0
        %1596 = vmatpush1.xpose.msra.mxu0 0.0
        %1597 = vmatprep.subr.mxu0 0.0
        %1598 = vmatpush1.xpose.msra.mxu0 0.0
        %1599 = vmatprep.subr.mxu0 0.0
        %1600 = vmatpush1.xpose.msra.mxu0 0.0
        %1601 = vmatprep.subr.mxu0 0.0
        %1602 = vmatpush1.xpose.msra.mxu0 0.0
        %1603 = vmatprep.subr.mxu0 0.0
        %1604 = vmatpush1.xpose.msra.mxu0 0.0
        %1605 = vmatprep.subr.mxu0 0.0
        %1606 = vmatpush1.xpose.msra.mxu0 0.0
        %1607 = vmatprep.subr.mxu0 0.0
        %1608 = vmatpush1.xpose.msra.mxu0 0.0
        %1609 = vmatprep.subr.mxu0 0.0
        %1610 = vmatpush1.xpose.msra.mxu0 0.0
        %1611 = vmatprep.subr.mxu0 0.0
        %1612 = vmatpush1.xpose.msra.mxu0 0.0
        %1613 = vmatprep.mubr.f32.mxu0 0.0
        %1614 = vmatmul.mubr.f32.gmra.mrb[0].mxu0 %v1545
        %v1615 = vpop.f32.mrb[0].mxu0
        %v1616 = vadd.f32 0.0, %v1615
        %v1617 = vpop.f32.mrb[0].mxu0
        %1618 = vdwg.mxu0
        %v1619 = vsel %vm1541, %v1616, -1e+09
        %v1620 = vsel %vm1030, %v1619, -inf
        %1621 = vmax.xlane.f32.xlu0 %v1620
        %v1622 = vpop.xlane.xlu0 %1621
        %v1623 = vsub.f32 %v1619, %v1622
        %v1624 = vmul.f32 %v1623, 1.442695
        %v1625 = vpow.pop %v1624
        %v1626 = vsel %vm1030, %v1625, 0.0
        %1627 = vadd.xlane.f32.xlu0 %v1626
        %v1628 = vpop.xlane.xlu0 %1627
        %v1629 = vrcp.pop %v1628
        %v1630 = vmul.f32 %v1625, %v1629
        %v1631 = vpack.c.bf16 %v1630, %v1630
        %v1632 = vpack.c.bf16 %v923, %v923
        %1634 = vrot.lane.b32.xlu0 %v1632, 64
        %v1635 = vpop.permute.xlu0 %1634
        %v1637 = vsel %vm1030, %v1631, 0
        %v1640 = vsel %vm1050, %v1635, 0
        %1642 = vmatprep.subr.bf16.mxu0 0
        %1643 = vmatpush1.bf16.msra.mxu0 %v1640
        %1644 = vmatprep.subr.bf16.mxu0 0
        %1645 = vmatpush1.bf16.msra.mxu0 0
        %1646 = vmatprep.subr.bf16.mxu0 0
        %1647 = vmatpush1.bf16.msra.mxu0 0
        %1648 = vmatprep.subr.bf16.mxu0 0
        %1649 = vmatpush1.bf16.msra.mxu0 0
        %1650 = vmatprep.subr.bf16.mxu0 0
        %1651 = vmatpush1.bf16.msra.mxu0 0
        %1652 = vmatprep.subr.bf16.mxu0 0
        %1653 = vmatpush1.bf16.msra.mxu0 0
        %1654 = vmatprep.subr.bf16.mxu0 0
        %1655 = vmatpush1.bf16.msra.mxu0 0
        %1656 = vmatprep.subr.bf16.mxu0 0
        %1657 = vmatpush1.bf16.msra.mxu0 0
        %1658 = vmatprep.subr.bf16.mxu0 0
        %1659 = vmatpush1.bf16.msra.mxu0 0
        %1660 = vmatprep.subr.bf16.mxu0 0
        %1661 = vmatpush1.bf16.msra.mxu0 0
        %1662 = vmatprep.subr.bf16.mxu0 0
        %1663 = vmatpush1.bf16.msra.mxu0 0
        %1664 = vmatprep.subr.bf16.mxu0 0
        %1665 = vmatpush1.bf16.msra.mxu0 0
        %1666 = vmatprep.subr.bf16.mxu0 0
        %1667 = vmatpush1.bf16.msra.mxu0 0
        %1668 = vmatprep.subr.bf16.mxu0 0
        %1669 = vmatpush1.bf16.msra.mxu0 0
        %1670 = vmatprep.subr.bf16.mxu0 0
        %1671 = vmatpush1.bf16.msra.mxu0 0
        %1672 = vmatprep.subr.bf16.mxu0 0
        %1673 = vmatpush1.bf16.msra.mxu0 0
        %1674 = vmatprep.mubr.bf16.mxu0 0
        %1675 = vmatmul.mubr.bf16.gmra.mrb[0].mxu0 %v1637
        %v1676 = vpop.f32.mrb[0].mxu0
        %v1677 = vadd.f32 0.0, %v1676
        %v1678 = vpop.f32.mrb[0].mxu0
        %v1679 = vpop.f32.mrb[0].mxu0
        %v1680 = vpop.f32.mrb[0].mxu0
        %1681 = vdwg.mxu0
        %1682 = vrot.lane.b32.xlu0 %v923, 112
        %v1683 = vpop.permute.xlu0 %1682
        %1684 = vrot.lane.b32.xlu0 %v923, 80
        %v1685 = vpop.permute.xlu0 %1684
        %v1686 = vsel %vm954, %v1683, 0
        %v1688 = vsel %vm954, %v1685, 0
        %1690 = vmatprep.subr.mxu0 0.0
        %1691 = vmatpush1.xpose.msra.mxu0 %v1688
        %1692 = vmatprep.subr.mxu0 0.0
        %1693 = vmatpush1.xpose.msra.mxu0 0.0
        %1694 = vmatprep.subr.mxu0 0.0
        %1695 = vmatpush1.xpose.msra.mxu0 0.0
        %1696 = vmatprep.subr.mxu0 0.0
        %1697 = vmatpush1.xpose.msra.mxu0 0.0
        %1698 = vmatprep.subr.mxu0 0.0
        %1699 = vmatpush1.xpose.msra.mxu0 0.0
        %1700 = vmatprep.subr.mxu0 0.0
        %1701 = vmatpush1.xpose.msra.mxu0 0.0
        %1702 = vmatprep.subr.mxu0 0.0
        %1703 = vmatpush1.xpose.msra.mxu0 0.0
        %1704 = vmatprep.subr.mxu0 0.0
        %1705 = vmatpush1.xpose.msra.mxu0 0.0
        %1706 = vmatprep.subr.mxu0 0.0
        %1707 = vmatpush1.xpose.msra.mxu0 0.0
        %1708 = vmatprep.subr.mxu0 0.0
        %1709 = vmatpush1.xpose.msra.mxu0 0.0
        %1710 = vmatprep.subr.mxu0 0.0
        %1711 = vmatpush1.xpose.msra.mxu0 0.0
        %1712 = vmatprep.subr.mxu0 0.0
        %1713 = vmatpush1.xpose.msra.mxu0 0.0
        %1714 = vmatprep.subr.mxu0 0.0
        %1715 = vmatpush1.xpose.msra.mxu0 0.0
        %1716 = vmatprep.subr.mxu0 0.0
        %1717 = vmatpush1.xpose.msra.mxu0 0.0
        %1718 = vmatprep.subr.mxu0 0.0
        %1719 = vmatpush1.xpose.msra.mxu0 0.0
        %1720 = vmatprep.subr.mxu0 0.0
        %1721 = vmatpush1.xpose.msra.mxu0 0.0
        %1722 = vmatprep.subr.mxu0 0.0
        %1723 = vmatpush1.xpose.msra.mxu0 0.0
        %1724 = vmatprep.subr.mxu0 0.0
        %1725 = vmatpush1.xpose.msra.mxu0 0.0
        %1726 = vmatprep.subr.mxu0 0.0
        %1727 = vmatpush1.xpose.msra.mxu0 0.0
        %1728 = vmatprep.subr.mxu0 0.0
        %1729 = vmatpush1.xpose.msra.mxu0 0.0
        %1730 = vmatprep.subr.mxu0 0.0
        %1731 = vmatpush1.xpose.msra.mxu0 0.0
        %1732 = vmatprep.subr.mxu0 0.0
        %1733 = vmatpush1.xpose.msra.mxu0 0.0
        %1734 = vmatprep.subr.mxu0 0.0
        %1735 = vmatpush1.xpose.msra.mxu0 0.0
        %1736 = vmatprep.subr.mxu0 0.0
        %1737 = vmatpush1.xpose.msra.mxu0 0.0
        %1738 = vmatprep.subr.mxu0 0.0
        %1739 = vmatpush1.xpose.msra.mxu0 0.0
        %1740 = vmatprep.subr.mxu0 0.0
        %1741 = vmatpush1.xpose.msra.mxu0 0.0
        %1742 = vmatprep.subr.mxu0 0.0
        %1743 = vmatpush1.xpose.msra.mxu0 0.0
        %1744 = vmatprep.subr.mxu0 0.0
        %1745 = vmatpush1.xpose.msra.mxu0 0.0
        %1746 = vmatprep.subr.mxu0 0.0
        %1747 = vmatpush1.xpose.msra.mxu0 0.0
        %1748 = vmatprep.subr.mxu0 0.0
        %1749 = vmatpush1.xpose.msra.mxu0 0.0
        %1750 = vmatprep.subr.mxu0 0.0
        %1751 = vmatpush1.xpose.msra.mxu0 0.0
        %1752 = vmatprep.subr.mxu0 0.0
        %1753 = vmatpush1.xpose.msra.mxu0 0.0
        %1754 = vmatprep.mubr.f32.mxu0 0.0
        %1755 = vmatmul.mubr.f32.gmra.mrb[0].mxu0 %v1686
        %v1756 = vpop.f32.mrb[0].mxu0
        %v1757 = vadd.f32 0.0, %v1756
        %v1758 = vpop.f32.mrb[0].mxu0
        %1759 = vdwg.mxu0
        %v1760 = vsel %vm1541, %v1757, -1e+09
        %v1761 = vsel %vm1030, %v1760, -inf
        %1762 = vmax.xlane.f32.xlu0 %v1761
        %v1763 = vpop.xlane.xlu0 %1762
        %v1764 = vsub.f32 %v1760, %v1763
        %v1765 = vmul.f32 %v1764, 1.442695
        %v1766 = vpow.pop %v1765
        %v1767 = vsel %vm1030, %v1766, 0.0
        %1768 = vadd.xlane.f32.xlu0 %v1767
        %v1769 = vpop.xlane.xlu0 %1768
        %v1770 = vrcp.pop %v1769
        %v1771 = vmul.f32 %v1766, %v1770
        %v1772 = vpack.c.bf16 %v1771, %v1771
        %1773 = vrot.lane.b32.xlu0 %v1632, 48
        %v1774 = vpop.permute.xlu0 %1773
        %v1776 = vsel %vm1030, %v1772, 0
        %v1779 = vsel %vm1050, %v1774, 0
        %1781 = vmatprep.subr.bf16.mxu0 0
        %1782 = vmatpush1.bf16.msra.mxu0 %v1779
        %1783 = vmatprep.subr.bf16.mxu0 0
        %1784 = vmatpush1.bf16.msra.mxu0 0
        %1785 = vmatprep.subr.bf16.mxu0 0
        %1786 = vmatpush1.bf16.msra.mxu0 0
        %1787 = vmatprep.subr.bf16.mxu0 0
        %1788 = vmatpush1.bf16.msra.mxu0 0
        %1789 = vmatprep.subr.bf16.mxu0 0
        %1790 = vmatpush1.bf16.msra.mxu0 0
        %1791 = vmatprep.subr.bf16.mxu0 0
        %1792 = vmatpush1.bf16.msra.mxu0 0
        %1793 = vmatprep.subr.bf16.mxu0 0
        %1794 = vmatpush1.bf16.msra.mxu0 0
        %1795 = vmatprep.subr.bf16.mxu0 0
        %1796 = vmatpush1.bf16.msra.mxu0 0
        %1797 = vmatprep.subr.bf16.mxu0 0
        %1798 = vmatpush1.bf16.msra.mxu0 0
        %1799 = vmatprep.subr.bf16.mxu0 0
        %1800 = vmatpush1.bf16.msra.mxu0 0
        %1801 = vmatprep.subr.bf16.mxu0 0
        %1802 = vmatpush1.bf16.msra.mxu0 0
        %1803 = vmatprep.subr.bf16.mxu0 0
        %1804 = vmatpush1.bf16.msra.mxu0 0
        %1805 = vmatprep.subr.bf16.mxu0 0
        %1806 = vmatpush1.bf16.msra.mxu0 0
        %1807 = vmatprep.subr.bf16.mxu0 0
        %1808 = vmatpush1.bf16.msra.mxu0 0
        %1809 = vmatprep.subr.bf16.mxu0 0
        %1810 = vmatpush1.bf16.msra.mxu0 0
        %1811 = vmatprep.subr.bf16.mxu0 0
        %1812 = vmatpush1.bf16.msra.mxu0 0
        %1813 = vmatprep.mubr.bf16.mxu0 0
        %1814 = vmatmul.mubr.bf16.gmra.mrb[0].mxu0 %v1776
        %v1815 = vpop.f32.mrb[0].mxu0
        %v1816 = vadd.f32 0.0, %v1815
        %v1817 = vpop.f32.mrb[0].mxu0
        %v1818 = vpop.f32.mrb[0].mxu0
        %v1819 = vpop.f32.mrb[0].mxu0
        %1820 = vdwg.mxu0
        %1822 = vrot.lane.b32.xlu0 %v1816, 16
        %v1823 = vpop.permute.xlu0 %1822
        %v1825 = vsel %vm954, %v1677, %v1823
        %s1826 = scalar_lea.vmem [#allocation5], 3
        %v1827 = vld [vmem:[%s1826] sm:$0x1]
        %vm1828 = vcmp.gt.f32.partialorder %v1827, 0.5
        %v1829 = vsel %vm1828, 1, 0
        %v1830 = vlaneseq
        %v1831 = vshrl.u32 %v1830, 7
        %v1832 = vsub.s32 0, %v1831
        %v1833 = vrot.slane %v1829, %v1832
        %vm1834 = vcmp.eq.s32.totalorder %v1833, 1
        %vm1835 = vmand %vm941, %vm1834
        %1837 = vrot.lane.b32.xlu0 %v926, 96
        %v1838 = vpop.permute.xlu0 %1837
        %v1839 = vsel %vm954, %v926, 0
        %v1841 = vsel %vm954, %v1838, 0
        %1843 = vmatprep.subr.mxu0 0.0
        %1844 = vmatpush1.xpose.msra.mxu0 %v1841
        %1845 = vmatprep.subr.mxu0 0.0
        %1846 = vmatpush1.xpose.msra.mxu0 0.0
        %1847 = vmatprep.subr.mxu0 0.0
        %1848 = vmatpush1.xpose.msra.mxu0 0.0
        %1849 = vmatprep.subr.mxu0 0.0
        %1850 = vmatpush1.xpose.msra.mxu0 0.0
        %1851 = vmatprep.subr.mxu0 0.0
        %1852 = vmatpush1.xpose.msra.mxu0 0.0
        %1853 = vmatprep.subr.mxu0 0.0
        %1854 = vmatpush1.xpose.msra.mxu0 0.0
        %1855 = vmatprep.subr.mxu0 0.0
        %1856 = vmatpush1.xpose.msra.mxu0 0.0
        %1857 = vmatprep.subr.mxu0 0.0
        %1858 = vmatpush1.xpose.msra.mxu0 0.0
        %1859 = vmatprep.subr.mxu0 0.0
        %1860 = vmatpush1.xpose.msra.mxu0 0.0
        %1861 = vmatprep.subr.mxu0 0.0
        %1862 = vmatpush1.xpose.msra.mxu0 0.0
        %1863 = vmatprep.subr.mxu0 0.0
        %1864 = vmatpush1.xpose.msra.mxu0 0.0
        %1865 = vmatprep.subr.mxu0 0.0
        %1866 = vmatpush1.xpose.msra.mxu0 0.0
        %1867 = vmatprep.subr.mxu0 0.0
        %1868 = vmatpush1.xpose.msra.mxu0 0.0
        %1869 = vmatprep.subr.mxu0 0.0
        %1870 = vmatpush1.xpose.msra.mxu0 0.0
        %1871 = vmatprep.subr.mxu0 0.0
        %1872 = vmatpush1.xpose.msra.mxu0 0.0
        %1873 = vmatprep.subr.mxu0 0.0
        %1874 = vmatpush1.xpose.msra.mxu0 0.0
        %1875 = vmatprep.subr.mxu0 0.0
        %1876 = vmatpush1.xpose.msra.mxu0 0.0
        %1877 = vmatprep.subr.mxu0 0.0
        %1878 = vmatpush1.xpose.msra.mxu0 0.0
        %1879 = vmatprep.subr.mxu0 0.0
        %1880 = vmatpush1.xpose.msra.mxu0 0.0
        %1881 = vmatprep.subr.mxu0 0.0
        %1882 = vmatpush1.xpose.msra.mxu0 0.0
        %1883 = vmatprep.subr.mxu0 0.0
        %1884 = vmatpush1.xpose.msra.mxu0 0.0
        %1885 = vmatprep.subr.mxu0 0.0
        %1886 = vmatpush1.xpose.msra.mxu0 0.0
        %1887 = vmatprep.subr.mxu0 0.0
        %1888 = vmatpush1.xpose.msra.mxu0 0.0
        %1889 = vmatprep.subr.mxu0 0.0
        %1890 = vmatpush1.xpose.msra.mxu0 0.0
        %1891 = vmatprep.subr.mxu0 0.0
        %1892 = vmatpush1.xpose.msra.mxu0 0.0
        %1893 = vmatprep.subr.mxu0 0.0
        %1894 = vmatpush1.xpose.msra.mxu0 0.0
        %1895 = vmatprep.subr.mxu0 0.0
        %1896 = vmatpush1.xpose.msra.mxu0 0.0
        %1897 = vmatprep.subr.mxu0 0.0
        %1898 = vmatpush1.xpose.msra.mxu0 0.0
        %1899 = vmatprep.subr.mxu0 0.0
        %1900 = vmatpush1.xpose.msra.mxu0 0.0
        %1901 = vmatprep.subr.mxu0 0.0
        %1902 = vmatpush1.xpose.msra.mxu0 0.0
        %1903 = vmatprep.subr.mxu0 0.0
        %1904 = vmatpush1.xpose.msra.mxu0 0.0
        %1905 = vmatprep.subr.mxu0 0.0
        %1906 = vmatpush1.xpose.msra.mxu0 0.0
        %1907 = vmatprep.mubr.f32.mxu0 0.0
        %1908 = vmatmul.mubr.f32.gmra.mrb[0].mxu0 %v1839
        %v1909 = vpop.f32.mrb[0].mxu0
        %v1910 = vadd.f32 0.0, %v1909
        %v1911 = vpop.f32.mrb[0].mxu0
        %1912 = vdwg.mxu0
        %v1913 = vsel %vm1835, %v1910, -1e+09
        %v1914 = vsel %vm1030, %v1913, -inf
        %1915 = vmax.xlane.f32.xlu0 %v1914
        %v1916 = vpop.xlane.xlu0 %1915
        %v1917 = vsub.f32 %v1913, %v1916
        %v1918 = vmul.f32 %v1917, 1.442695
        %v1919 = vpow.pop %v1918
        %v1920 = vsel %vm1030, %v1919, 0.0
        %1921 = vadd.xlane.f32.xlu0 %v1920
        %v1922 = vpop.xlane.xlu0 %1921
        %v1923 = vrcp.pop %v1922
        %v1924 = vmul.f32 %v1919, %v1923
        %v1925 = vpack.c.bf16 %v1924, %v1924
        %v1926 = vpack.c.bf16 %v926, %v926
        %1928 = vrot.lane.b32.xlu0 %v1926, 64
        %v1929 = vpop.permute.xlu0 %1928
        %v1931 = vsel %vm1030, %v1925, 0
        %v1934 = vsel %vm1050, %v1929, 0
        %1936 = vmatprep.subr.bf16.mxu0 0
        %1937 = vmatpush1.bf16.msra.mxu0 %v1934
        %1938 = vmatprep.subr.bf16.mxu0 0
        %1939 = vmatpush1.bf16.msra.mxu0 0
        %1940 = vmatprep.subr.bf16.mxu0 0
        %1941 = vmatpush1.bf16.msra.mxu0 0
        %1942 = vmatprep.subr.bf16.mxu0 0
        %1943 = vmatpush1.bf16.msra.mxu0 0
        %1944 = vmatprep.subr.bf16.mxu0 0
        %1945 = vmatpush1.bf16.msra.mxu0 0
        %1946 = vmatprep.subr.bf16.mxu0 0
        %1947 = vmatpush1.bf16.msra.mxu0 0
        %1948 = vmatprep.subr.bf16.mxu0 0
        %1949 = vmatpush1.bf16.msra.mxu0 0
        %1950 = vmatprep.subr.bf16.mxu0 0
        %1951 = vmatpush1.bf16.msra.mxu0 0
        %1952 = vmatprep.subr.bf16.mxu0 0
        %1953 = vmatpush1.bf16.msra.mxu0 0
        %1954 = vmatprep.subr.bf16.mxu0 0
        %1955 = vmatpush1.bf16.msra.mxu0 0
        %1956 = vmatprep.subr.bf16.mxu0 0
        %1957 = vmatpush1.bf16.msra.mxu0 0
        %1958 = vmatprep.subr.bf16.mxu0 0
        %1959 = vmatpush1.bf16.msra.mxu0 0
        %1960 = vmatprep.subr.bf16.mxu0 0
        %1961 = vmatpush1.bf16.msra.mxu0 0
        %1962 = vmatprep.subr.bf16.mxu0 0
        %1963 = vmatpush1.bf16.msra.mxu0 0
        %1964 = vmatprep.subr.bf16.mxu0 0
        %1965 = vmatpush1.bf16.msra.mxu0 0
        %1966 = vmatprep.subr.bf16.mxu0 0
        %1967 = vmatpush1.bf16.msra.mxu0 0
        %1968 = vmatprep.mubr.bf16.mxu0 0
        %1969 = vmatmul.mubr.bf16.gmra.mrb[0].mxu0 %v1931
        %v1970 = vpop.f32.mrb[0].mxu0
        %v1971 = vadd.f32 0.0, %v1970
        %v1972 = vpop.f32.mrb[0].mxu0
        %v1973 = vpop.f32.mrb[0].mxu0
        %v1974 = vpop.f32.mrb[0].mxu0
        %1975 = vdwg.mxu0
        %1976 = vrot.lane.b32.xlu0 %v926, 112
        %v1977 = vpop.permute.xlu0 %1976
        %1978 = vrot.lane.b32.xlu0 %v926, 80
        %v1979 = vpop.permute.xlu0 %1978
        %v1980 = vsel %vm954, %v1977, 0
        %v1982 = vsel %vm954, %v1979, 0
        %1984 = vmatprep.subr.mxu0 0.0
        %1985 = vmatpush1.xpose.msra.mxu0 %v1982
        %1986 = vmatprep.subr.mxu0 0.0
        %1987 = vmatpush1.xpose.msra.mxu0 0.0
        %1988 = vmatprep.subr.mxu0 0.0
        %1989 = vmatpush1.xpose.msra.mxu0 0.0
        %1990 = vmatprep.subr.mxu0 0.0
        %1991 = vmatpush1.xpose.msra.mxu0 0.0
        %1992 = vmatprep.subr.mxu0 0.0
        %1993 = vmatpush1.xpose.msra.mxu0 0.0
        %1994 = vmatprep.subr.mxu0 0.0
        %1995 = vmatpush1.xpose.msra.mxu0 0.0
        %1996 = vmatprep.subr.mxu0 0.0
        %1997 = vmatpush1.xpose.msra.mxu0 0.0
        %1998 = vmatprep.subr.mxu0 0.0
        %1999 = vmatpush1.xpose.msra.mxu0 0.0
        %2000 = vmatprep.subr.mxu0 0.0
        %2001 = vmatpush1.xpose.msra.mxu0 0.0
        %2002 = vmatprep.subr.mxu0 0.0
        %2003 = vmatpush1.xpose.msra.mxu0 0.0
        %2004 = vmatprep.subr.mxu0 0.0
        %2005 = vmatpush1.xpose.msra.mxu0 0.0
        %2006 = vmatprep.subr.mxu0 0.0
        %2007 = vmatpush1.xpose.msra.mxu0 0.0
        %2008 = vmatprep.subr.mxu0 0.0
        %2009 = vmatpush1.xpose.msra.mxu0 0.0
        %2010 = vmatprep.subr.mxu0 0.0
        %2011 = vmatpush1.xpose.msra.mxu0 0.0
        %2012 = vmatprep.subr.mxu0 0.0
        %2013 = vmatpush1.xpose.msra.mxu0 0.0
        %2014 = vmatprep.subr.mxu0 0.0
        %2015 = vmatpush1.xpose.msra.mxu0 0.0
        %2016 = vmatprep.subr.mxu0 0.0
        %2017 = vmatpush1.xpose.msra.mxu0 0.0
        %2018 = vmatprep.subr.mxu0 0.0
        %2019 = vmatpush1.xpose.msra.mxu0 0.0
        %2020 = vmatprep.subr.mxu0 0.0
        %2021 = vmatpush1.xpose.msra.mxu0 0.0
        %2022 = vmatprep.subr.mxu0 0.0
        %2023 = vmatpush1.xpose.msra.mxu0 0.0
        %2024 = vmatprep.subr.mxu0 0.0
        %2025 = vmatpush1.xpose.msra.mxu0 0.0
        %2026 = vmatprep.subr.mxu0 0.0
        %2027 = vmatpush1.xpose.msra.mxu0 0.0
        %2028 = vmatprep.subr.mxu0 0.0
        %2029 = vmatpush1.xpose.msra.mxu0 0.0
        %2030 = vmatprep.subr.mxu0 0.0
        %2031 = vmatpush1.xpose.msra.mxu0 0.0
        %2032 = vmatprep.subr.mxu0 0.0
        %2033 = vmatpush1.xpose.msra.mxu0 0.0
        %2034 = vmatprep.subr.mxu0 0.0
        %2035 = vmatpush1.xpose.msra.mxu0 0.0
        %2036 = vmatprep.subr.mxu0 0.0
        %2037 = vmatpush1.xpose.msra.mxu0 0.0
        %2038 = vmatprep.subr.mxu0 0.0
        %2039 = vmatpush1.xpose.msra.mxu0 0.0
        %2040 = vmatprep.subr.mxu0 0.0
        %2041 = vmatpush1.xpose.msra.mxu0 0.0
        %2042 = vmatprep.subr.mxu0 0.0
        %2043 = vmatpush1.xpose.msra.mxu0 0.0
        %2044 = vmatprep.subr.mxu0 0.0
        %2045 = vmatpush1.xpose.msra.mxu0 0.0
        %2046 = vmatprep.subr.mxu0 0.0
        %2047 = vmatpush1.xpose.msra.mxu0 0.0
        %2048 = vmatprep.mubr.f32.mxu0 0.0
        %2049 = vmatmul.mubr.f32.gmra.mrb[0].mxu0 %v1980
        %v2050 = vpop.f32.mrb[0].mxu0
        %v2051 = vadd.f32 0.0, %v2050
        %v2052 = vpop.f32.mrb[0].mxu0
        %2053 = vdwg.mxu0
        %v2054 = vsel %vm1835, %v2051, -1e+09
        %v2055 = vsel %vm1030, %v2054, -inf
        %2056 = vmax.xlane.f32.xlu0 %v2055
        %v2057 = vpop.xlane.xlu0 %2056
        %v2058 = vsub.f32 %v2054, %v2057
        %v2059 = vmul.f32 %v2058, 1.442695
        %v2060 = vpow.pop %v2059
        %v2061 = vsel %vm1030, %v2060, 0.0
        %2062 = vadd.xlane.f32.xlu0 %v2061
        %v2063 = vpop.xlane.xlu0 %2062
        %v2064 = vrcp.pop %v2063
        %v2065 = vmul.f32 %v2060, %v2064
        %v2066 = vpack.c.bf16 %v2065, %v2065
        %2067 = vrot.lane.b32.xlu0 %v1926, 48
        %v2068 = vpop.permute.xlu0 %2067
        %v2070 = vsel %vm1030, %v2066, 0
        %v2073 = vsel %vm1050, %v2068, 0
        %2075 = vmatprep.subr.bf16.mxu0 0
        %2076 = vmatpush1.bf16.msra.mxu0 %v2073
        %2077 = vmatprep.subr.bf16.mxu0 0
        %2078 = vmatpush1.bf16.msra.mxu0 0
        %2079 = vmatprep.subr.bf16.mxu0 0
        %2080 = vmatpush1.bf16.msra.mxu0 0
        %2081 = vmatprep.subr.bf16.mxu0 0
        %2082 = vmatpush1.bf16.msra.mxu0 0
        %2083 = vmatprep.subr.bf16.mxu0 0
        %2084 = vmatpush1.bf16.msra.mxu0 0
        %2085 = vmatprep.subr.bf16.mxu0 0
        %2086 = vmatpush1.bf16.msra.mxu0 0
        %2087 = vmatprep.subr.bf16.mxu0 0
        %2088 = vmatpush1.bf16.msra.mxu0 0
        %2089 = vmatprep.subr.bf16.mxu0 0
        %2090 = vmatpush1.bf16.msra.mxu0 0
        %2091 = vmatprep.subr.bf16.mxu0 0
        %2092 = vmatpush1.bf16.msra.mxu0 0
        %2093 = vmatprep.subr.bf16.mxu0 0
        %2094 = vmatpush1.bf16.msra.mxu0 0
        %2095 = vmatprep.subr.bf16.mxu0 0
        %2096 = vmatpush1.bf16.msra.mxu0 0
        %2097 = vmatprep.subr.bf16.mxu0 0
        %2098 = vmatpush1.bf16.msra.mxu0 0
        %2099 = vmatprep.subr.bf16.mxu0 0
        %2100 = vmatpush1.bf16.msra.mxu0 0
        %2101 = vmatprep.subr.bf16.mxu0 0
        %2102 = vmatpush1.bf16.msra.mxu0 0
        %2103 = vmatprep.subr.bf16.mxu0 0
        %2104 = vmatpush1.bf16.msra.mxu0 0
        %2105 = vmatprep.subr.bf16.mxu0 0
        %2106 = vmatpush1.bf16.msra.mxu0 0
        %2107 = vmatprep.mubr.bf16.mxu0 0
        %2108 = vmatmul.mubr.bf16.gmra.mrb[0].mxu0 %v2070
        %v2109 = vpop.f32.mrb[0].mxu0
        %v2110 = vadd.f32 0.0, %v2109
        %v2111 = vpop.f32.mrb[0].mxu0
        %v2112 = vpop.f32.mrb[0].mxu0
        %v2113 = vpop.f32.mrb[0].mxu0
        %2114 = vdwg.mxu0
        %2116 = vrot.lane.b32.xlu0 %v2110, 16
        %v2117 = vpop.permute.xlu0 %2116
        %v2119 = vsel %vm954, %v1971, %v2117
        %s2120 = scalar_lea.vmem [#allocation5], 4
        %v2121 = vld [vmem:[%s2120] sm:$0x1]
        %vm2122 = vcmp.gt.f32.partialorder %v2121, 0.5
        %v2123 = vsel %vm2122, 1, 0
        %v2124 = vlaneseq
        %v2125 = vshrl.u32 %v2124, 7
        %v2126 = vsub.s32 0, %v2125
        %v2127 = vrot.slane %v2123, %v2126
        %vm2128 = vcmp.eq.s32.totalorder %v2127, 1
        %vm2129 = vmand %vm941, %vm2128
        %2131 = vrot.lane.b32.xlu0 %v931, 96
        %v2132 = vpop.permute.xlu0 %2131
        %v2133 = vsel %vm954, %v931, 0
        %v2135 = vsel %vm954, %v2132, 0
        %2137 = vmatprep.subr.mxu0 0.0
        %2138 = vmatpush1.xpose.msra.mxu0 %v2135
        %2139 = vmatprep.subr.mxu0 0.0
        %2140 = vmatpush1.xpose.msra.mxu0 0.0
        %2141 = vmatprep.subr.mxu0 0.0
        %2142 = vmatpush1.xpose.msra.mxu0 0.0
        %2143 = vmatprep.subr.mxu0 0.0
        %2144 = vmatpush1.xpose.msra.mxu0 0.0
        %2145 = vmatprep.subr.mxu0 0.0
        %2146 = vmatpush1.xpose.msra.mxu0 0.0
        %2147 = vmatprep.subr.mxu0 0.0
        %2148 = vmatpush1.xpose.msra.mxu0 0.0
        %2149 = vmatprep.subr.mxu0 0.0
        %2150 = vmatpush1.xpose.msra.mxu0 0.0
        %2151 = vmatprep.subr.mxu0 0.0
        %2152 = vmatpush1.xpose.msra.mxu0 0.0
        %2153 = vmatprep.subr.mxu0 0.0
        %2154 = vmatpush1.xpose.msra.mxu0 0.0
        %2155 = vmatprep.subr.mxu0 0.0
        %2156 = vmatpush1.xpose.msra.mxu0 0.0
        %2157 = vmatprep.subr.mxu0 0.0
        %2158 = vmatpush1.xpose.msra.mxu0 0.0
        %2159 = vmatprep.subr.mxu0 0.0
        %2160 = vmatpush1.xpose.msra.mxu0 0.0
        %2161 = vmatprep.subr.mxu0 0.0
        %2162 = vmatpush1.xpose.msra.mxu0 0.0
        %2163 = vmatprep.subr.mxu0 0.0
        %2164 = vmatpush1.xpose.msra.mxu0 0.0
        %2165 = vmatprep.subr.mxu0 0.0
        %2166 = vmatpush1.xpose.msra.mxu0 0.0
        %2167 = vmatprep.subr.mxu0 0.0
        %2168 = vmatpush1.xpose.msra.mxu0 0.0
        %2169 = vmatprep.subr.mxu0 0.0
        %2170 = vmatpush1.xpose.msra.mxu0 0.0
        %2171 = vmatprep.subr.mxu0 0.0
        %2172 = vmatpush1.xpose.msra.mxu0 0.0
        %2173 = vmatprep.subr.mxu0 0.0
        %2174 = vmatpush1.xpose.msra.mxu0 0.0
        %2175 = vmatprep.subr.mxu0 0.0
        %2176 = vmatpush1.xpose.msra.mxu0 0.0
        %2177 = vmatprep.subr.mxu0 0.0
        %2178 = vmatpush1.xpose.msra.mxu0 0.0
        %2179 = vmatprep.subr.mxu0 0.0
        %2180 = vmatpush1.xpose.msra.mxu0 0.0
        %2181 = vmatprep.subr.mxu0 0.0
        %2182 = vmatpush1.xpose.msra.mxu0 0.0
        %2183 = vmatprep.subr.mxu0 0.0
        %2184 = vmatpush1.xpose.msra.mxu0 0.0
        %2185 = vmatprep.subr.mxu0 0.0
        %2186 = vmatpush1.xpose.msra.mxu0 0.0
        %2187 = vmatprep.subr.mxu0 0.0
        %2188 = vmatpush1.xpose.msra.mxu0 0.0
        %2189 = vmatprep.subr.mxu0 0.0
        %2190 = vmatpush1.xpose.msra.mxu0 0.0
        %2191 = vmatprep.subr.mxu0 0.0
        %2192 = vmatpush1.xpose.msra.mxu0 0.0
        %2193 = vmatprep.subr.mxu0 0.0
        %2194 = vmatpush1.xpose.msra.mxu0 0.0
        %2195 = vmatprep.subr.mxu0 0.0
        %2196 = vmatpush1.xpose.msra.mxu0 0.0
        %2197 = vmatprep.subr.mxu0 0.0
        %2198 = vmatpush1.xpose.msra.mxu0 0.0
        %2199 = vmatprep.subr.mxu0 0.0
        %2200 = vmatpush1.xpose.msra.mxu0 0.0
        %2201 = vmatprep.mubr.f32.mxu0 0.0
        %2202 = vmatmul.mubr.f32.gmra.mrb[0].mxu0 %v2133
        %v2203 = vpop.f32.mrb[0].mxu0
        %v2204 = vadd.f32 0.0, %v2203
        %v2205 = vpop.f32.mrb[0].mxu0
        %2206 = vdwg.mxu0
        %v2207 = vsel %vm2129, %v2204, -1e+09
        %v2208 = vsel %vm1030, %v2207, -inf
        %2209 = vmax.xlane.f32.xlu0 %v2208
        %v2210 = vpop.xlane.xlu0 %2209
        %v2211 = vsub.f32 %v2207, %v2210
        %v2212 = vmul.f32 %v2211, 1.442695
        %v2213 = vpow.pop %v2212
        %v2214 = vsel %vm1030, %v2213, 0.0
        %2215 = vadd.xlane.f32.xlu0 %v2214
        %v2216 = vpop.xlane.xlu0 %2215
        %v2217 = vrcp.pop %v2216
        %v2218 = vmul.f32 %v2213, %v2217
        %v2219 = vpack.c.bf16 %v2218, %v2218
        %v2220 = vpack.c.bf16 %v931, %v931
        %2222 = vrot.lane.b32.xlu0 %v2220, 64
        %v2223 = vpop.permute.xlu0 %2222
        %v2225 = vsel %vm1030, %v2219, 0
        %v2228 = vsel %vm1050, %v2223, 0
        %2230 = vmatprep.subr.bf16.mxu0 0
        %2231 = vmatpush1.bf16.msra.mxu0 %v2228
        %2232 = vmatprep.subr.bf16.mxu0 0
        %2233 = vmatpush1.bf16.msra.mxu0 0
        %2234 = vmatprep.subr.bf16.mxu0 0
        %2235 = vmatpush1.bf16.msra.mxu0 0
        %2236 = vmatprep.subr.bf16.mxu0 0
        %2237 = vmatpush1.bf16.msra.mxu0 0
        %2238 = vmatprep.subr.bf16.mxu0 0
        %2239 = vmatpush1.bf16.msra.mxu0 0
        %2240 = vmatprep.subr.bf16.mxu0 0
        %2241 = vmatpush1.bf16.msra.mxu0 0
        %2242 = vmatprep.subr.bf16.mxu0 0
        %2243 = vmatpush1.bf16.msra.mxu0 0
        %2244 = vmatprep.subr.bf16.mxu0 0
        %2245 = vmatpush1.bf16.msra.mxu0 0
        %2246 = vmatprep.subr.bf16.mxu0 0
        %2247 = vmatpush1.bf16.msra.mxu0 0
        %2248 = vmatprep.subr.bf16.mxu0 0
        %2249 = vmatpush1.bf16.msra.mxu0 0
        %2250 = vmatprep.subr.bf16.mxu0 0
        %2251 = vmatpush1.bf16.msra.mxu0 0
        %2252 = vmatprep.subr.bf16.mxu0 0
        %2253 = vmatpush1.bf16.msra.mxu0 0
        %2254 = vmatprep.subr.bf16.mxu0 0
        %2255 = vmatpush1.bf16.msra.mxu0 0
        %2256 = vmatprep.subr.bf16.mxu0 0
        %2257 = vmatpush1.bf16.msra.mxu0 0
        %2258 = vmatprep.subr.bf16.mxu0 0
        %2259 = vmatpush1.bf16.msra.mxu0 0
        %2260 = vmatprep.subr.bf16.mxu0 0
        %2261 = vmatpush1.bf16.msra.mxu0 0
        %2262 = vmatprep.mubr.bf16.mxu0 0
        %2263 = vmatmul.mubr.bf16.gmra.mrb[0].mxu0 %v2225
        %v2264 = vpop.f32.mrb[0].mxu0
        %v2265 = vadd.f32 0.0, %v2264
        %v2266 = vpop.f32.mrb[0].mxu0
        %v2267 = vpop.f32.mrb[0].mxu0
        %v2268 = vpop.f32.mrb[0].mxu0
        %2269 = vdwg.mxu0
        %2270 = vrot.lane.b32.xlu0 %v931, 112
        %v2271 = vpop.permute.xlu0 %2270
        %2272 = vrot.lane.b32.xlu0 %v931, 80
        %v2273 = vpop.permute.xlu0 %2272
        %v2274 = vsel %vm954, %v2271, 0
        %v2276 = vsel %vm954, %v2273, 0
        %2278 = vmatprep.subr.mxu0 0.0
        %2279 = vmatpush1.xpose.msra.mxu0 %v2276
        %2280 = vmatprep.subr.mxu0 0.0
        %2281 = vmatpush1.xpose.msra.mxu0 0.0
        %2282 = vmatprep.subr.mxu0 0.0
        %2283 = vmatpush1.xpose.msra.mxu0 0.0
        %2284 = vmatprep.subr.mxu0 0.0
        %2285 = vmatpush1.xpose.msra.mxu0 0.0
        %2286 = vmatprep.subr.mxu0 0.0
        %2287 = vmatpush1.xpose.msra.mxu0 0.0
        %2288 = vmatprep.subr.mxu0 0.0
        %2289 = vmatpush1.xpose.msra.mxu0 0.0
        %2290 = vmatprep.subr.mxu0 0.0
        %2291 = vmatpush1.xpose.msra.mxu0 0.0
        %2292 = vmatprep.subr.mxu0 0.0
        %2293 = vmatpush1.xpose.msra.mxu0 0.0
        %2294 = vmatprep.subr.mxu0 0.0
        %2295 = vmatpush1.xpose.msra.mxu0 0.0
        %2296 = vmatprep.subr.mxu0 0.0
        %2297 = vmatpush1.xpose.msra.mxu0 0.0
        %2298 = vmatprep.subr.mxu0 0.0
        %2299 = vmatpush1.xpose.msra.mxu0 0.0
        %2300 = vmatprep.subr.mxu0 0.0
        %2301 = vmatpush1.xpose.msra.mxu0 0.0
        %2302 = vmatprep.subr.mxu0 0.0
        %2303 = vmatpush1.xpose.msra.mxu0 0.0
        %2304 = vmatprep.subr.mxu0 0.0
        %2305 = vmatpush1.xpose.msra.mxu0 0.0
        %2306 = vmatprep.subr.mxu0 0.0
        %2307 = vmatpush1.xpose.msra.mxu0 0.0
        %2308 = vmatprep.subr.mxu0 0.0
        %2309 = vmatpush1.xpose.msra.mxu0 0.0
        %2310 = vmatprep.subr.mxu0 0.0
        %2311 = vmatpush1.xpose.msra.mxu0 0.0
        %2312 = vmatprep.subr.mxu0 0.0
        %2313 = vmatpush1.xpose.msra.mxu0 0.0
        %2314 = vmatprep.subr.mxu0 0.0
        %2315 = vmatpush1.xpose.msra.mxu0 0.0
        %2316 = vmatprep.subr.mxu0 0.0
        %2317 = vmatpush1.xpose.msra.mxu0 0.0
        %2318 = vmatprep.subr.mxu0 0.0
        %2319 = vmatpush1.xpose.msra.mxu0 0.0
        %2320 = vmatprep.subr.mxu0 0.0
        %2321 = vmatpush1.xpose.msra.mxu0 0.0
        %2322 = vmatprep.subr.mxu0 0.0
        %2323 = vmatpush1.xpose.msra.mxu0 0.0
        %2324 = vmatprep.subr.mxu0 0.0
        %2325 = vmatpush1.xpose.msra.mxu0 0.0
        %2326 = vmatprep.subr.mxu0 0.0
        %2327 = vmatpush1.xpose.msra.mxu0 0.0
        %2328 = vmatprep.subr.mxu0 0.0
        %2329 = vmatpush1.xpose.msra.mxu0 0.0
        %2330 = vmatprep.subr.mxu0 0.0
        %2331 = vmatpush1.xpose.msra.mxu0 0.0
        %2332 = vmatprep.subr.mxu0 0.0
        %2333 = vmatpush1.xpose.msra.mxu0 0.0
        %2334 = vmatprep.subr.mxu0 0.0
        %2335 = vmatpush1.xpose.msra.mxu0 0.0
        %2336 = vmatprep.subr.mxu0 0.0
        %2337 = vmatpush1.xpose.msra.mxu0 0.0
        %2338 = vmatprep.subr.mxu0 0.0
        %2339 = vmatpush1.xpose.msra.mxu0 0.0
        %2340 = vmatprep.subr.mxu0 0.0
        %2341 = vmatpush1.xpose.msra.mxu0 0.0
        %2342 = vmatprep.mubr.f32.mxu0 0.0
        %2343 = vmatmul.mubr.f32.gmra.mrb[0].mxu0 %v2274
        %v2344 = vpop.f32.mrb[0].mxu0
        %v2345 = vadd.f32 0.0, %v2344
        %v2346 = vpop.f32.mrb[0].mxu0
        %2347 = vdwg.mxu0
        %v2348 = vsel %vm2129, %v2345, -1e+09
        %v2349 = vsel %vm1030, %v2348, -inf
        %2350 = vmax.xlane.f32.xlu0 %v2349
        %v2351 = vpop.xlane.xlu0 %2350
        %v2352 = vsub.f32 %v2348, %v2351
        %v2353 = vmul.f32 %v2352, 1.442695
        %v2354 = vpow.pop %v2353
        %v2355 = vsel %vm1030, %v2354, 0.0
        %2356 = vadd.xlane.f32.xlu0 %v2355
        %v2357 = vpop.xlane.xlu0 %2356
        %v2358 = vrcp.pop %v2357
        %v2359 = vmul.f32 %v2354, %v2358
        %v2360 = vpack.c.bf16 %v2359, %v2359
        %2361 = vrot.lane.b32.xlu0 %v2220, 48
        %v2362 = vpop.permute.xlu0 %2361
        %v2364 = vsel %vm1030, %v2360, 0
        %v2367 = vsel %vm1050, %v2362, 0
        %2369 = vmatprep.subr.bf16.mxu0 0
        %2370 = vmatpush1.bf16.msra.mxu0 %v2367
        %2371 = vmatprep.subr.bf16.mxu0 0
        %2372 = vmatpush1.bf16.msra.mxu0 0
        %2373 = vmatprep.subr.bf16.mxu0 0
        %2374 = vmatpush1.bf16.msra.mxu0 0
        %2375 = vmatprep.subr.bf16.mxu0 0
        %2376 = vmatpush1.bf16.msra.mxu0 0
        %2377 = vmatprep.subr.bf16.mxu0 0
        %2378 = vmatpush1.bf16.msra.mxu0 0
        %2379 = vmatprep.subr.bf16.mxu0 0
        %2380 = vmatpush1.bf16.msra.mxu0 0
        %2381 = vmatprep.subr.bf16.mxu0 0
        %2382 = vmatpush1.bf16.msra.mxu0 0
        %2383 = vmatprep.subr.bf16.mxu0 0
        %2384 = vmatpush1.bf16.msra.mxu0 0
        %2385 = vmatprep.subr.bf16.mxu0 0
        %2386 = vmatpush1.bf16.msra.mxu0 0
        %2387 = vmatprep.subr.bf16.mxu0 0
        %2388 = vmatpush1.bf16.msra.mxu0 0
        %2389 = vmatprep.subr.bf16.mxu0 0
        %2390 = vmatpush1.bf16.msra.mxu0 0
        %2391 = vmatprep.subr.bf16.mxu0 0
        %2392 = vmatpush1.bf16.msra.mxu0 0
        %2393 = vmatprep.subr.bf16.mxu0 0
        %2394 = vmatpush1.bf16.msra.mxu0 0
        %2395 = vmatprep.subr.bf16.mxu0 0
        %2396 = vmatpush1.bf16.msra.mxu0 0
        %2397 = vmatprep.subr.bf16.mxu0 0
        %2398 = vmatpush1.bf16.msra.mxu0 0
        %2399 = vmatprep.subr.bf16.mxu0 0
        %2400 = vmatpush1.bf16.msra.mxu0 0
        %2401 = vmatprep.mubr.bf16.mxu0 0
        %2402 = vmatmul.mubr.bf16.gmra.mrb[0].mxu0 %v2364
        %v2403 = vpop.f32.mrb[0].mxu0
        %v2404 = vadd.f32 0.0, %v2403
        %v2405 = vpop.f32.mrb[0].mxu0
        %v2406 = vpop.f32.mrb[0].mxu0
        %v2407 = vpop.f32.mrb[0].mxu0
        %2408 = vdwg.mxu0
        %2410 = vrot.lane.b32.xlu0 %v2404, 16
        %v2411 = vpop.permute.xlu0 %2410
        %v2413 = vsel %vm954, %v2265, %v2411
        %s2414 = scalar_lea.vmem [#allocation5], 5
        %v2415 = vld [vmem:[%s2414] sm:$0x1]
        %vm2416 = vcmp.gt.f32.partialorder %v2415, 0.5
        %v2417 = vsel %vm2416, 1, 0
        %v2418 = vlaneseq
        %v2419 = vshrl.u32 %v2418, 7
        %v2420 = vsub.s32 0, %v2419
        %v2421 = vrot.slane %v2417, %v2420
        %vm2422 = vcmp.eq.s32.totalorder %v2421, 1
        %vm2423 = vmand %vm941, %vm2422
        %2425 = vrot.lane.b32.xlu0 %v934, 96
        %v2426 = vpop.permute.xlu0 %2425
        %v2427 = vsel %vm954, %v934, 0
        %v2429 = vsel %vm954, %v2426, 0
        %2431 = vmatprep.subr.mxu0 0.0
        %2432 = vmatpush1.xpose.msra.mxu0 %v2429
        %2433 = vmatprep.subr.mxu0 0.0
        %2434 = vmatpush1.xpose.msra.mxu0 0.0
        %2435 = vmatprep.subr.mxu0 0.0
        %2436 = vmatpush1.xpose.msra.mxu0 0.0
        %2437 = vmatprep.subr.mxu0 0.0
        %2438 = vmatpush1.xpose.msra.mxu0 0.0
        %2439 = vmatprep.subr.mxu0 0.0
        %2440 = vmatpush1.xpose.msra.mxu0 0.0
        %2441 = vmatprep.subr.mxu0 0.0
        %2442 = vmatpush1.xpose.msra.mxu0 0.0
        %2443 = vmatprep.subr.mxu0 0.0
        %2444 = vmatpush1.xpose.msra.mxu0 0.0
        %2445 = vmatprep.subr.mxu0 0.0
        %2446 = vmatpush1.xpose.msra.mxu0 0.0
        %2447 = vmatprep.subr.mxu0 0.0
        %2448 = vmatpush1.xpose.msra.mxu0 0.0
        %2449 = vmatprep.subr.mxu0 0.0
        %2450 = vmatpush1.xpose.msra.mxu0 0.0
        %2451 = vmatprep.subr.mxu0 0.0
        %2452 = vmatpush1.xpose.msra.mxu0 0.0
        %2453 = vmatprep.subr.mxu0 0.0
        %2454 = vmatpush1.xpose.msra.mxu0 0.0
        %2455 = vmatprep.subr.mxu0 0.0
        %2456 = vmatpush1.xpose.msra.mxu0 0.0
        %2457 = vmatprep.subr.mxu0 0.0
        %2458 = vmatpush1.xpose.msra.mxu0 0.0
        %2459 = vmatprep.subr.mxu0 0.0
        %2460 = vmatpush1.xpose.msra.mxu0 0.0
        %2461 = vmatprep.subr.mxu0 0.0
        %2462 = vmatpush1.xpose.msra.mxu0 0.0
        %2463 = vmatprep.subr.mxu0 0.0
        %2464 = vmatpush1.xpose.msra.mxu0 0.0
        %2465 = vmatprep.subr.mxu0 0.0
        %2466 = vmatpush1.xpose.msra.mxu0 0.0
        %2467 = vmatprep.subr.mxu0 0.0
        %2468 = vmatpush1.xpose.msra.mxu0 0.0
        %2469 = vmatprep.subr.mxu0 0.0
        %2470 = vmatpush1.xpose.msra.mxu0 0.0
        %2471 = vmatprep.subr.mxu0 0.0
        %2472 = vmatpush1.xpose.msra.mxu0 0.0
        %2473 = vmatprep.subr.mxu0 0.0
        %2474 = vmatpush1.xpose.msra.mxu0 0.0
        %2475 = vmatprep.subr.mxu0 0.0
        %2476 = vmatpush1.xpose.msra.mxu0 0.0
        %2477 = vmatprep.subr.mxu0 0.0
        %2478 = vmatpush1.xpose.msra.mxu0 0.0
        %2479 = vmatprep.subr.mxu0 0.0
        %2480 = vmatpush1.xpose.msra.mxu0 0.0
        %2481 = vmatprep.subr.mxu0 0.0
        %2482 = vmatpush1.xpose.msra.mxu0 0.0
        %2483 = vmatprep.subr.mxu0 0.0
        %2484 = vmatpush1.xpose.msra.mxu0 0.0
        %2485 = vmatprep.subr.mxu0 0.0
        %2486 = vmatpush1.xpose.msra.mxu0 0.0
        %2487 = vmatprep.subr.mxu0 0.0
        %2488 = vmatpush1.xpose.msra.mxu0 0.0
        %2489 = vmatprep.subr.mxu0 0.0
        %2490 = vmatpush1.xpose.msra.mxu0 0.0
        %2491 = vmatprep.subr.mxu0 0.0
        %2492 = vmatpush1.xpose.msra.mxu0 0.0
        %2493 = vmatprep.subr.mxu0 0.0
        %2494 = vmatpush1.xpose.msra.mxu0 0.0
        %2495 = vmatprep.mubr.f32.mxu0 0.0
        %2496 = vmatmul.mubr.f32.gmra.mrb[0].mxu0 %v2427
        %v2497 = vpop.f32.mrb[0].mxu0
        %v2498 = vadd.f32 0.0, %v2497
        %v2499 = vpop.f32.mrb[0].mxu0
        %2500 = vdwg.mxu0
        %v2501 = vsel %vm2423, %v2498, -1e+09
        %v2502 = vsel %vm1030, %v2501, -inf
        %2503 = vmax.xlane.f32.xlu0 %v2502
        %v2504 = vpop.xlane.xlu0 %2503
        %v2505 = vsub.f32 %v2501, %v2504
        %v2506 = vmul.f32 %v2505, 1.442695
        %v2507 = vpow.pop %v2506
        %v2508 = vsel %vm1030, %v2507, 0.0
        %2509 = vadd.xlane.f32.xlu0 %v2508
        %v2510 = vpop.xlane.xlu0 %2509
        %v2511 = vrcp.pop %v2510
        %v2512 = vmul.f32 %v2507, %v2511
        %v2513 = vpack.c.bf16 %v2512, %v2512
        %v2514 = vpack.c.bf16 %v934, %v934
        %2516 = vrot.lane.b32.xlu0 %v2514, 64
        %v2517 = vpop.permute.xlu0 %2516
        %v2519 = vsel %vm1030, %v2513, 0
        %v2522 = vsel %vm1050, %v2517, 0
        %2524 = vmatprep.subr.bf16.mxu0 0
        %2525 = vmatpush1.bf16.msra.mxu0 %v2522
        %2526 = vmatprep.subr.bf16.mxu0 0
        %2527 = vmatpush1.bf16.msra.mxu0 0
        %2528 = vmatprep.subr.bf16.mxu0 0
        %2529 = vmatpush1.bf16.msra.mxu0 0
        %2530 = vmatprep.subr.bf16.mxu0 0
        %2531 = vmatpush1.bf16.msra.mxu0 0
        %2532 = vmatprep.subr.bf16.mxu0 0
        %2533 = vmatpush1.bf16.msra.mxu0 0
        %2534 = vmatprep.subr.bf16.mxu0 0
        %2535 = vmatpush1.bf16.msra.mxu0 0
        %2536 = vmatprep.subr.bf16.mxu0 0
        %2537 = vmatpush1.bf16.msra.mxu0 0
        %2538 = vmatprep.subr.bf16.mxu0 0
        %2539 = vmatpush1.bf16.msra.mxu0 0
        %2540 = vmatprep.subr.bf16.mxu0 0
        %2541 = vmatpush1.bf16.msra.mxu0 0
        %2542 = vmatprep.subr.bf16.mxu0 0
        %2543 = vmatpush1.bf16.msra.mxu0 0
        %2544 = vmatprep.subr.bf16.mxu0 0
        %2545 = vmatpush1.bf16.msra.mxu0 0
        %2546 = vmatprep.subr.bf16.mxu0 0
        %2547 = vmatpush1.bf16.msra.mxu0 0
        %2548 = vmatprep.subr.bf16.mxu0 0
        %2549 = vmatpush1.bf16.msra.mxu0 0
        %2550 = vmatprep.subr.bf16.mxu0 0
        %2551 = vmatpush1.bf16.msra.mxu0 0
        %2552 = vmatprep.subr.bf16.mxu0 0
        %2553 = vmatpush1.bf16.msra.mxu0 0
        %2554 = vmatprep.subr.bf16.mxu0 0
        %2555 = vmatpush1.bf16.msra.mxu0 0
        %2556 = vmatprep.mubr.bf16.mxu0 0
        %2557 = vmatmul.mubr.bf16.gmra.mrb[0].mxu0 %v2519
        %v2558 = vpop.f32.mrb[0].mxu0
        %v2559 = vadd.f32 0.0, %v2558
        %v2560 = vpop.f32.mrb[0].mxu0
        %v2561 = vpop.f32.mrb[0].mxu0
        %v2562 = vpop.f32.mrb[0].mxu0
        %2563 = vdwg.mxu0
        %2564 = vrot.lane.b32.xlu0 %v934, 112
        %v2565 = vpop.permute.xlu0 %2564
        %2566 = vrot.lane.b32.xlu0 %v934, 80
        %v2567 = vpop.permute.xlu0 %2566
        %v2568 = vsel %vm954, %v2565, 0
        %v2570 = vsel %vm954, %v2567, 0
        %2572 = vmatprep.subr.mxu0 0.0
        %2573 = vmatpush1.xpose.msra.mxu0 %v2570
        %2574 = vmatprep.subr.mxu0 0.0
        %2575 = vmatpush1.xpose.msra.mxu0 0.0
        %2576 = vmatprep.subr.mxu0 0.0
        %2577 = vmatpush1.xpose.msra.mxu0 0.0
        %2578 = vmatprep.subr.mxu0 0.0
        %2579 = vmatpush1.xpose.msra.mxu0 0.0
        %2580 = vmatprep.subr.mxu0 0.0
        %2581 = vmatpush1.xpose.msra.mxu0 0.0
        %2582 = vmatprep.subr.mxu0 0.0
        %2583 = vmatpush1.xpose.msra.mxu0 0.0
        %2584 = vmatprep.subr.mxu0 0.0
        %2585 = vmatpush1.xpose.msra.mxu0 0.0
        %2586 = vmatprep.subr.mxu0 0.0
        %2587 = vmatpush1.xpose.msra.mxu0 0.0
        %2588 = vmatprep.subr.mxu0 0.0
        %2589 = vmatpush1.xpose.msra.mxu0 0.0
        %2590 = vmatprep.subr.mxu0 0.0
        %2591 = vmatpush1.xpose.msra.mxu0 0.0
        %2592 = vmatprep.subr.mxu0 0.0
        %2593 = vmatpush1.xpose.msra.mxu0 0.0
        %2594 = vmatprep.subr.mxu0 0.0
        %2595 = vmatpush1.xpose.msra.mxu0 0.0
        %2596 = vmatprep.subr.mxu0 0.0
        %2597 = vmatpush1.xpose.msra.mxu0 0.0
        %2598 = vmatprep.subr.mxu0 0.0
        %2599 = vmatpush1.xpose.msra.mxu0 0.0
        %2600 = vmatprep.subr.mxu0 0.0
        %2601 = vmatpush1.xpose.msra.mxu0 0.0
        %2602 = vmatprep.subr.mxu0 0.0
        %2603 = vmatpush1.xpose.msra.mxu0 0.0
        %2604 = vmatprep.subr.mxu0 0.0
        %2605 = vmatpush1.xpose.msra.mxu0 0.0
        %2606 = vmatprep.subr.mxu0 0.0
        %2607 = vmatpush1.xpose.msra.mxu0 0.0
        %2608 = vmatprep.subr.mxu0 0.0
        %2609 = vmatpush1.xpose.msra.mxu0 0.0
        %2610 = vmatprep.subr.mxu0 0.0
        %2611 = vmatpush1.xpose.msra.mxu0 0.0
        %2612 = vmatprep.subr.mxu0 0.0
        %2613 = vmatpush1.xpose.msra.mxu0 0.0
        %2614 = vmatprep.subr.mxu0 0.0
        %2615 = vmatpush1.xpose.msra.mxu0 0.0
        %2616 = vmatprep.subr.mxu0 0.0
        %2617 = vmatpush1.xpose.msra.mxu0 0.0
        %2618 = vmatprep.subr.mxu0 0.0
        %2619 = vmatpush1.xpose.msra.mxu0 0.0
        %2620 = vmatprep.subr.mxu0 0.0
        %2621 = vmatpush1.xpose.msra.mxu0 0.0
        %2622 = vmatprep.subr.mxu0 0.0
        %2623 = vmatpush1.xpose.msra.mxu0 0.0
        %2624 = vmatprep.subr.mxu0 0.0
        %2625 = vmatpush1.xpose.msra.mxu0 0.0
        %2626 = vmatprep.subr.mxu0 0.0
        %2627 = vmatpush1.xpose.msra.mxu0 0.0
        %2628 = vmatprep.subr.mxu0 0.0
        %2629 = vmatpush1.xpose.msra.mxu0 0.0
        %2630 = vmatprep.subr.mxu0 0.0
        %2631 = vmatpush1.xpose.msra.mxu0 0.0
        %2632 = vmatprep.subr.mxu0 0.0
        %2633 = vmatpush1.xpose.msra.mxu0 0.0
        %2634 = vmatprep.subr.mxu0 0.0
        %2635 = vmatpush1.xpose.msra.mxu0 0.0
        %2636 = vmatprep.mubr.f32.mxu0 0.0
        %2637 = vmatmul.mubr.f32.gmra.mrb[0].mxu0 %v2568
        %v2638 = vpop.f32.mrb[0].mxu0
        %v2639 = vadd.f32 0.0, %v2638
        %v2640 = vpop.f32.mrb[0].mxu0
        %2641 = vdwg.mxu0
        %v2642 = vsel %vm2423, %v2639, -1e+09
        %v2643 = vsel %vm1030, %v2642, -inf
        %2644 = vmax.xlane.f32.xlu0 %v2643
        %v2645 = vpop.xlane.xlu0 %2644
        %v2646 = vsub.f32 %v2642, %v2645
        %v2647 = vmul.f32 %v2646, 1.442695
        %v2648 = vpow.pop %v2647
        %v2649 = vsel %vm1030, %v2648, 0.0
        %2650 = vadd.xlane.f32.xlu0 %v2649
        %v2651 = vpop.xlane.xlu0 %2650
        %v2652 = vrcp.pop %v2651
        %v2653 = vmul.f32 %v2648, %v2652
        %v2654 = vpack.c.bf16 %v2653, %v2653
        %2655 = vrot.lane.b32.xlu0 %v2514, 48
        %v2656 = vpop.permute.xlu0 %2655
        %v2658 = vsel %vm1030, %v2654, 0
        %v2661 = vsel %vm1050, %v2656, 0
        %2663 = vmatprep.subr.bf16.mxu0 0
        %2664 = vmatpush1.bf16.msra.mxu0 %v2661
        %2665 = vmatprep.subr.bf16.mxu0 0
        %2666 = vmatpush1.bf16.msra.mxu0 0
        %2667 = vmatprep.subr.bf16.mxu0 0
        %2668 = vmatpush1.bf16.msra.mxu0 0
        %2669 = vmatprep.subr.bf16.mxu0 0
        %2670 = vmatpush1.bf16.msra.mxu0 0
        %2671 = vmatprep.subr.bf16.mxu0 0
        %2672 = vmatpush1.bf16.msra.mxu0 0
        %2673 = vmatprep.subr.bf16.mxu0 0
        %2674 = vmatpush1.bf16.msra.mxu0 0
        %2675 = vmatprep.subr.bf16.mxu0 0
        %2676 = vmatpush1.bf16.msra.mxu0 0
        %2677 = vmatprep.subr.bf16.mxu0 0
        %2678 = vmatpush1.bf16.msra.mxu0 0
        %2679 = vmatprep.subr.bf16.mxu0 0
        %2680 = vmatpush1.bf16.msra.mxu0 0
        %2681 = vmatprep.subr.bf16.mxu0 0
        %2682 = vmatpush1.bf16.msra.mxu0 0
        %2683 = vmatprep.subr.bf16.mxu0 0
        %2684 = vmatpush1.bf16.msra.mxu0 0
        %2685 = vmatprep.subr.bf16.mxu0 0
        %2686 = vmatpush1.bf16.msra.mxu0 0
        %2687 = vmatprep.subr.bf16.mxu0 0
        %2688 = vmatpush1.bf16.msra.mxu0 0
        %2689 = vmatprep.subr.bf16.mxu0 0
        %2690 = vmatpush1.bf16.msra.mxu0 0
        %2691 = vmatprep.subr.bf16.mxu0 0
        %2692 = vmatpush1.bf16.msra.mxu0 0
        %2693 = vmatprep.subr.bf16.mxu0 0
        %2694 = vmatpush1.bf16.msra.mxu0 0
        %2695 = vmatprep.mubr.bf16.mxu0 0
        %2696 = vmatmul.mubr.bf16.gmra.mrb[0].mxu0 %v2658
        %v2697 = vpop.f32.mrb[0].mxu0
        %v2698 = vadd.f32 0.0, %v2697
        %v2699 = vpop.f32.mrb[0].mxu0
        %v2700 = vpop.f32.mrb[0].mxu0
        %v2701 = vpop.f32.mrb[0].mxu0
        %2702 = vdwg.mxu0
        %2704 = vrot.lane.b32.xlu0 %v2698, 16
        %v2705 = vpop.permute.xlu0 %2704
        %v2707 = vsel %vm954, %v2559, %v2705
        %v2708 = vpack.c.bf16 %v1531, %v1237
        %v2709 = vpack.c.bf16 %v2119, %v1825
        %v2710 = vpack.c.bf16 %v2707, %v2413
        %v2711 = vld [vmem:[%s685] sm:$0xf]
        %v2712 = vld [vmem:[%s685 + $0x4] sm:$0xf]
        %v2713 = vld [vmem:[%s685 + $0x8] sm:$0xf]
        %v2714 = vld [vmem:[%s685 + $0xc] sm:$0xf]
        %v2715 = vld [vmem:[%s688] sm:$0x1]
        %v2717 = vlaneseq
        %v2718 = vshrl.u32 %v2717, 7
        %v2719 = vsub.s32 0, %v2718
        %v2720 = vrot.slane %v2715, %v2719
        %v2726 = vunpack.c.l.b16 %v2711
        %v2727 = vunpack.c.l.b16 %v2712
        %v2728 = vunpack.c.l.b16 %v2713
        %v2729 = vunpack.c.l.b16 %v2714
        %v2730 = vpack.c.b16 %v2727, %v2726
        %v2731 = vpack.c.b16 %v2729, %v2728
        %v2735 = vsel %vm741, %v2708, 0
        %v2738 = vsel %vm741, %v2709, 0
        %v2741 = vsel %vm741, %v2710, 0
        %2743 = vmatprep.subr.bf16.mxu0 0
        %2744 = vmatpush1.bf16.msra.mxu0 %v2730
        %2745 = vmatprep.subr.bf16.mxu0 0
        %2746 = vmatpush1.bf16.msra.mxu0 %v2731
        %2747 = vmatprep.subr.bf16.mxu0 0
        %2748 = vmatpush1.bf16.msra.mxu0 0
        %2749 = vmatprep.subr.bf16.mxu0 0
        %2750 = vmatpush1.bf16.msra.mxu0 0
        %2751 = vmatprep.subr.bf16.mxu0 0
        %2752 = vmatpush1.bf16.msra.mxu0 0
        %2753 = vmatprep.subr.bf16.mxu0 0
        %2754 = vmatpush1.bf16.msra.mxu0 0
        %2755 = vmatprep.subr.bf16.mxu0 0
        %2756 = vmatpush1.bf16.msra.mxu0 0
        %2757 = vmatprep.subr.bf16.mxu0 0
        %2758 = vmatpush1.bf16.msra.mxu0 0
        %2759 = vmatprep.subr.bf16.mxu0 0
        %2760 = vmatpush1.bf16.msra.mxu0 0
        %2761 = vmatprep.subr.bf16.mxu0 0
        %2762 = vmatpush1.bf16.msra.mxu0 0
        %2763 = vmatprep.subr.bf16.mxu0 0
        %2764 = vmatpush1.bf16.msra.mxu0 0
        %2765 = vmatprep.subr.bf16.mxu0 0
        %2766 = vmatpush1.bf16.msra.mxu0 0
        %2767 = vmatprep.subr.bf16.mxu0 0
        %2768 = vmatpush1.bf16.msra.mxu0 0
        %2769 = vmatprep.subr.bf16.mxu0 0
        %2770 = vmatpush1.bf16.msra.mxu0 0
        %2771 = vmatprep.subr.bf16.mxu0 0
        %2772 = vmatpush1.bf16.msra.mxu0 0
        %2773 = vmatprep.subr.bf16.mxu0 0
        %2774 = vmatpush1.bf16.msra.mxu0 0
        %2775 = vmatprep.mubr.bf16.mxu0 0
        %2776 = vmatmul.mubr.bf16.gmra.mrb[0].mxu0 %v2735
        %v2777 = vpop.f32.mrb[0].mxu0
        %v2778 = vadd.f32 %v2720, %v2777
        %v2779 = vpop.f32.mrb[0].mxu0
        %v2780 = vpop.f32.mrb[0].mxu0
        %v2781 = vadd.f32 %v2720, %v2780
        %v2782 = vpop.f32.mrb[0].mxu0
        %2783 = vmatprep.mubr.bf16.mxu0 0
        %2784 = vmatmul.mubr.bf16.gmra.mrb[0].mxu0 %v2738
        %v2785 = vpop.f32.mrb[0].mxu0
        %v2786 = vadd.f32 %v2720, %v2785
        %v2787 = vpop.f32.mrb[0].mxu0
        %v2788 = vpop.f32.mrb[0].mxu0
        %v2789 = vadd.f32 %v2720, %v2788
        %v2790 = vpop.f32.mrb[0].mxu0
        %2791 = vmatprep.mubr.bf16.mxu0 0
        %2792 = vmatmul.mubr.bf16.gmra.mrb[0].mxu0 %v2741
        %v2793 = vpop.f32.mrb[0].mxu0
        %v2794 = vadd.f32 %v2720, %v2793
        %v2795 = vpop.f32.mrb[0].mxu0
        %v2796 = vpop.f32.mrb[0].mxu0
        %v2797 = vadd.f32 %v2720, %v2796
        %v2798 = vpop.f32.mrb[0].mxu0
        %2799 = vdwg.mxu0
        %v2800 = vadd.f32 %v733, %v2778
        %v2801 = vadd.f32 %v734, %v2781
        %v2802 = vadd.f32 %v735, %v2786
        %v2803 = vadd.f32 %v736, %v2789
        %v2804 = vadd.f32 %v737, %v2794
        %v2805 = vadd.f32 %v738, %v2797
        %v2806 = vld [vmem:[%s691] sm:$0x1]
        %v2807 = vld [vmem:[%s694] sm:$0x1]
        %v2808 = vsel %vm741, %v2800, 0.0
        %2809 = vadd.xlane.f32.xlu0 %v2808
        %v2810 = vpop.xlane.xlu0 %2809
        %v2811 = vsel %vm741, %v2801, 0.0
        %2812 = vadd.xlane.f32.xlu0 %v2811
        %v2813 = vpop.xlane.xlu0 %2812
        %v2814 = vsel %vm741, %v2802, 0.0
        %2815 = vadd.xlane.f32.xlu0 %v2814
        %v2816 = vpop.xlane.xlu0 %2815
        %v2817 = vsel %vm741, %v2803, 0.0
        %2818 = vadd.xlane.f32.xlu0 %v2817
        %v2819 = vpop.xlane.xlu0 %2818
        %v2820 = vsel %vm741, %v2804, 0.0
        %2821 = vadd.xlane.f32.xlu0 %v2820
        %v2822 = vpop.xlane.xlu0 %2821
        %v2823 = vsel %vm741, %v2805, 0.0
        %2824 = vadd.xlane.f32.xlu0 %v2823
        %v2825 = vpop.xlane.xlu0 %2824
        %v2826 = vmul.f32 %v2810, %v760
        %v2827 = vmul.f32 %v2813, %v760
        %v2828 = vmul.f32 %v2816, %v760
        %v2829 = vmul.f32 %v2819, %v760
        %v2830 = vmul.f32 %v2822, %v760
        %v2831 = vmul.f32 %v2825, %v760
        %v2832 = vsub.f32 %v2800, %v2826
        %v2833 = vsub.f32 %v2801, %v2827
        %v2834 = vsub.f32 %v2802, %v2828
        %v2835 = vsub.f32 %v2803, %v2829
        %v2836 = vsub.f32 %v2804, %v2830
        %v2837 = vsub.f32 %v2805, %v2831
        %v2838 = vmul.f32 %v2832, %v2832
        %v2839 = vmul.f32 %v2833, %v2833
        %v2840 = vmul.f32 %v2834, %v2834
        %v2841 = vmul.f32 %v2835, %v2835
        %v2842 = vmul.f32 %v2836, %v2836
        %v2843 = vmul.f32 %v2837, %v2837
        %v2844 = vsel %vm741, %v2838, 0.0
        %2845 = vadd.xlane.f32.xlu0 %v2844
        %v2846 = vpop.xlane.xlu0 %2845
        %v2847 = vsel %vm741, %v2839, 0.0
        %2848 = vadd.xlane.f32.xlu0 %v2847
        %v2849 = vpop.xlane.xlu0 %2848
        %v2850 = vsel %vm741, %v2840, 0.0
        %2851 = vadd.xlane.f32.xlu0 %v2850
        %v2852 = vpop.xlane.xlu0 %2851
        %v2853 = vsel %vm741, %v2841, 0.0
        %2854 = vadd.xlane.f32.xlu0 %v2853
        %v2855 = vpop.xlane.xlu0 %2854
        %v2856 = vsel %vm741, %v2842, 0.0
        %2857 = vadd.xlane.f32.xlu0 %v2856
        %v2858 = vpop.xlane.xlu0 %2857
        %v2859 = vsel %vm741, %v2843, 0.0
        %2860 = vadd.xlane.f32.xlu0 %v2859
        %v2861 = vpop.xlane.xlu0 %2860
        %v2862 = vmul.f32 %v2846, %v760
        %v2863 = vmul.f32 %v2849, %v760
        %v2864 = vmul.f32 %v2852, %v760
        %v2865 = vmul.f32 %v2855, %v760
        %v2866 = vmul.f32 %v2858, %v760
        %v2867 = vmul.f32 %v2861, %v760
        %v2868 = vadd.f32 %v2862, 1e-05
        %v2869 = vadd.f32 %v2863, 1e-05
        %v2870 = vadd.f32 %v2864, 1e-05
        %v2871 = vadd.f32 %v2865, 1e-05
        %v2872 = vadd.f32 %v2866, 1e-05
        %v2873 = vadd.f32 %v2867, 1e-05
        %v2874 = vrsqrt.pop %v2868
        %v2875 = vrsqrt.pop %v2869
        %v2876 = vrsqrt.pop %v2870
        %v2877 = vrsqrt.pop %v2871
        %v2878 = vrsqrt.pop %v2872
        %v2879 = vrsqrt.pop %v2873
        %v2880 = vmul.f32 %v2832, %v2874
        %v2881 = vmul.f32 %v2833, %v2875
        %v2882 = vmul.f32 %v2834, %v2876
        %v2883 = vmul.f32 %v2835, %v2877
        %v2884 = vmul.f32 %v2836, %v2878
        %v2885 = vmul.f32 %v2837, %v2879
        %v2887 = vlaneseq
        %v2888 = vshrl.u32 %v2887, 7
        %v2889 = vsub.s32 0, %v2888
        %v2890 = vrot.slane %v2806, %v2889
        %v2892 = vmul.f32 %v2880, %v2890
        %v2893 = vmul.f32 %v2881, %v2890
        %v2894 = vmul.f32 %v2882, %v2890
        %v2895 = vmul.f32 %v2883, %v2890
        %v2896 = vmul.f32 %v2884, %v2890
        %v2897 = vmul.f32 %v2885, %v2890
        %v2899 = vlaneseq
        %v2900 = vshrl.u32 %v2899, 7
        %v2901 = vsub.s32 0, %v2900
        %v2902 = vrot.slane %v2807, %v2901
        %v2904 = vadd.f32 %v2892, %v2902
        %v2905 = vadd.f32 %v2893, %v2902
        %v2906 = vadd.f32 %v2894, %v2902
        %v2907 = vadd.f32 %v2895, %v2902
        %v2908 = vadd.f32 %v2896, %v2902
        %v2909 = vadd.f32 %v2897, %v2902
        %v2910 = vpack.c.bf16 %v2905, %v2904
        %v2911 = vpack.c.bf16 %v2907, %v2906
        %v2912 = vpack.c.bf16 %v2909, %v2908
        %v2913 = vld [vmem:[%s699] sm:$0xf]
        %v2914 = vld [vmem:[%s699 + $0x4] sm:$0xf]
        %v2915 = vld [vmem:[%s699 + $0x8] sm:$0xf]
        %v2916 = vld [vmem:[%s699 + $0xc] sm:$0xf]
        %v2917 = vld [vmem:[%s585] sm:$0x1]
        %v2919 = vlaneseq
        %v2920 = vshrl.u32 %v2919, 7
        %v2921 = vsub.s32 0, %v2920
        %v2922 = vrot.slane %v2917, %v2921
        %v2928 = vunpack.c.l.b16 %v2913
        %v2929 = vunpack.c.l.b16 %v2914
        %v2930 = vunpack.c.l.b16 %v2915
        %v2931 = vunpack.c.l.b16 %v2916
        %v2932 = vpack.c.b16 %v2929, %v2928
        %v2933 = vpack.c.b16 %v2931, %v2930
        %v2937 = vsel %vm741, %v2910, 0
        %v2940 = vsel %vm741, %v2911, 0
        %v2943 = vsel %vm741, %v2912, 0
        %2945 = vmatprep.subr.bf16.mxu0 0
        %2946 = vmatpush1.bf16.msra.mxu0 %v2932
        %2947 = vmatprep.subr.bf16.mxu0 0
        %2948 = vmatpush1.bf16.msra.mxu0 %v2933
        %2949 = vmatprep.subr.bf16.mxu0 0
        %2950 = vmatpush1.bf16.msra.mxu0 0
        %2951 = vmatprep.subr.bf16.mxu0 0
        %2952 = vmatpush1.bf16.msra.mxu0 0
        %2953 = vmatprep.subr.bf16.mxu0 0
        %2954 = vmatpush1.bf16.msra.mxu0 0
        %2955 = vmatprep.subr.bf16.mxu0 0
        %2956 = vmatpush1.bf16.msra.mxu0 0
        %2957 = vmatprep.subr.bf16.mxu0 0
        %2958 = vmatpush1.bf16.msra.mxu0 0
        %2959 = vmatprep.subr.bf16.mxu0 0
        %2960 = vmatpush1.bf16.msra.mxu0 0
        %2961 = vmatprep.subr.bf16.mxu0 0
        %2962 = vmatpush1.bf16.msra.mxu0 0
        %2963 = vmatprep.subr.bf16.mxu0 0
        %2964 = vmatpush1.bf16.msra.mxu0 0
        %2965 = vmatprep.subr.bf16.mxu0 0
        %2966 = vmatpush1.bf16.msra.mxu0 0
        %2967 = vmatprep.subr.bf16.mxu0 0
        %2968 = vmatpush1.bf16.msra.mxu0 0
        %2969 = vmatprep.subr.bf16.mxu0 0
        %2970 = vmatpush1.bf16.msra.mxu0 0
        %2971 = vmatprep.subr.bf16.mxu0 0
        %2972 = vmatpush1.bf16.msra.mxu0 0
        %2973 = vmatprep.subr.bf16.mxu0 0
        %2974 = vmatpush1.bf16.msra.mxu0 0
        %2975 = vmatprep.subr.bf16.mxu0 0
        %2976 = vmatpush1.bf16.msra.mxu0 0
        %2977 = vmatprep.mubr.bf16.mxu0 0
        %2978 = vmatmul.mubr.bf16.gmra.mrb[0].mxu0 %v2937
        %v2979 = vpop.f32.mrb[0].mxu0
        %v2980 = vadd.f32 %v2922, %v2979
        %v2981 = vpop.f32.mrb[0].mxu0
        %v2982 = vpop.f32.mrb[0].mxu0
        %v2983 = vadd.f32 %v2922, %v2982
        %v2984 = vpop.f32.mrb[0].mxu0
        %2985 = vmatprep.mubr.bf16.mxu0 0
        %2986 = vmatmul.mubr.bf16.gmra.mrb[0].mxu0 %v2940
        %v2987 = vpop.f32.mrb[0].mxu0
        %v2988 = vadd.f32 %v2922, %v2987
        %v2989 = vpop.f32.mrb[0].mxu0
        %v2990 = vpop.f32.mrb[0].mxu0
        %v2991 = vadd.f32 %v2922, %v2990
        %v2992 = vpop.f32.mrb[0].mxu0
        %2993 = vmatprep.mubr.bf16.mxu0 0
        %2994 = vmatmul.mubr.bf16.gmra.mrb[0].mxu0 %v2943
        %v2995 = vpop.f32.mrb[0].mxu0
        %v2996 = vadd.f32 %v2922, %v2995
        %v2997 = vpop.f32.mrb[0].mxu0
        %v2998 = vpop.f32.mrb[0].mxu0
        %v2999 = vadd.f32 %v2922, %v2998
        %v3000 = vpop.f32.mrb[0].mxu0
        %3001 = vdwg.mxu0
        %v3002 = vmul.f32 %v2980, 1.702
        %v3003 = vmul.f32 %v2983, 1.702
        %v3004 = vmul.f32 %v2988, 1.702
        %v3005 = vmul.f32 %v2991, 1.702
        %v3006 = vmul.f32 %v2996, 1.702
        %v3007 = vmul.f32 %v2999, 1.702
        %v3008 = vxor.u32 %v3002, 2147483648
        %v3009 = vxor.u32 %v3003, 2147483648
        %v3010 = vxor.u32 %v3004, 2147483648
        %v3011 = vxor.u32 %v3005, 2147483648
        %v3012 = vxor.u32 %v3006, 2147483648
        %v3013 = vxor.u32 %v3007, 2147483648
        %v3014 = vmul.f32 %v3008, 1.442695
        %v3015 = vpow.pop %v3014
        %v3016 = vmul.f32 %v3009, 1.442695
        %v3017 = vpow.pop %v3016
        %v3018 = vmul.f32 %v3010, 1.442695
        %v3019 = vpow.pop %v3018
        %v3020 = vmul.f32 %v3011, 1.442695
        %v3021 = vpow.pop %v3020
        %v3022 = vmul.f32 %v3012, 1.442695
        %v3023 = vpow.pop %v3022
        %v3024 = vmul.f32 %v3013, 1.442695
        %v3025 = vpow.pop %v3024
        %v3026 = vadd.f32 %v3015, 1.0
        %v3027 = vadd.f32 %v3017, 1.0
        %v3028 = vadd.f32 %v3019, 1.0
        %v3029 = vadd.f32 %v3021, 1.0
        %v3030 = vadd.f32 %v3023, 1.0
        %v3031 = vadd.f32 %v3025, 1.0
        %v3032 = vrcp.pop %v3026
        %v3033 = vmul.f32 1.0, %v3032
        %v3034 = vrcp.pop %v3027
        %v3035 = vmul.f32 1.0, %v3034
        %v3036 = vrcp.pop %v3028
        %v3037 = vmul.f32 1.0, %v3036
        %v3038 = vrcp.pop %v3029
        %v3039 = vmul.f32 1.0, %v3038
        %v3040 = vrcp.pop %v3030
        %v3041 = vmul.f32 1.0, %v3040
        %v3042 = vrcp.pop %v3031
        %v3043 = vmul.f32 1.0, %v3042
        %v3044 = vmul.f32 %v2980, %v3033
        %v3045 = vmul.f32 %v2983, %v3035
        %v3046 = vmul.f32 %v2988, %v3037
        %v3047 = vmul.f32 %v2991, %v3039
        %v3048 = vmul.f32 %v2996, %v3041
        %v3049 = vmul.f32 %v2999, %v3043
        %v3050 = vpack.c.bf16 %v3045, %v3044
        %v3051 = vpack.c.bf16 %v3047, %v3046
        %v3052 = vpack.c.bf16 %v3049, %v3048
        %v3053 = vld [vmem:[%s704] sm:$0xf]
        %v3054 = vld [vmem:[%s704 + $0x4] sm:$0xf]
        %v3055 = vld [vmem:[%s704 + $0x8] sm:$0xf]
        %v3056 = vld [vmem:[%s704 + $0xc] sm:$0xf]
        %v3057 = vld [vmem:[%s704 + $0x10] sm:$0xf]
        %v3058 = vld [vmem:[%s704 + $0x14] sm:$0xf]
        %v3059 = vld [vmem:[%s704 + $0x18] sm:$0xf]
        %v3060 = vld [vmem:[%s704 + $0x1c] sm:$0xf]
        %v3061 = vld [vmem:[%s707] sm:$0x1]
        %v3063 = vlaneseq
        %v3064 = vshrl.u32 %v3063, 7
        %v3065 = vsub.s32 0, %v3064
        %v3066 = vrot.slane %v3061, %v3065
        %v3076 = vunpack.c.l.b16 %v3053
        %v3077 = vunpack.c.l.b16 %v3054
        %v3078 = vunpack.c.l.b16 %v3055
        %v3079 = vunpack.c.l.b16 %v3056
        %v3080 = vunpack.c.l.b16 %v3057
        %v3081 = vunpack.c.l.b16 %v3058
        %v3082 = vunpack.c.l.b16 %v3059
        %v3083 = vunpack.c.l.b16 %v3060
        %v3084 = vpack.c.b16 %v3077, %v3076
        %v3085 = vpack.c.b16 %v3079, %v3078
        %v3086 = vpack.c.b16 %v3081, %v3080
        %v3087 = vpack.c.b16 %v3083, %v3082
        %vm3092 = vcmask 523264
        %v3094 = vsel %vm3092, %v3050, 0
        %v3097 = vsel %vm3092, %v3051, 0
        %v3100 = vsel %vm3092, %v3052, 0
        %3102 = vmatprep.subr.bf16.mxu0 0
        %3103 = vmatpush1.bf16.msra.mxu0 %v3084
        %3104 = vmatprep.subr.bf16.mxu0 0
        %3105 = vmatpush1.bf16.msra.mxu0 %v3085
        %3106 = vmatprep.subr.bf16.mxu0 0
        %3107 = vmatpush1.bf16.msra.mxu0 %v3086
        %3108 = vmatprep.subr.bf16.mxu0 0
        %3109 = vmatpush1.bf16.msra.mxu0 %v3087
        %3110 = vmatprep.subr.bf16.mxu0 0
        %3111 = vmatpush1.bf16.msra.mxu0 0
        %3112 = vmatprep.subr.bf16.mxu0 0
        %3113 = vmatpush1.bf16.msra.mxu0 0
        %3114 = vmatprep.subr.bf16.mxu0 0
        %3115 = vmatpush1.bf16.msra.mxu0 0
        %3116 = vmatprep.subr.bf16.mxu0 0
        %3117 = vmatpush1.bf16.msra.mxu0 0
        %3118 = vmatprep.subr.bf16.mxu0 0
        %3119 = vmatpush1.bf16.msra.mxu0 0
        %3120 = vmatprep.subr.bf16.mxu0 0
        %3121 = vmatpush1.bf16.msra.mxu0 0
        %3122 = vmatprep.subr.bf16.mxu0 0
        %3123 = vmatpush1.bf16.msra.mxu0 0
        %3124 = vmatprep.subr.bf16.mxu0 0
        %3125 = vmatpush1.bf16.msra.mxu0 0
        %3126 = vmatprep.subr.bf16.mxu0 0
        %3127 = vmatpush1.bf16.msra.mxu0 0
        %3128 = vmatprep.subr.bf16.mxu0 0
        %3129 = vmatpush1.bf16.msra.mxu0 0
        %3130 = vmatprep.subr.bf16.mxu0 0
        %3131 = vmatpush1.bf16.msra.mxu0 0
        %3132 = vmatprep.subr.bf16.mxu0 0
        %3133 = vmatpush1.bf16.msra.mxu0 0
        %3134 = vmatprep.mubr.bf16.mxu0 0
        %3135 = vmatmul.mubr.bf16.gmra.mrb[0].mxu0 %v3094
        %v3136 = vpop.f32.mrb[0].mxu0
        %v3137 = vadd.f32 %v3066, %v3136
        %v3138 = vpop.f32.mrb[0].mxu0
        %v3139 = vpop.f32.mrb[0].mxu0
        %v3140 = vadd.f32 %v3066, %v3139
        %v3141 = vpop.f32.mrb[0].mxu0
        %3142 = vmatprep.mubr.bf16.mxu0 0
        %3143 = vmatmul.mubr.bf16.gmra.mrb[0].mxu0 %v3097
        %v3144 = vpop.f32.mrb[0].mxu0
        %v3145 = vadd.f32 %v3066, %v3144
        %v3146 = vpop.f32.mrb[0].mxu0
        %v3147 = vpop.f32.mrb[0].mxu0
        %v3148 = vadd.f32 %v3066, %v3147
        %v3149 = vpop.f32.mrb[0].mxu0
        %3150 = vmatprep.mubr.bf16.mxu0 0
        %3151 = vmatmul.mubr.bf16.gmra.mrb[0].mxu0 %v3100
        %v3152 = vpop.f32.mrb[0].mxu0
        %v3153 = vadd.f32 %v3066, %v3152
        %v3154 = vpop.f32.mrb[0].mxu0
        %v3155 = vpop.f32.mrb[0].mxu0
        %v3156 = vadd.f32 %v3066, %v3155
        %v3157 = vpop.f32.mrb[0].mxu0
        %3158 = vdwg.mxu0
        %v3159 = vadd.f32 %v2800, %v3137
        %v3160 = vadd.f32 %v2801, %v3140
        %v3161 = vadd.f32 %v2802, %v3145
        %v3162 = vadd.f32 %v2803, %v3148
        %v3163 = vadd.f32 %v2804, %v3153
        %v3164 = vadd.f32 %v2805, %v3156
        %v3165 = vpack.c.bf16 %v3159, %v3159
        %v3166 = vpack.c.bf16 %v3160, %v3160
        %v3167 = vpack.c.bf16 %v3161, %v3161
        %v3168 = vpack.c.bf16 %v3162, %v3162
        %v3169 = vpack.c.bf16 %v3163, %v3163
        %v3170 = vpack.c.bf16 %v3164, %v3164
        %vm3171 = vcmask 257024
        %3172 = vst.msk [vmem:[#allocation8] sm:$0xf] %vm3171, %v3165
        %3173 = vst.msk [vmem:[#allocation8 + $0x4] sm:$0xf] %vm3171, %v3166
        %3174 = vst.msk [vmem:[#allocation8 + $0x8] sm:$0xf] %vm3171, %v3167
        %3175 = vst.msk [vmem:[#allocation8 + $0xc] sm:$0xf] %vm3171, %v3168
        %3176 = vst.msk [vmem:[#allocation8 + $0x10] sm:$0xf] %vm3171, %v3169
        %3177 = vst.msk [vmem:[#allocation8 + $0x14] sm:$0xf] %vm3171, %v3170
        // Predicated region
        $region93: #{tpu_custom_call.1} parent=75 // pred_check
          %p3178 = pneg %p422
        $region94: #{tpu_custom_call.1} parent=75 // pred_check_branch
          %3180 = sbr.rel (%p3178) target = $region96
        $region95: #{tpu_custom_call.1} parent=75 // pred_region
          %s3181 = smul.u32 6, %s32
          %s3183 = ssub.s32 384, 384
          %3184 = vsyncadd [#allocation4], %s3183
          %s3185 = smul.addr %s3181, 64
          %s3186 = scalar_lea.hbm %s14, %s3185
          %s3187 = sshll.u32 [#allocation8], 4
          %s3188 = int_to_ptr.vmem [resolvable:$true] %s3187
          %3193 = dma.vmem_to_hbm [thread:$0]  %s3188, 384, %s3186, [#allocation4], 64, 64, 4
        $region96: #{tpu_custom_call.1} parent=75 // pred_fallthru
          _
        // Predicated region
        $region97: #{tpu_custom_call.1} parent=75 // pred_check
          %p3194 = pneg %p422
        $region98: #{tpu_custom_call.1} parent=75 // pred_check_branch
          %3196 = sbr.rel (%p3194) target = $region100
        $region99: #{tpu_custom_call.1} parent=75 // pred_region
          %3197 = dma.done [#allocation4], 384
        $region100: #{tpu_custom_call.1} parent=75 // pred_fallthru
          _
      $region76: #{tpu_custom_call.1} parent=5 // pred_fallthru
        _
      %p3198 = scmp.le.s32.totalorder 2, %s23
      // Predicated region
      $region101: #{tpu_custom_call.1} parent=5 // pred_check
        %p3199 = pneg %p3198
      $region102: #{tpu_custom_call.1} parent=5 // pred_check_branch
        %3201 = sbr.rel (%p3199) target = $region104
      $region103: #{tpu_custom_call.1} parent=5 // pred_region
        %s3202 = ssub.s32 %s23, 2
      $region104: #{tpu_custom_call.1} parent=5 // pred_fallthru
        _
    $region6: #{tpu_custom_call.1} parent=1 // loop_footer
      %s27 = sadd.s32 1, %s23
    $region7: #{tpu_custom_call.1} parent=1 // loop_footer_branch
      %22 = sbr.rel target = $region3
    $region8: #{tpu_custom_call.1} parent=1 // loop_exit
      _
    %3203 = vsyncpa [#allocation3], 1
    %s3204 = scalar_lea.sflag [#allocation3], 1
    %3205 = vsyncpa %s3204, 1
    %3206 = vsyncpa [#allocation6], 1
    %3207 = vsyncpa [#allocation4], 1
    %s3208 = scalar_lea.sflag [#allocation4], 1
    %3209 = vsyncpa %s3208, 1

</llo_original>
